<compile_context>
chip_gen: v6e
topology: v6e:2x2x1
jax: 0.10.0
libtpu: 0.0.40
codegen_flags: <defaults>
</compile_context>

<pallas_src>
import jax
import jax.numpy as jnp
from jax.experimental import pallas as pl
from jax.experimental.pallas import tpu as pltpu

N_POINTS = 128     # points per cloud (multiple of 8 keeps reshapes tile-aligned)
H1 = 64            # encoder hidden width
EMB = 256          # PointNEXT output embedding dim
OUT = 512          # pc_projection output dim
MAX_TB = 32        # batch-tile cap: h2 f32 tile = MAX_TB * 128 KiB = 4 MiB


def pcd_classifier_kernel(x_ref, w1_ref, b1_ref, w2_ref, b2_ref, proj_ref,
                          out_ref):
    tb, n, _ = x_ref.shape                # static block dims
    x = x_ref[...]                        # (TB, N, C) f32; only [..., :4] used
    w1 = w1_ref[...]                      # (4, H1) f32

    # --- Layer 1 on the VPU: K=4 contraction as 4 broadcast-FMAs ------------
    h1 = (x[:, :, 0:1] * w1[0:1, :]
          + x[:, :, 1:2] * w1[1:2, :]
          + x[:, :, 2:3] * w1[2:3, :]
          + x[:, :, 3:4] * w1[3:4, :]
          + b1_ref[...])                  # (TB, N, H1)
    h1 = jnp.maximum(h1, 0.0)

    # --- Layer 2 on the MXU: bf16 operands, f32 accumulation ----------------
    h1_flat = h1.reshape(tb * n, H1).astype(jnp.bfloat16)
    h2 = jnp.dot(h1_flat, w2_ref[...],
                 preferred_element_type=jnp.float32)    # (TB*N, EMB) f32

    # --- Symmetric max-pool over the point axis ------------------------------
    # bias-add + ReLU commute with the max (per-channel constant, monotone),
    # so apply them on the pooled (TB, EMB) tensor instead of (TB*N, EMB).
    pooled = jnp.max(h2.reshape(tb, n, EMB), axis=1)     # (TB, EMB)
    pooled = jnp.maximum(pooled + b2_ref[...], 0.0)      # (TB, EMB)

    # --- pc_projection: (TB, 256) @ (256, 512), bf16 operands, f32 acc -------
    out_ref[...] = jnp.dot(pooled.astype(jnp.bfloat16), proj_ref[...],
                           preferred_element_type=jnp.float32)


def pcd_classifier(batch_pcds, params, tb=None):
    """batch_pcds: (B, N, C>=4) float32. Returns (B, 512) float32."""
    w1, b1, w2, b2, proj = params
    B, N, C = batch_pcds.shape

    if tb is None:
        tb = next(t for t in (MAX_TB, 16, 8, 4, 2, 1) if B % t == 0)
    assert B % tb == 0, (B, tb)

    # Weights feeding the MXU go in as bf16 (tiny one-time cast).
    w2_bf = w2.astype(jnp.bfloat16)
    proj_bf = proj.astype(jnp.bfloat16)

    flops = B * (2 * N * 4 * H1 + 2 * N * H1 * EMB + 2 * EMB * OUT)
    bytes_accessed = (batch_pcds.size * 4 + B * OUT * 4
                      + w1.size * 4 + b1.size * 4 + b2.size * 4
                      + w2_bf.size * 2 + proj_bf.size * 2)

    return pl.pallas_call(
        pcd_classifier_kernel,
        out_shape=jax.ShapeDtypeStruct((B, OUT), jnp.float32),
        grid=(B // tb,),
        in_specs=[
            # Full N and full C per block (channel slice done in-kernel).
            pl.BlockSpec((tb, N, C), lambda b: (b, 0, 0)),
            pl.BlockSpec((4, H1), lambda b: (0, 0)),       # w1
            pl.BlockSpec((1, H1), lambda b: (0, 0)),       # b1
            pl.BlockSpec((H1, EMB), lambda b: (0, 0)),     # w2 (bf16)
            pl.BlockSpec((1, EMB), lambda b: (0, 0)),      # b2
            pl.BlockSpec((EMB, OUT), lambda b: (0, 0)),    # pc_projection (bf16)
        ],
        out_specs=pl.BlockSpec((tb, OUT), lambda b: (b, 0)),
        compiler_params=pltpu.CompilerParams(
            dimension_semantics=("parallel",)),
        cost_estimate=pl.CostEstimate(
            flops=flops, transcendentals=0, bytes_accessed=bytes_accessed),
    )(batch_pcds, w1, b1, w2_bf, b2, proj_bf)


def init_params(key):
    k1, k2, k3, k4, k5 = jax.random.split(key, 5)
    w1 = jax.random.normal(k1, (4, H1), jnp.float32) * 0.1
    b1 = jax.random.normal(k2, (1, H1), jnp.float32) * 0.01
    w2 = jax.random.normal(k3, (H1, EMB), jnp.float32) * 0.05
    b2 = jax.random.normal(k4, (1, EMB), jnp.float32) * 0.01
    proj = jax.random.normal(k5, (EMB, OUT), jnp.float32) * 0.05  # pc_projection
    return w1, b1, w2, b2, proj


def reference(batch_pcds, params):
    """Pure-JAX f32 reference of the same forward pass (ReLU before max)."""
    w1, b1, w2, b2, proj = params
    x = batch_pcds[..., :4]
    h1 = jnp.maximum(jnp.einsum("bnc,ch->bnh", x, w1) + b1[0], 0.0)
    h2 = jnp.maximum(jnp.einsum("bnh,he->bne", h1, w2) + b2[0], 0.0)
    pooled = jnp.max(h2, axis=1)
    return pooled @ proj


if __name__ == "__main__":
    key = jax.random.PRNGKey(0)
    kp, kx = jax.random.split(key)
    params = init_params(kp)

    B, C = 16, 6   # clouds carry 6 channels; the forward pass uses [..., :4]
    batch_pcds = jax.random.normal(kx, (B, N_POINTS, C), jnp.float32)

    out = pcd_classifier(batch_pcds, params, tb=8)   # grid=(2,) exercises tiling
    out = jax.block_until_ready(out)

    ref = reference(batch_pcds, params)
    assert out.shape == (B, OUT), out.shape
    # bf16 matmul operands (f32 accumulation) => looser tolerance than pure f32.
    assert jnp.allclose(out, ref, atol=1e-2, rtol=1e-2), \
        float(jnp.max(jnp.abs(out - ref)))

    print("KERNEL_OK")
</pallas_src>

<mosaic_0001>
module attributes {stable_mosaic.version = 11 : i64} {
  func.func @pcd_classifier_kernel(%arg0: i32, %arg1: memref<8x128x6xf32, #tpu.memory_space<vmem>>, %arg2: memref<4x64xf32, #tpu.memory_space<vmem>>, %arg3: memref<1x64xf32, #tpu.memory_space<vmem>>, %arg4: memref<64x256xbf16, #tpu.memory_space<vmem>>, %arg5: memref<1x256xf32, #tpu.memory_space<vmem>>, %arg6: memref<256x512xbf16, #tpu.memory_space<vmem>>, %arg7: memref<8x512xf32, #tpu.memory_space<vmem>>) attributes {dimension_semantics = [#tpu.dimension_semantics<parallel>], iteration_bounds = array<i64: 2>, scalar_prefetch = 0 : i64, scratch_operands = 0 : i64, tpu.core_type = #tpu.core_type<tc>, window_params = [{transform_indices = @transform_0, window_bounds = array<i64: 8, 128, 6>}, {pipeline_mode = #tpu.pipeline_mode<synchronous>, transform_indices = @transform_1, window_bounds = array<i64: 4, 64>}, {pipeline_mode = #tpu.pipeline_mode<synchronous>, transform_indices = @transform_2, window_bounds = array<i64: 1, 64>}, {pipeline_mode = #tpu.pipeline_mode<synchronous>, transform_indices = @transform_3, window_bounds = array<i64: 64, 256>}, {pipeline_mode = #tpu.pipeline_mode<synchronous>, transform_indices = @transform_4, window_bounds = array<i64: 1, 256>}, {pipeline_mode = #tpu.pipeline_mode<synchronous>, transform_indices = @transform_5, window_bounds = array<i64: 256, 512>}, {transform_indices = @transform_6, window_bounds = array<i64: 8, 512>}]} {
    %c0 = arith.constant 0 : index
    %c0_0 = arith.constant 0 : index
    %c0_1 = arith.constant 0 : index
    %0 = vector.load %arg1[%c0, %c0_0, %c0_1] : memref<8x128x6xf32, #tpu.memory_space<vmem>>, vector<8x128x6xf32>
    %c0_2 = arith.constant 0 : index
    %c0_3 = arith.constant 0 : index
    %1 = vector.load %arg2[%c0_2, %c0_3] : memref<4x64xf32, #tpu.memory_space<vmem>>, vector<4x64xf32>
    %2 = vector.extract_strided_slice %0 {offsets = [0, 0, 0], sizes = [8, 128, 1], strides = [1, 1, 1]} : vector<8x128x6xf32> to vector<8x128x1xf32>
    %3 = vector.extract_strided_slice %1 {offsets = [0, 0], sizes = [1, 64], strides = [1, 1]} : vector<4x64xf32> to vector<1x64xf32>
    %4 = vector.shape_cast %3 : vector<1x64xf32> to vector<1x1x64xf32>
    %5 = vector.broadcast %2 : vector<8x128x1xf32> to vector<8x128x64xf32>
    %6 = vector.broadcast %4 : vector<1x1x64xf32> to vector<8x128x64xf32>
    %7 = arith.mulf %5, %6 : vector<8x128x64xf32>
    %8 = vector.extract_strided_slice %0 {offsets = [0, 0, 1], sizes = [8, 128, 1], strides = [1, 1, 1]} : vector<8x128x6xf32> to vector<8x128x1xf32>
    %9 = vector.extract_strided_slice %1 {offsets = [1, 0], sizes = [1, 64], strides = [1, 1]} : vector<4x64xf32> to vector<1x64xf32>
    %10 = vector.shape_cast %9 : vector<1x64xf32> to vector<1x1x64xf32>
    %11 = vector.broadcast %8 : vector<8x128x1xf32> to vector<8x128x64xf32>
    %12 = vector.broadcast %10 : vector<1x1x64xf32> to vector<8x128x64xf32>
    %13 = arith.mulf %11, %12 : vector<8x128x64xf32>
    %14 = arith.addf %7, %13 : vector<8x128x64xf32>
    %15 = vector.extract_strided_slice %0 {offsets = [0, 0, 2], sizes = [8, 128, 1], strides = [1, 1, 1]} : vector<8x128x6xf32> to vector<8x128x1xf32>
    %16 = vector.extract_strided_slice %1 {offsets = [2, 0], sizes = [1, 64], strides = [1, 1]} : vector<4x64xf32> to vector<1x64xf32>
    %17 = vector.shape_cast %16 : vector<1x64xf32> to vector<1x1x64xf32>
    %18 = vector.broadcast %15 : vector<8x128x1xf32> to vector<8x128x64xf32>
    %19 = vector.broadcast %17 : vector<1x1x64xf32> to vector<8x128x64xf32>
    %20 = arith.mulf %18, %19 : vector<8x128x64xf32>
    %21 = arith.addf %14, %20 : vector<8x128x64xf32>
    %22 = vector.extract_strided_slice %0 {offsets = [0, 0, 3], sizes = [8, 128, 1], strides = [1, 1, 1]} : vector<8x128x6xf32> to vector<8x128x1xf32>
    %23 = vector.extract_strided_slice %1 {offsets = [3, 0], sizes = [1, 64], strides = [1, 1]} : vector<4x64xf32> to vector<1x64xf32>
    %24 = vector.shape_cast %23 : vector<1x64xf32> to vector<1x1x64xf32>
    %25 = vector.broadcast %22 : vector<8x128x1xf32> to vector<8x128x64xf32>
    %26 = vector.broadcast %24 : vector<1x1x64xf32> to vector<8x128x64xf32>
    %27 = arith.mulf %25, %26 : vector<8x128x64xf32>
    %28 = arith.addf %21, %27 : vector<8x128x64xf32>
    %c0_4 = arith.constant 0 : index
    %c0_5 = arith.constant 0 : index
    %29 = vector.load %arg3[%c0_4, %c0_5] : memref<1x64xf32, #tpu.memory_space<vmem>>, vector<1x64xf32>
    %30 = vector.shape_cast %29 : vector<1x64xf32> to vector<1x1x64xf32>
    %31 = vector.broadcast %30 : vector<1x1x64xf32> to vector<8x128x64xf32>
    %32 = arith.addf %28, %31 : vector<8x128x64xf32>
    %cst = arith.constant 0.000000e+00 : f32
    %33 = vector.broadcast %cst : f32 to vector<8x128x64xf32>
    %34 = arith.maximumf %32, %33 : vector<8x128x64xf32>
    %35 = vector.shape_cast %34 : vector<8x128x64xf32> to vector<1024x64xf32>
    %36 = arith.truncf %35 : vector<1024x64xf32> to vector<1024x64xbf16>
    %c0_6 = arith.constant 0 : index
    %c0_7 = arith.constant 0 : index
    %37 = vector.load %arg4[%c0_6, %c0_7] : memref<64x256xbf16, #tpu.memory_space<vmem>>, vector<64x256xbf16>
    %cst_8 = arith.constant dense<0.000000e+00> : vector<1024x256xf32>
    %38 = tpu.matmul %36, %37, %cst_8 {dimension_numbers = #tpu.dot_dimension_numbers<[1], [0], [0], [1], [0, 0, 1, 1], [], []>} : vector<1024x64xbf16>, vector<64x256xbf16>, vector<1024x256xf32> -> vector<1024x256xf32>
    %39 = vector.shape_cast %38 : vector<1024x256xf32> to vector<8x128x256xf32>
    %cst_9 = arith.constant dense<0xFF800000> : vector<8x256xf32>
    %40 = vector.multi_reduction <maximumf>, %39, %cst_9 [1] : vector<8x128x256xf32> to vector<8x256xf32>
    %c0_10 = arith.constant 0 : index
    %c0_11 = arith.constant 0 : index
    %41 = vector.load %arg5[%c0_10, %c0_11] : memref<1x256xf32, #tpu.memory_space<vmem>>, vector<1x256xf32>
    %42 = vector.broadcast %41 : vector<1x256xf32> to vector<8x256xf32>
    %43 = arith.addf %40, %42 : vector<8x256xf32>
    %cst_12 = arith.constant 0.000000e+00 : f32
    %44 = vector.broadcast %cst_12 : f32 to vector<8x256xf32>
    %45 = arith.maximumf %43, %44 : vector<8x256xf32>
    %46 = arith.truncf %45 : vector<8x256xf32> to vector<8x256xbf16>
    %c0_13 = arith.constant 0 : index
    %c0_14 = arith.constant 0 : index
    %47 = vector.load %arg6[%c0_13, %c0_14] : memref<256x512xbf16, #tpu.memory_space<vmem>>, vector<256x512xbf16>
    %cst_15 = arith.constant dense<0.000000e+00> : vector<8x512xf32>
    %48 = tpu.matmul %46, %47, %cst_15 {dimension_numbers = #tpu.dot_dimension_numbers<[1], [0], [0], [1], [0, 0, 1, 1], [], []>} : vector<8x256xbf16>, vector<256x512xbf16>, vector<8x512xf32> -> vector<8x512xf32>
    %c0_16 = arith.constant 0 : index
    %c0_17 = arith.constant 0 : index
    %49 = vector.load %arg7[%c0_16, %c0_17] : memref<8x512xf32, #tpu.memory_space<vmem>>, vector<8x512xf32>
    tpu.vector_store %arg7[%c0_16, %c0_17], %48 {strides = array<i32>} : memref<8x512xf32, #tpu.memory_space<vmem>>, vector<8x512xf32>,
    return
  }
  func.func @transform_0(%arg0: i32) -> (i32, i32, i32) {
    %c0_i32 = arith.constant 0 : i32
    %c0_i32_0 = arith.constant 0 : i32
    %c0_i32_1 = arith.constant 0 : i32
    return %arg0, %c0_i32, %c0_i32_0 : i32, i32, i32
  }
  func.func @transform_1(%arg0: i32) -> (i32, i32) {
    %c0_i32 = arith.constant 0 : i32
    %c0_i32_0 = arith.constant 0 : i32
    %c0_i32_1 = arith.constant 0 : i32
    return %c0_i32, %c0_i32_0 : i32, i32
  }
  func.func @transform_2(%arg0: i32) -> (i32, i32) {
    %c0_i32 = arith.constant 0 : i32
    %c0_i32_0 = arith.constant 0 : i32
    %c0_i32_1 = arith.constant 0 : i32
    return %c0_i32, %c0_i32_0 : i32, i32
  }
  func.func @transform_3(%arg0: i32) -> (i32, i32) {
    %c0_i32 = arith.constant 0 : i32
    %c0_i32_0 = arith.constant 0 : i32
    %c0_i32_1 = arith.constant 0 : i32
    return %c0_i32, %c0_i32_0 : i32, i32
  }
  func.func @transform_4(%arg0: i32) -> (i32, i32) {
    %c0_i32 = arith.constant 0 : i32
    %c0_i32_0 = arith.constant 0 : i32
    %c0_i32_1 = arith.constant 0 : i32
    return %c0_i32, %c0_i32_0 : i32, i32
  }
  func.func @transform_5(%arg0: i32) -> (i32, i32) {
    %c0_i32 = arith.constant 0 : i32
    %c0_i32_0 = arith.constant 0 : i32
    %c0_i32_1 = arith.constant 0 : i32
    return %c0_i32, %c0_i32_0 : i32, i32
  }
  func.func @transform_6(%arg0: i32) -> (i32, i32) {
    %c0_i32 = arith.constant 0 : i32
    %c0_i32_0 = arith.constant 0 : i32
    return %arg0, %c0_i32 : i32, i32
  }
}

</mosaic_0001>

<llo_original>
// kernel: tpu_custom_call.1
$region0: #{tpu_custom_call.1}
  #allocation0 [shape = 'u32[]', space=smem, size = 0x4, offset = 0x4, fixed_abs, tag = 'smem constant byte address 0x4 - core index']
  #allocation1 [shape = 'u32[144,128]{1,0:T(1,128)}', space=vmem, size = 0x12000, scoped, tag = 'internal scratch']
  %s0 = inlined_call_operand.vmem [shape: f32[16,128,6], index: 0, kind: input, shape index: {}]
  %s1 = inlined_call_operand.vmem [shape: f32[4,64], index: 1, kind: input, shape index: {}]
  %s2 = inlined_call_operand.vmem [shape: f32[1,64], index: 2, kind: input, shape index: {}]
  %s3 = inlined_call_operand.vmem [shape: bf16[64,256], index: 3, kind: input, shape index: {}]
  %s4 = inlined_call_operand.vmem [shape: f32[1,256], index: 4, kind: input, shape index: {}]
  %s5 = inlined_call_operand.vmem [shape: bf16[256,512], index: 5, kind: input, shape index: {}]
  %s6 = inlined_call_operand.hbm [shape: f32[16,512], index: 6, kind: output, shape index: {}]
  %s7 = sld [smem:[#allocation0]]
  $region57: #{tpu_custom_call.1} parent=0
    _
  %s9 = ssub.s32 1, %s7
  %s10 = scalar_select 0, %s9, %s7
  $region1: #{tpu_custom_call.1} parent=0
    #allocation2 [shape = 'u8[32768]{0}', space=vmem, size = 0x8000, scoped, tag = 'output window, operand 0']
    #allocation3 [shape = 's32[2]{0}', space=sflag, size = 0x8, scoped, tag = 'scoped memory for tpu_custom_call.1']
    %11 = vsyncpa [#allocation3], 0
    %s12 = scalar_lea.sflag [#allocation3], 1
    %13 = vsyncpa %s12, 0
    loop: start=0, step=1, limit=4
    $region2: #{tpu_custom_call.1} parent=1 // loop_pre_header
      _
    $region3: #{tpu_custom_call.1} parent=1 // loop_header
      %s15 = sphi 0, %s19
      %p16 = scmp.ge.s32.totalorder %s15, 4
      %s25 = sphi 0, %s27
      %s28 = sphi 0, %s25
      %s29 = sphi 0, %s28
      %s45 = sphi 0, %s29
      %s49 = sphi 0, %s49
      %s51 = sphi 0, %s49
      %s52 = sphi 0, %s51
      %s66 = sphi 0, %s52
      %s70 = sphi 0, %s70
      %s72 = sphi 0, %s70
      %s73 = sphi 0, %s72
      %s87 = sphi 0, %s73
      %s91 = sphi 0, %s91
      %s93 = sphi 0, %s91
      %s94 = sphi 0, %s93
      %s108 = sphi 0, %s94
      %s112 = sphi 0, %s112
      %s114 = sphi 0, %s112
      %s115 = sphi 0, %s114
      %s129 = sphi 0, %s115
      %s133 = sphi 0, %s133
      %s135 = sphi 0, %s133
      %s136 = sphi 0, %s135
      %s150 = sphi 0, %s136
      %s156 = sphi 0, %s158
      %s159 = sphi 0, %s156
      %s160 = sphi 0, %s159
      %s176 = sphi 0, %s160
    $region4: #{tpu_custom_call.1} parent=1 // loop_header_branch
      %18 = sbr.rel (%p16) target = $region8
    $region5: #{tpu_custom_call.1} parent=1 // loop_body
      %s20 = ssub.s32 %s15, 1
      %s21 = ssub.s32 %s15, 2
      %s22 = sadd.s32 %s15, 1
      %s23 = ssub.s32 %s15, %s22
      %p24 = scmp.eq.s32.totalorder %s23, 0
      %s26 = sadd.s32 %s25, 1
      %s27 = scalar_select %p24, %s25, %s26
      %p30 = pneg %p24
      %p31 = scmp.eq.s32.totalorder %s15, 1
      %p32 = por %p30, %p31
      %p33 = scmp.ne.s32.totalorder %s25, %s28
      %p34 = scmp.eq.s32.totalorder %s15, 0
      %p35 = por %p33, %p34
      %p36 = scmp.ne.s32.totalorder %s25, %s28
      %p37 = scmp.eq.s32.totalorder %s20, 1
      %p38 = por %p36, %p37
      %p39 = scmp.ne.s32.totalorder %s28, %s29
      %p40 = scmp.eq.s32.totalorder %s20, 0
      %p41 = por %p39, %p40
      %p42 = scmp.ne.s32.totalorder %s28, %s29
      %p43 = scmp.eq.s32.totalorder %s21, 1
      %p44 = por %p42, %p43
      %p46 = scmp.ne.s32.totalorder %s29, %s45
      %p47 = scmp.eq.s32.totalorder %s21, 0
      %p48 = por %p46, %p47
      %s50 = sadd.s32 %s49, 1
      %p53 = scmp.eq.s32.totalorder %s15, 1
      %p54 = scmp.ne.s32.totalorder %s49, %s51
      %p55 = scmp.eq.s32.totalorder %s15, 0
      %p56 = por %p54, %p55
      %p57 = scmp.ne.s32.totalorder %s49, %s51
      %p58 = scmp.eq.s32.totalorder %s20, 1
      %p59 = por %p57, %p58
      %p60 = scmp.ne.s32.totalorder %s51, %s52
      %p61 = scmp.eq.s32.totalorder %s20, 0
      %p62 = por %p60, %p61
      %p63 = scmp.ne.s32.totalorder %s51, %s52
      %p64 = scmp.eq.s32.totalorder %s21, 1
      %p65 = por %p63, %p64
      %p67 = scmp.ne.s32.totalorder %s52, %s66
      %p68 = scmp.eq.s32.totalorder %s21, 0
      %p69 = por %p67, %p68
      %s71 = sadd.s32 %s70, 1
      %p74 = scmp.eq.s32.totalorder %s15, 1
      %p75 = scmp.ne.s32.totalorder %s70, %s72
      %p76 = scmp.eq.s32.totalorder %s15, 0
      %p77 = por %p75, %p76
      %p78 = scmp.ne.s32.totalorder %s70, %s72
      %p79 = scmp.eq.s32.totalorder %s20, 1
      %p80 = por %p78, %p79
      %p81 = scmp.ne.s32.totalorder %s72, %s73
      %p82 = scmp.eq.s32.totalorder %s20, 0
      %p83 = por %p81, %p82
      %p84 = scmp.ne.s32.totalorder %s72, %s73
      %p85 = scmp.eq.s32.totalorder %s21, 1
      %p86 = por %p84, %p85
      %p88 = scmp.ne.s32.totalorder %s73, %s87
      %p89 = scmp.eq.s32.totalorder %s21, 0
      %p90 = por %p88, %p89
      %s92 = sadd.s32 %s91, 1
      %p95 = scmp.eq.s32.totalorder %s15, 1
      %p96 = scmp.ne.s32.totalorder %s91, %s93
      %p97 = scmp.eq.s32.totalorder %s15, 0
      %p98 = por %p96, %p97
      %p99 = scmp.ne.s32.totalorder %s91, %s93
      %p100 = scmp.eq.s32.totalorder %s20, 1
      %p101 = por %p99, %p100
      %p102 = scmp.ne.s32.totalorder %s93, %s94
      %p103 = scmp.eq.s32.totalorder %s20, 0
      %p104 = por %p102, %p103
      %p105 = scmp.ne.s32.totalorder %s93, %s94
      %p106 = scmp.eq.s32.totalorder %s21, 1
      %p107 = por %p105, %p106
      %p109 = scmp.ne.s32.totalorder %s94, %s108
      %p110 = scmp.eq.s32.totalorder %s21, 0
      %p111 = por %p109, %p110
      %s113 = sadd.s32 %s112, 1
      %p116 = scmp.eq.s32.totalorder %s15, 1
      %p117 = scmp.ne.s32.totalorder %s112, %s114
      %p118 = scmp.eq.s32.totalorder %s15, 0
      %p119 = por %p117, %p118
      %p120 = scmp.ne.s32.totalorder %s112, %s114
      %p121 = scmp.eq.s32.totalorder %s20, 1
      %p122 = por %p120, %p121
      %p123 = scmp.ne.s32.totalorder %s114, %s115
      %p124 = scmp.eq.s32.totalorder %s20, 0
      %p125 = por %p123, %p124
      %p126 = scmp.ne.s32.totalorder %s114, %s115
      %p127 = scmp.eq.s32.totalorder %s21, 1
      %p128 = por %p126, %p127
      %p130 = scmp.ne.s32.totalorder %s115, %s129
      %p131 = scmp.eq.s32.totalorder %s21, 0
      %p132 = por %p130, %p131
      %s134 = sadd.s32 %s133, 1
      %p137 = scmp.eq.s32.totalorder %s15, 1
      %p138 = scmp.ne.s32.totalorder %s133, %s135
      %p139 = scmp.eq.s32.totalorder %s15, 0
      %p140 = por %p138, %p139
      %p141 = scmp.ne.s32.totalorder %s133, %s135
      %p142 = scmp.eq.s32.totalorder %s20, 1
      %p143 = por %p141, %p142
      %p144 = scmp.ne.s32.totalorder %s135, %s136
      %p145 = scmp.eq.s32.totalorder %s20, 0
      %p146 = por %p144, %p145
      %p147 = scmp.ne.s32.totalorder %s135, %s136
      %p148 = scmp.eq.s32.totalorder %s21, 1
      %p149 = por %p147, %p148
      %p151 = scmp.ne.s32.totalorder %s136, %s150
      %p152 = scmp.eq.s32.totalorder %s21, 0
      %p153 = por %p151, %p152
      %s154 = ssub.s32 %s15, %s22
      %p155 = scmp.eq.s32.totalorder %s154, 0
      %s157 = sadd.s32 %s156, 1
      %s158 = scalar_select %p155, %s156, %s157
      %p161 = pneg %p155
      %p162 = scmp.eq.s32.totalorder %s15, 1
      %p163 = por %p161, %p162
      %p164 = scmp.ne.s32.totalorder %s156, %s159
      %p165 = scmp.eq.s32.totalorder %s15, 0
      %p166 = por %p164, %p165
      %p167 = scmp.ne.s32.totalorder %s156, %s159
      %p168 = scmp.eq.s32.totalorder %s20, 1
      %p169 = por %p167, %p168
      %p170 = scmp.ne.s32.totalorder %s159, %s160
      %p171 = scmp.eq.s32.totalorder %s20, 0
      %p172 = por %p170, %p171
      %p173 = scmp.ne.s32.totalorder %s159, %s160
      %p174 = scmp.eq.s32.totalorder %s21, 1
      %p175 = por %p173, %p174
      %p177 = scmp.ne.s32.totalorder %s160, %s176
      %p178 = scmp.eq.s32.totalorder %s21, 0
      %p179 = por %p177, %p178
      %p180 = scmp.le.s32.totalorder 1, %s15
      %p181 = scmp.lt.s32.totalorder %s15, 3
      %p182 = pnand %p180, %p181
      %p183 = pneg %p182
      // Predicated region
      $region9: #{tpu_custom_call.1} parent=5 // pred_check
        _
      $region10: #{tpu_custom_call.1} parent=5 // pred_check_branch
        %185 = sbr.rel (%p182) target = $region12
      $region11: #{tpu_custom_call.1} parent=5 // pred_region
        %s186 = ssub.s32 %s15, 1
        // Predicated region
        $region13: #{tpu_custom_call.1} parent=11 // pred_check
          %p187 = pneg %p62
        $region14: #{tpu_custom_call.1} parent=11 // pred_check_branch
          %189 = sbr.rel (%p187) target = $region16
        $region15: #{tpu_custom_call.1} parent=11 // pred_region
          _
        $region16: #{tpu_custom_call.1} parent=11 // pred_fallthru
          _
        // Predicated region
        $region17: #{tpu_custom_call.1} parent=11 // pred_check
          %p190 = pneg %p83
        $region18: #{tpu_custom_call.1} parent=11 // pred_check_branch
          %192 = sbr.rel (%p190) target = $region20
        $region19: #{tpu_custom_call.1} parent=11 // pred_region
          _
        $region20: #{tpu_custom_call.1} parent=11 // pred_fallthru
          _
        // Predicated region
        $region21: #{tpu_custom_call.1} parent=11 // pred_check
          %p193 = pneg %p104
        $region22: #{tpu_custom_call.1} parent=11 // pred_check_branch
          %195 = sbr.rel (%p193) target = $region24
        $region23: #{tpu_custom_call.1} parent=11 // pred_region
          _
        $region24: #{tpu_custom_call.1} parent=11 // pred_fallthru
          _
        // Predicated region
        $region25: #{tpu_custom_call.1} parent=11 // pred_check
          %p196 = pneg %p125
        $region26: #{tpu_custom_call.1} parent=11 // pred_check_branch
          %198 = sbr.rel (%p196) target = $region28
        $region27: #{tpu_custom_call.1} parent=11 // pred_region
          _
        $region28: #{tpu_custom_call.1} parent=11 // pred_fallthru
          _
        // Predicated region
        $region29: #{tpu_custom_call.1} parent=11 // pred_check
          %p199 = pneg %p146
        $region30: #{tpu_custom_call.1} parent=11 // pred_check_branch
          %201 = sbr.rel (%p199) target = $region32
        $region31: #{tpu_custom_call.1} parent=11 // pred_region
          _
        $region32: #{tpu_custom_call.1} parent=11 // pred_fallthru
          _
      $region12: #{tpu_custom_call.1} parent=5 // pred_fallthru
        _
      %p202 = scmp.lt.s32.totalorder %s15, 2
      // Predicated region
      $region33: #{tpu_custom_call.1} parent=5 // pred_check
        %p203 = pneg %p202
      $region34: #{tpu_custom_call.1} parent=5 // pred_check_branch
        %205 = sbr.rel (%p203) target = $region36
      $region35: #{tpu_custom_call.1} parent=5 // pred_region
        // Predicated region
        $region37: #{tpu_custom_call.1} parent=35 // pred_check
          %p206 = pneg %p35
        $region38: #{tpu_custom_call.1} parent=35 // pred_check_branch
          %208 = sbr.rel (%p206) target = $region40
        $region39: #{tpu_custom_call.1} parent=35 // pred_region
          %s209 = smul.u32 8, %s15
          %p210 = scmp.lt.s32.totalorder %s209, 15
          %s211 = scalar_select %p210, %s209, 15
          %s212 = smul.addr %s211, 16
          %s213 = smul.addr %s212, 8
          %s214 = scalar_lea.vmem %s0, %s213
          %s215 = smul.u32 8, %s15
        $region40: #{tpu_custom_call.1} parent=35 // pred_fallthru
          _
      $region36: #{tpu_custom_call.1} parent=5 // pred_fallthru
        _
      %p216 = scmp.le.s32.totalorder 1, %s15
      %p217 = scmp.lt.s32.totalorder %s15, 3
      %p218 = pnand %p216, %p217
      %p219 = pneg %p218
      // Predicated region
      $region41: #{tpu_custom_call.1} parent=5 // pred_check
        _
      $region42: #{tpu_custom_call.1} parent=5 // pred_check_branch
        %221 = sbr.rel (%p218) target = $region44
      $region43: #{tpu_custom_call.1} parent=5 // pred_region
        %s222 = ssub.s32 %s15, 1
        %s223 = smul.u32 8, %s20
        %p224 = scmp.lt.s32.totalorder %s223, 15
        %s225 = scalar_select %p224, %s223, 15
        %s226 = smul.addr %s225, 16
        %s227 = smul.addr %s226, 8
        %s228 = scalar_lea.vmem %s0, %s227
        %p229 = pneg %p41
        %p230 = pneg %p38
        %p231 = pneg %p62
        %p232 = pneg %p59
        %p233 = pneg %p83
        %p234 = pneg %p80
        %p235 = pneg %p104
        %p236 = pneg %p101
        %p237 = pneg %p125
        %p238 = pneg %p122
        %p239 = pneg %p146
        %p240 = pneg %p143
        %p241 = pneg %p172
        %p242 = pneg %p169
        %s243 = sand.u32 %s159, 1
        %s244 = scalar_lea.sflag [#allocation3], %s243
        %s245 = sand.u32 %s159, 1
        %s246 = smul.addr %s245, 32
        %s247 = scalar_lea.vmem [#allocation2], %s246
        %s248 = smul.u32 8, %s20
        %p249 = scmp.lt.s32.totalorder %s248, 15
        %s250 = scalar_select %p249, %s248, 15
        %s251 = smul.addr %s250, 16
        %s252 = smul.addr %s251, 8
        %s253 = scalar_lea.vmem %s0, %s252
        %s254 = smul.u32 8, %s20
        %v256 = vld [vmem:[%s253] sm:$0xff]
        %v257 = vld [vmem:[%s253 + $0x8] sm:$0xff]
        %v258 = vld [vmem:[%s253 + $0x10] sm:$0xff]
        %v259 = vld [vmem:[%s253 + $0x18] sm:$0xff]
        %v260 = vld [vmem:[%s253 + $0x20] sm:$0xff]
        %v261 = vld [vmem:[%s253 + $0x28] sm:$0xff]
        %v262 = vld [vmem:[%s253 + $0x30] sm:$0xff]
        %v263 = vld [vmem:[%s253 + $0x38] sm:$0xff]
        %v264 = vld [vmem:[%s253 + $0x40] sm:$0xff]
        %v265 = vld [vmem:[%s253 + $0x48] sm:$0xff]
        %v266 = vld [vmem:[%s253 + $0x50] sm:$0xff]
        %v267 = vld [vmem:[%s253 + $0x58] sm:$0xff]
        %v268 = vld [vmem:[%s253 + $0x60] sm:$0xff]
        %v269 = vld [vmem:[%s253 + $0x68] sm:$0xff]
        %v270 = vld [vmem:[%s253 + $0x70] sm:$0xff]
        %v271 = vld [vmem:[%s253 + $0x78] sm:$0xff]
        %v272 = vld [vmem:[%s253 + $0x80] sm:$0xff]
        %v273 = vld [vmem:[%s253 + $0x88] sm:$0xff]
        %v274 = vld [vmem:[%s253 + $0x90] sm:$0xff]
        %v275 = vld [vmem:[%s253 + $0x98] sm:$0xff]
        %v276 = vld [vmem:[%s253 + $0xa0] sm:$0xff]
        %v277 = vld [vmem:[%s253 + $0xa8] sm:$0xff]
        %v278 = vld [vmem:[%s253 + $0xb0] sm:$0xff]
        %v279 = vld [vmem:[%s253 + $0xb8] sm:$0xff]
        %v280 = vld [vmem:[%s253 + $0xc0] sm:$0xff]
        %v281 = vld [vmem:[%s253 + $0xc8] sm:$0xff]
        %v282 = vld [vmem:[%s253 + $0xd0] sm:$0xff]
        %v283 = vld [vmem:[%s253 + $0xd8] sm:$0xff]
        %v284 = vld [vmem:[%s253 + $0xe0] sm:$0xff]
        %v285 = vld [vmem:[%s253 + $0xe8] sm:$0xff]
        %v286 = vld [vmem:[%s253 + $0xf0] sm:$0xff]
        %v287 = vld [vmem:[%s253 + $0xf8] sm:$0xff]
        %v288 = vld [vmem:[%s253 + $0x100] sm:$0xff]
        %v289 = vld [vmem:[%s253 + $0x108] sm:$0xff]
        %v290 = vld [vmem:[%s253 + $0x110] sm:$0xff]
        %v291 = vld [vmem:[%s253 + $0x118] sm:$0xff]
        %v292 = vld [vmem:[%s253 + $0x120] sm:$0xff]
        %v293 = vld [vmem:[%s253 + $0x128] sm:$0xff]
        %v294 = vld [vmem:[%s253 + $0x130] sm:$0xff]
        %v295 = vld [vmem:[%s253 + $0x138] sm:$0xff]
        %v296 = vld [vmem:[%s253 + $0x140] sm:$0xff]
        %v297 = vld [vmem:[%s253 + $0x148] sm:$0xff]
        %v298 = vld [vmem:[%s253 + $0x150] sm:$0xff]
        %v299 = vld [vmem:[%s253 + $0x158] sm:$0xff]
        %v300 = vld [vmem:[%s253 + $0x160] sm:$0xff]
        %v301 = vld [vmem:[%s253 + $0x168] sm:$0xff]
        %v302 = vld [vmem:[%s253 + $0x170] sm:$0xff]
        %v303 = vld [vmem:[%s253 + $0x178] sm:$0xff]
        %v304 = vld [vmem:[%s253 + $0x180] sm:$0xff]
        %v305 = vld [vmem:[%s253 + $0x188] sm:$0xff]
        %v306 = vld [vmem:[%s253 + $0x190] sm:$0xff]
        %v307 = vld [vmem:[%s253 + $0x198] sm:$0xff]
        %v308 = vld [vmem:[%s253 + $0x1a0] sm:$0xff]
        %v309 = vld [vmem:[%s253 + $0x1a8] sm:$0xff]
        %v310 = vld [vmem:[%s253 + $0x1b0] sm:$0xff]
        %v311 = vld [vmem:[%s253 + $0x1b8] sm:$0xff]
        %v312 = vld [vmem:[%s253 + $0x1c0] sm:$0xff]
        %v313 = vld [vmem:[%s253 + $0x1c8] sm:$0xff]
        %v314 = vld [vmem:[%s253 + $0x1d0] sm:$0xff]
        %v315 = vld [vmem:[%s253 + $0x1d8] sm:$0xff]
        %v316 = vld [vmem:[%s253 + $0x1e0] sm:$0xff]
        %v317 = vld [vmem:[%s253 + $0x1e8] sm:$0xff]
        %v318 = vld [vmem:[%s253 + $0x1f0] sm:$0xff]
        %v319 = vld [vmem:[%s253 + $0x1f8] sm:$0xff]
        %v320 = vld [vmem:[%s253 + $0x200] sm:$0xff]
        %v321 = vld [vmem:[%s253 + $0x208] sm:$0xff]
        %v322 = vld [vmem:[%s253 + $0x210] sm:$0xff]
        %v323 = vld [vmem:[%s253 + $0x218] sm:$0xff]
        %v324 = vld [vmem:[%s253 + $0x220] sm:$0xff]
        %v325 = vld [vmem:[%s253 + $0x228] sm:$0xff]
        %v326 = vld [vmem:[%s253 + $0x230] sm:$0xff]
        %v327 = vld [vmem:[%s253 + $0x238] sm:$0xff]
        %v328 = vld [vmem:[%s253 + $0x240] sm:$0xff]
        %v329 = vld [vmem:[%s253 + $0x248] sm:$0xff]
        %v330 = vld [vmem:[%s253 + $0x250] sm:$0xff]
        %v331 = vld [vmem:[%s253 + $0x258] sm:$0xff]
        %v332 = vld [vmem:[%s253 + $0x260] sm:$0xff]
        %v333 = vld [vmem:[%s253 + $0x268] sm:$0xff]
        %v334 = vld [vmem:[%s253 + $0x270] sm:$0xff]
        %v335 = vld [vmem:[%s253 + $0x278] sm:$0xff]
        %v336 = vld [vmem:[%s253 + $0x280] sm:$0xff]
        %v337 = vld [vmem:[%s253 + $0x288] sm:$0xff]
        %v338 = vld [vmem:[%s253 + $0x290] sm:$0xff]
        %v339 = vld [vmem:[%s253 + $0x298] sm:$0xff]
        %v340 = vld [vmem:[%s253 + $0x2a0] sm:$0xff]
        %v341 = vld [vmem:[%s253 + $0x2a8] sm:$0xff]
        %v342 = vld [vmem:[%s253 + $0x2b0] sm:$0xff]
        %v343 = vld [vmem:[%s253 + $0x2b8] sm:$0xff]
        %v344 = vld [vmem:[%s253 + $0x2c0] sm:$0xff]
        %v345 = vld [vmem:[%s253 + $0x2c8] sm:$0xff]
        %v346 = vld [vmem:[%s253 + $0x2d0] sm:$0xff]
        %v347 = vld [vmem:[%s253 + $0x2d8] sm:$0xff]
        %v348 = vld [vmem:[%s253 + $0x2e0] sm:$0xff]
        %v349 = vld [vmem:[%s253 + $0x2e8] sm:$0xff]
        %v350 = vld [vmem:[%s253 + $0x2f0] sm:$0xff]
        %v351 = vld [vmem:[%s253 + $0x2f8] sm:$0xff]
        %v352 = vld [vmem:[%s253 + $0x300] sm:$0xff]
        %v353 = vld [vmem:[%s253 + $0x308] sm:$0xff]
        %v354 = vld [vmem:[%s253 + $0x310] sm:$0xff]
        %v355 = vld [vmem:[%s253 + $0x318] sm:$0xff]
        %v356 = vld [vmem:[%s253 + $0x320] sm:$0xff]
        %v357 = vld [vmem:[%s253 + $0x328] sm:$0xff]
        %v358 = vld [vmem:[%s253 + $0x330] sm:$0xff]
        %v359 = vld [vmem:[%s253 + $0x338] sm:$0xff]
        %v360 = vld [vmem:[%s253 + $0x340] sm:$0xff]
        %v361 = vld [vmem:[%s253 + $0x348] sm:$0xff]
        %v362 = vld [vmem:[%s253 + $0x350] sm:$0xff]
        %v363 = vld [vmem:[%s253 + $0x358] sm:$0xff]
        %v364 = vld [vmem:[%s253 + $0x360] sm:$0xff]
        %v365 = vld [vmem:[%s253 + $0x368] sm:$0xff]
        %v366 = vld [vmem:[%s253 + $0x370] sm:$0xff]
        %v367 = vld [vmem:[%s253 + $0x378] sm:$0xff]
        %v368 = vld [vmem:[%s253 + $0x380] sm:$0xff]
        %v369 = vld [vmem:[%s253 + $0x388] sm:$0xff]
        %v370 = vld [vmem:[%s253 + $0x390] sm:$0xff]
        %v371 = vld [vmem:[%s253 + $0x398] sm:$0xff]
        %v372 = vld [vmem:[%s253 + $0x3a0] sm:$0xff]
        %v373 = vld [vmem:[%s253 + $0x3a8] sm:$0xff]
        %v374 = vld [vmem:[%s253 + $0x3b0] sm:$0xff]
        %v375 = vld [vmem:[%s253 + $0x3b8] sm:$0xff]
        %v376 = vld [vmem:[%s253 + $0x3c0] sm:$0xff]
        %v377 = vld [vmem:[%s253 + $0x3c8] sm:$0xff]
        %v378 = vld [vmem:[%s253 + $0x3d0] sm:$0xff]
        %v379 = vld [vmem:[%s253 + $0x3d8] sm:$0xff]
        %v380 = vld [vmem:[%s253 + $0x3e0] sm:$0xff]
        %v381 = vld [vmem:[%s253 + $0x3e8] sm:$0xff]
        %v382 = vld [vmem:[%s253 + $0x3f0] sm:$0xff]
        %v383 = vld [vmem:[%s253 + $0x3f8] sm:$0xff]
        %v384 = vld [vmem:[%s1] sm:$0xf]
        %386 = vset.pattern.permute.xlu0 0
        %387 = vperm.xlu0 %386, %v256
        %v388 = vpop.permute.xlu0 %387
        %391 = vset.pattern.permute.xlu0 0
        %392 = vperm.xlu0 %391, %v257
        %v393 = vpop.permute.xlu0 %392
        %396 = vset.pattern.permute.xlu0 0
        %397 = vperm.xlu0 %396, %v258
        %v398 = vpop.permute.xlu0 %397
        %401 = vset.pattern.permute.xlu0 0
        %402 = vperm.xlu0 %401, %v259
        %v403 = vpop.permute.xlu0 %402
        %406 = vset.pattern.permute.xlu0 0
        %407 = vperm.xlu0 %406, %v260
        %v408 = vpop.permute.xlu0 %407
        %411 = vset.pattern.permute.xlu0 0
        %412 = vperm.xlu0 %411, %v261
        %v413 = vpop.permute.xlu0 %412
        %416 = vset.pattern.permute.xlu0 0
        %417 = vperm.xlu0 %416, %v262
        %v418 = vpop.permute.xlu0 %417
        %421 = vset.pattern.permute.xlu0 0
        %422 = vperm.xlu0 %421, %v263
        %v423 = vpop.permute.xlu0 %422
        %426 = vset.pattern.permute.xlu0 0
        %427 = vperm.xlu0 %426, %v264
        %v428 = vpop.permute.xlu0 %427
        %431 = vset.pattern.permute.xlu0 0
        %432 = vperm.xlu0 %431, %v265
        %v433 = vpop.permute.xlu0 %432
        %436 = vset.pattern.permute.xlu0 0
        %437 = vperm.xlu0 %436, %v266
        %v438 = vpop.permute.xlu0 %437
        %441 = vset.pattern.permute.xlu0 0
        %442 = vperm.xlu0 %441, %v267
        %v443 = vpop.permute.xlu0 %442
        %446 = vset.pattern.permute.xlu0 0
        %447 = vperm.xlu0 %446, %v268
        %v448 = vpop.permute.xlu0 %447
        %451 = vset.pattern.permute.xlu0 0
        %452 = vperm.xlu0 %451, %v269
        %v453 = vpop.permute.xlu0 %452
        %456 = vset.pattern.permute.xlu0 0
        %457 = vperm.xlu0 %456, %v270
        %v458 = vpop.permute.xlu0 %457
        %461 = vset.pattern.permute.xlu0 0
        %462 = vperm.xlu0 %461, %v271
        %v463 = vpop.permute.xlu0 %462
        %466 = vset.pattern.permute.xlu0 0
        %467 = vperm.xlu0 %466, %v272
        %v468 = vpop.permute.xlu0 %467
        %471 = vset.pattern.permute.xlu0 0
        %472 = vperm.xlu0 %471, %v273
        %v473 = vpop.permute.xlu0 %472
        %476 = vset.pattern.permute.xlu0 0
        %477 = vperm.xlu0 %476, %v274
        %v478 = vpop.permute.xlu0 %477
        %481 = vset.pattern.permute.xlu0 0
        %482 = vperm.xlu0 %481, %v275
        %v483 = vpop.permute.xlu0 %482
        %486 = vset.pattern.permute.xlu0 0
        %487 = vperm.xlu0 %486, %v276
        %v488 = vpop.permute.xlu0 %487
        %491 = vset.pattern.permute.xlu0 0
        %492 = vperm.xlu0 %491, %v277
        %v493 = vpop.permute.xlu0 %492
        %496 = vset.pattern.permute.xlu0 0
        %497 = vperm.xlu0 %496, %v278
        %v498 = vpop.permute.xlu0 %497
        %501 = vset.pattern.permute.xlu0 0
        %502 = vperm.xlu0 %501, %v279
        %v503 = vpop.permute.xlu0 %502
        %506 = vset.pattern.permute.xlu0 0
        %507 = vperm.xlu0 %506, %v280
        %v508 = vpop.permute.xlu0 %507
        %511 = vset.pattern.permute.xlu0 0
        %512 = vperm.xlu0 %511, %v281
        %v513 = vpop.permute.xlu0 %512
        %516 = vset.pattern.permute.xlu0 0
        %517 = vperm.xlu0 %516, %v282
        %v518 = vpop.permute.xlu0 %517
        %521 = vset.pattern.permute.xlu0 0
        %522 = vperm.xlu0 %521, %v283
        %v523 = vpop.permute.xlu0 %522
        %526 = vset.pattern.permute.xlu0 0
        %527 = vperm.xlu0 %526, %v284
        %v528 = vpop.permute.xlu0 %527
        %531 = vset.pattern.permute.xlu0 0
        %532 = vperm.xlu0 %531, %v285
        %v533 = vpop.permute.xlu0 %532
        %536 = vset.pattern.permute.xlu0 0
        %537 = vperm.xlu0 %536, %v286
        %v538 = vpop.permute.xlu0 %537
        %541 = vset.pattern.permute.xlu0 0
        %542 = vperm.xlu0 %541, %v287
        %v543 = vpop.permute.xlu0 %542
        %546 = vset.pattern.permute.xlu0 0
        %547 = vperm.xlu0 %546, %v288
        %v548 = vpop.permute.xlu0 %547
        %551 = vset.pattern.permute.xlu0 0
        %552 = vperm.xlu0 %551, %v289
        %v553 = vpop.permute.xlu0 %552
        %556 = vset.pattern.permute.xlu0 0
        %557 = vperm.xlu0 %556, %v290
        %v558 = vpop.permute.xlu0 %557
        %561 = vset.pattern.permute.xlu0 0
        %562 = vperm.xlu0 %561, %v291
        %v563 = vpop.permute.xlu0 %562
        %566 = vset.pattern.permute.xlu0 0
        %567 = vperm.xlu0 %566, %v292
        %v568 = vpop.permute.xlu0 %567
        %571 = vset.pattern.permute.xlu0 0
        %572 = vperm.xlu0 %571, %v293
        %v573 = vpop.permute.xlu0 %572
        %576 = vset.pattern.permute.xlu0 0
        %577 = vperm.xlu0 %576, %v294
        %v578 = vpop.permute.xlu0 %577
        %581 = vset.pattern.permute.xlu0 0
        %582 = vperm.xlu0 %581, %v295
        %v583 = vpop.permute.xlu0 %582
        %586 = vset.pattern.permute.xlu0 0
        %587 = vperm.xlu0 %586, %v296
        %v588 = vpop.permute.xlu0 %587
        %591 = vset.pattern.permute.xlu0 0
        %592 = vperm.xlu0 %591, %v297
        %v593 = vpop.permute.xlu0 %592
        %596 = vset.pattern.permute.xlu0 0
        %597 = vperm.xlu0 %596, %v298
        %v598 = vpop.permute.xlu0 %597
        %601 = vset.pattern.permute.xlu0 0
        %602 = vperm.xlu0 %601, %v299
        %v603 = vpop.permute.xlu0 %602
        %606 = vset.pattern.permute.xlu0 0
        %607 = vperm.xlu0 %606, %v300
        %v608 = vpop.permute.xlu0 %607
        %611 = vset.pattern.permute.xlu0 0
        %612 = vperm.xlu0 %611, %v301
        %v613 = vpop.permute.xlu0 %612
        %616 = vset.pattern.permute.xlu0 0
        %617 = vperm.xlu0 %616, %v302
        %v618 = vpop.permute.xlu0 %617
        %621 = vset.pattern.permute.xlu0 0
        %622 = vperm.xlu0 %621, %v303
        %v623 = vpop.permute.xlu0 %622
        %626 = vset.pattern.permute.xlu0 0
        %627 = vperm.xlu0 %626, %v304
        %v628 = vpop.permute.xlu0 %627
        %631 = vset.pattern.permute.xlu0 0
        %632 = vperm.xlu0 %631, %v305
        %v633 = vpop.permute.xlu0 %632
        %636 = vset.pattern.permute.xlu0 0
        %637 = vperm.xlu0 %636, %v306
        %v638 = vpop.permute.xlu0 %637
        %641 = vset.pattern.permute.xlu0 0
        %642 = vperm.xlu0 %641, %v307
        %v643 = vpop.permute.xlu0 %642
        %646 = vset.pattern.permute.xlu0 0
        %647 = vperm.xlu0 %646, %v308
        %v648 = vpop.permute.xlu0 %647
        %651 = vset.pattern.permute.xlu0 0
        %652 = vperm.xlu0 %651, %v309
        %v653 = vpop.permute.xlu0 %652
        %656 = vset.pattern.permute.xlu0 0
        %657 = vperm.xlu0 %656, %v310
        %v658 = vpop.permute.xlu0 %657
        %661 = vset.pattern.permute.xlu0 0
        %662 = vperm.xlu0 %661, %v311
        %v663 = vpop.permute.xlu0 %662
        %666 = vset.pattern.permute.xlu0 0
        %667 = vperm.xlu0 %666, %v312
        %v668 = vpop.permute.xlu0 %667
        %671 = vset.pattern.permute.xlu0 0
        %672 = vperm.xlu0 %671, %v313
        %v673 = vpop.permute.xlu0 %672
        %676 = vset.pattern.permute.xlu0 0
        %677 = vperm.xlu0 %676, %v314
        %v678 = vpop.permute.xlu0 %677
        %681 = vset.pattern.permute.xlu0 0
        %682 = vperm.xlu0 %681, %v315
        %v683 = vpop.permute.xlu0 %682
        %686 = vset.pattern.permute.xlu0 0
        %687 = vperm.xlu0 %686, %v316
        %v688 = vpop.permute.xlu0 %687
        %691 = vset.pattern.permute.xlu0 0
        %692 = vperm.xlu0 %691, %v317
        %v693 = vpop.permute.xlu0 %692
        %696 = vset.pattern.permute.xlu0 0
        %697 = vperm.xlu0 %696, %v318
        %v698 = vpop.permute.xlu0 %697
        %701 = vset.pattern.permute.xlu0 0
        %702 = vperm.xlu0 %701, %v319
        %v703 = vpop.permute.xlu0 %702
        %706 = vset.pattern.permute.xlu0 0
        %707 = vperm.xlu0 %706, %v320
        %v708 = vpop.permute.xlu0 %707
        %711 = vset.pattern.permute.xlu0 0
        %712 = vperm.xlu0 %711, %v321
        %v713 = vpop.permute.xlu0 %712
        %716 = vset.pattern.permute.xlu0 0
        %717 = vperm.xlu0 %716, %v322
        %v718 = vpop.permute.xlu0 %717
        %721 = vset.pattern.permute.xlu0 0
        %722 = vperm.xlu0 %721, %v323
        %v723 = vpop.permute.xlu0 %722
        %726 = vset.pattern.permute.xlu0 0
        %727 = vperm.xlu0 %726, %v324
        %v728 = vpop.permute.xlu0 %727
        %731 = vset.pattern.permute.xlu0 0
        %732 = vperm.xlu0 %731, %v325
        %v733 = vpop.permute.xlu0 %732
        %736 = vset.pattern.permute.xlu0 0
        %737 = vperm.xlu0 %736, %v326
        %v738 = vpop.permute.xlu0 %737
        %741 = vset.pattern.permute.xlu0 0
        %742 = vperm.xlu0 %741, %v327
        %v743 = vpop.permute.xlu0 %742
        %746 = vset.pattern.permute.xlu0 0
        %747 = vperm.xlu0 %746, %v328
        %v748 = vpop.permute.xlu0 %747
        %751 = vset.pattern.permute.xlu0 0
        %752 = vperm.xlu0 %751, %v329
        %v753 = vpop.permute.xlu0 %752
        %756 = vset.pattern.permute.xlu0 0
        %757 = vperm.xlu0 %756, %v330
        %v758 = vpop.permute.xlu0 %757
        %761 = vset.pattern.permute.xlu0 0
        %762 = vperm.xlu0 %761, %v331
        %v763 = vpop.permute.xlu0 %762
        %766 = vset.pattern.permute.xlu0 0
        %767 = vperm.xlu0 %766, %v332
        %v768 = vpop.permute.xlu0 %767
        %771 = vset.pattern.permute.xlu0 0
        %772 = vperm.xlu0 %771, %v333
        %v773 = vpop.permute.xlu0 %772
        %776 = vset.pattern.permute.xlu0 0
        %777 = vperm.xlu0 %776, %v334
        %v778 = vpop.permute.xlu0 %777
        %781 = vset.pattern.permute.xlu0 0
        %782 = vperm.xlu0 %781, %v335
        %v783 = vpop.permute.xlu0 %782
        %786 = vset.pattern.permute.xlu0 0
        %787 = vperm.xlu0 %786, %v336
        %v788 = vpop.permute.xlu0 %787
        %791 = vset.pattern.permute.xlu0 0
        %792 = vperm.xlu0 %791, %v337
        %v793 = vpop.permute.xlu0 %792
        %796 = vset.pattern.permute.xlu0 0
        %797 = vperm.xlu0 %796, %v338
        %v798 = vpop.permute.xlu0 %797
        %801 = vset.pattern.permute.xlu0 0
        %802 = vperm.xlu0 %801, %v339
        %v803 = vpop.permute.xlu0 %802
        %806 = vset.pattern.permute.xlu0 0
        %807 = vperm.xlu0 %806, %v340
        %v808 = vpop.permute.xlu0 %807
        %811 = vset.pattern.permute.xlu0 0
        %812 = vperm.xlu0 %811, %v341
        %v813 = vpop.permute.xlu0 %812
        %816 = vset.pattern.permute.xlu0 0
        %817 = vperm.xlu0 %816, %v342
        %v818 = vpop.permute.xlu0 %817
        %821 = vset.pattern.permute.xlu0 0
        %822 = vperm.xlu0 %821, %v343
        %v823 = vpop.permute.xlu0 %822
        %826 = vset.pattern.permute.xlu0 0
        %827 = vperm.xlu0 %826, %v344
        %v828 = vpop.permute.xlu0 %827
        %831 = vset.pattern.permute.xlu0 0
        %832 = vperm.xlu0 %831, %v345
        %v833 = vpop.permute.xlu0 %832
        %836 = vset.pattern.permute.xlu0 0
        %837 = vperm.xlu0 %836, %v346
        %v838 = vpop.permute.xlu0 %837
        %841 = vset.pattern.permute.xlu0 0
        %842 = vperm.xlu0 %841, %v347
        %v843 = vpop.permute.xlu0 %842
        %846 = vset.pattern.permute.xlu0 0
        %847 = vperm.xlu0 %846, %v348
        %v848 = vpop.permute.xlu0 %847
        %851 = vset.pattern.permute.xlu0 0
        %852 = vperm.xlu0 %851, %v349
        %v853 = vpop.permute.xlu0 %852
        %856 = vset.pattern.permute.xlu0 0
        %857 = vperm.xlu0 %856, %v350
        %v858 = vpop.permute.xlu0 %857
        %861 = vset.pattern.permute.xlu0 0
        %862 = vperm.xlu0 %861, %v351
        %v863 = vpop.permute.xlu0 %862
        %866 = vset.pattern.permute.xlu0 0
        %867 = vperm.xlu0 %866, %v352
        %v868 = vpop.permute.xlu0 %867
        %871 = vset.pattern.permute.xlu0 0
        %872 = vperm.xlu0 %871, %v353
        %v873 = vpop.permute.xlu0 %872
        %876 = vset.pattern.permute.xlu0 0
        %877 = vperm.xlu0 %876, %v354
        %v878 = vpop.permute.xlu0 %877
        %881 = vset.pattern.permute.xlu0 0
        %882 = vperm.xlu0 %881, %v355
        %v883 = vpop.permute.xlu0 %882
        %886 = vset.pattern.permute.xlu0 0
        %887 = vperm.xlu0 %886, %v356
        %v888 = vpop.permute.xlu0 %887
        %891 = vset.pattern.permute.xlu0 0
        %892 = vperm.xlu0 %891, %v357
        %v893 = vpop.permute.xlu0 %892
        %896 = vset.pattern.permute.xlu0 0
        %897 = vperm.xlu0 %896, %v358
        %v898 = vpop.permute.xlu0 %897
        %901 = vset.pattern.permute.xlu0 0
        %902 = vperm.xlu0 %901, %v359
        %v903 = vpop.permute.xlu0 %902
        %906 = vset.pattern.permute.xlu0 0
        %907 = vperm.xlu0 %906, %v360
        %v908 = vpop.permute.xlu0 %907
        %911 = vset.pattern.permute.xlu0 0
        %912 = vperm.xlu0 %911, %v361
        %v913 = vpop.permute.xlu0 %912
        %916 = vset.pattern.permute.xlu0 0
        %917 = vperm.xlu0 %916, %v362
        %v918 = vpop.permute.xlu0 %917
        %921 = vset.pattern.permute.xlu0 0
        %922 = vperm.xlu0 %921, %v363
        %v923 = vpop.permute.xlu0 %922
        %926 = vset.pattern.permute.xlu0 0
        %927 = vperm.xlu0 %926, %v364
        %v928 = vpop.permute.xlu0 %927
        %931 = vset.pattern.permute.xlu0 0
        %932 = vperm.xlu0 %931, %v365
        %v933 = vpop.permute.xlu0 %932
        %936 = vset.pattern.permute.xlu0 0
        %937 = vperm.xlu0 %936, %v366
        %v938 = vpop.permute.xlu0 %937
        %941 = vset.pattern.permute.xlu0 0
        %942 = vperm.xlu0 %941, %v367
        %v943 = vpop.permute.xlu0 %942
        %946 = vset.pattern.permute.xlu0 0
        %947 = vperm.xlu0 %946, %v368
        %v948 = vpop.permute.xlu0 %947
        %951 = vset.pattern.permute.xlu0 0
        %952 = vperm.xlu0 %951, %v369
        %v953 = vpop.permute.xlu0 %952
        %956 = vset.pattern.permute.xlu0 0
        %957 = vperm.xlu0 %956, %v370
        %v958 = vpop.permute.xlu0 %957
        %961 = vset.pattern.permute.xlu0 0
        %962 = vperm.xlu0 %961, %v371
        %v963 = vpop.permute.xlu0 %962
        %966 = vset.pattern.permute.xlu0 0
        %967 = vperm.xlu0 %966, %v372
        %v968 = vpop.permute.xlu0 %967
        %971 = vset.pattern.permute.xlu0 0
        %972 = vperm.xlu0 %971, %v373
        %v973 = vpop.permute.xlu0 %972
        %976 = vset.pattern.permute.xlu0 0
        %977 = vperm.xlu0 %976, %v374
        %v978 = vpop.permute.xlu0 %977
        %981 = vset.pattern.permute.xlu0 0
        %982 = vperm.xlu0 %981, %v375
        %v983 = vpop.permute.xlu0 %982
        %986 = vset.pattern.permute.xlu0 0
        %987 = vperm.xlu0 %986, %v376
        %v988 = vpop.permute.xlu0 %987
        %991 = vset.pattern.permute.xlu0 0
        %992 = vperm.xlu0 %991, %v377
        %v993 = vpop.permute.xlu0 %992
        %996 = vset.pattern.permute.xlu0 0
        %997 = vperm.xlu0 %996, %v378
        %v998 = vpop.permute.xlu0 %997
        %1001 = vset.pattern.permute.xlu0 0
        %1002 = vperm.xlu0 %1001, %v379
        %v1003 = vpop.permute.xlu0 %1002
        %1006 = vset.pattern.permute.xlu0 0
        %1007 = vperm.xlu0 %1006, %v380
        %v1008 = vpop.permute.xlu0 %1007
        %1011 = vset.pattern.permute.xlu0 0
        %1012 = vperm.xlu0 %1011, %v381
        %v1013 = vpop.permute.xlu0 %1012
        %1016 = vset.pattern.permute.xlu0 0
        %1017 = vperm.xlu0 %1016, %v382
        %v1018 = vpop.permute.xlu0 %1017
        %1021 = vset.pattern.permute.xlu0 0
        %1022 = vperm.xlu0 %1021, %v383
        %v1023 = vpop.permute.xlu0 %1022
        %v1025 = vlaneseq
        %v1026 = vshrl.u32 %v1025, 7
        %v1027 = vsub.s32 0, %v1026
        %v1028 = vrot.slane %v384, %v1027
        %v1029 = vmul.f32 %v388, %v1028
        %v1030 = vmul.f32 %v393, %v1028
        %v1031 = vmul.f32 %v398, %v1028
        %v1032 = vmul.f32 %v403, %v1028
        %v1033 = vmul.f32 %v408, %v1028
        %v1034 = vmul.f32 %v413, %v1028
        %v1035 = vmul.f32 %v418, %v1028
        %v1036 = vmul.f32 %v423, %v1028
        %v1037 = vmul.f32 %v428, %v1028
        %v1038 = vmul.f32 %v433, %v1028
        %v1039 = vmul.f32 %v438, %v1028
        %v1040 = vmul.f32 %v443, %v1028
        %v1041 = vmul.f32 %v448, %v1028
        %v1042 = vmul.f32 %v453, %v1028
        %v1043 = vmul.f32 %v458, %v1028
        %v1044 = vmul.f32 %v463, %v1028
        %v1045 = vmul.f32 %v468, %v1028
        %v1046 = vmul.f32 %v473, %v1028
        %v1047 = vmul.f32 %v478, %v1028
        %v1048 = vmul.f32 %v483, %v1028
        %v1049 = vmul.f32 %v488, %v1028
        %v1050 = vmul.f32 %v493, %v1028
        %v1051 = vmul.f32 %v498, %v1028
        %v1052 = vmul.f32 %v503, %v1028
        %v1053 = vmul.f32 %v508, %v1028
        %v1054 = vmul.f32 %v513, %v1028
        %v1055 = vmul.f32 %v518, %v1028
        %v1056 = vmul.f32 %v523, %v1028
        %v1057 = vmul.f32 %v528, %v1028
        %v1058 = vmul.f32 %v533, %v1028
        %v1059 = vmul.f32 %v538, %v1028
        %v1060 = vmul.f32 %v543, %v1028
        %v1061 = vmul.f32 %v548, %v1028
        %v1062 = vmul.f32 %v553, %v1028
        %v1063 = vmul.f32 %v558, %v1028
        %v1064 = vmul.f32 %v563, %v1028
        %v1065 = vmul.f32 %v568, %v1028
        %v1066 = vmul.f32 %v573, %v1028
        %v1067 = vmul.f32 %v578, %v1028
        %v1068 = vmul.f32 %v583, %v1028
        %v1069 = vmul.f32 %v588, %v1028
        %v1070 = vmul.f32 %v593, %v1028
        %v1071 = vmul.f32 %v598, %v1028
        %v1072 = vmul.f32 %v603, %v1028
        %v1073 = vmul.f32 %v608, %v1028
        %v1074 = vmul.f32 %v613, %v1028
        %v1075 = vmul.f32 %v618, %v1028
        %v1076 = vmul.f32 %v623, %v1028
        %v1077 = vmul.f32 %v628, %v1028
        %v1078 = vmul.f32 %v633, %v1028
        %v1079 = vmul.f32 %v638, %v1028
        %v1080 = vmul.f32 %v643, %v1028
        %v1081 = vmul.f32 %v648, %v1028
        %v1082 = vmul.f32 %v653, %v1028
        %v1083 = vmul.f32 %v658, %v1028
        %v1084 = vmul.f32 %v663, %v1028
        %v1085 = vmul.f32 %v668, %v1028
        %v1086 = vmul.f32 %v673, %v1028
        %v1087 = vmul.f32 %v678, %v1028
        %v1088 = vmul.f32 %v683, %v1028
        %v1089 = vmul.f32 %v688, %v1028
        %v1090 = vmul.f32 %v693, %v1028
        %v1091 = vmul.f32 %v698, %v1028
        %v1092 = vmul.f32 %v703, %v1028
        %v1093 = vmul.f32 %v708, %v1028
        %v1094 = vmul.f32 %v713, %v1028
        %v1095 = vmul.f32 %v718, %v1028
        %v1096 = vmul.f32 %v723, %v1028
        %v1097 = vmul.f32 %v728, %v1028
        %v1098 = vmul.f32 %v733, %v1028
        %v1099 = vmul.f32 %v738, %v1028
        %v1100 = vmul.f32 %v743, %v1028
        %v1101 = vmul.f32 %v748, %v1028
        %v1102 = vmul.f32 %v753, %v1028
        %v1103 = vmul.f32 %v758, %v1028
        %v1104 = vmul.f32 %v763, %v1028
        %v1105 = vmul.f32 %v768, %v1028
        %v1106 = vmul.f32 %v773, %v1028
        %v1107 = vmul.f32 %v778, %v1028
        %v1108 = vmul.f32 %v783, %v1028
        %v1109 = vmul.f32 %v788, %v1028
        %v1110 = vmul.f32 %v793, %v1028
        %v1111 = vmul.f32 %v798, %v1028
        %v1112 = vmul.f32 %v803, %v1028
        %v1113 = vmul.f32 %v808, %v1028
        %v1114 = vmul.f32 %v813, %v1028
        %v1115 = vmul.f32 %v818, %v1028
        %v1116 = vmul.f32 %v823, %v1028
        %v1117 = vmul.f32 %v828, %v1028
        %v1118 = vmul.f32 %v833, %v1028
        %v1119 = vmul.f32 %v838, %v1028
        %v1120 = vmul.f32 %v843, %v1028
        %v1121 = vmul.f32 %v848, %v1028
        %v1122 = vmul.f32 %v853, %v1028
        %v1123 = vmul.f32 %v858, %v1028
        %v1124 = vmul.f32 %v863, %v1028
        %v1125 = vmul.f32 %v868, %v1028
        %v1126 = vmul.f32 %v873, %v1028
        %v1127 = vmul.f32 %v878, %v1028
        %v1128 = vmul.f32 %v883, %v1028
        %v1129 = vmul.f32 %v888, %v1028
        %v1130 = vmul.f32 %v893, %v1028
        %v1131 = vmul.f32 %v898, %v1028
        %v1132 = vmul.f32 %v903, %v1028
        %v1133 = vmul.f32 %v908, %v1028
        %v1134 = vmul.f32 %v913, %v1028
        %v1135 = vmul.f32 %v918, %v1028
        %v1136 = vmul.f32 %v923, %v1028
        %v1137 = vmul.f32 %v928, %v1028
        %v1138 = vmul.f32 %v933, %v1028
        %v1139 = vmul.f32 %v938, %v1028
        %v1140 = vmul.f32 %v943, %v1028
        %v1141 = vmul.f32 %v948, %v1028
        %v1142 = vmul.f32 %v953, %v1028
        %v1143 = vmul.f32 %v958, %v1028
        %v1144 = vmul.f32 %v963, %v1028
        %v1145 = vmul.f32 %v968, %v1028
        %v1146 = vmul.f32 %v973, %v1028
        %v1147 = vmul.f32 %v978, %v1028
        %v1148 = vmul.f32 %v983, %v1028
        %v1149 = vmul.f32 %v988, %v1028
        %v1150 = vmul.f32 %v993, %v1028
        %v1151 = vmul.f32 %v998, %v1028
        %v1152 = vmul.f32 %v1003, %v1028
        %v1153 = vmul.f32 %v1008, %v1028
        %v1154 = vmul.f32 %v1013, %v1028
        %v1155 = vmul.f32 %v1018, %v1028
        %v1156 = vmul.f32 %v1023, %v1028
        %1157 = vset.pattern.permute.xlu0 1
        %1158 = vperm.xlu0 %1157, %v256
        %v1159 = vpop.permute.xlu0 %1158
        %1161 = vset.pattern.permute.xlu0 1
        %1162 = vperm.xlu0 %1161, %v257
        %v1163 = vpop.permute.xlu0 %1162
        %1165 = vset.pattern.permute.xlu0 1
        %1166 = vperm.xlu0 %1165, %v258
        %v1167 = vpop.permute.xlu0 %1166
        %1169 = vset.pattern.permute.xlu0 1
        %1170 = vperm.xlu0 %1169, %v259
        %v1171 = vpop.permute.xlu0 %1170
        %1173 = vset.pattern.permute.xlu0 1
        %1174 = vperm.xlu0 %1173, %v260
        %v1175 = vpop.permute.xlu0 %1174
        %1177 = vset.pattern.permute.xlu0 1
        %1178 = vperm.xlu0 %1177, %v261
        %v1179 = vpop.permute.xlu0 %1178
        %1181 = vset.pattern.permute.xlu0 1
        %1182 = vperm.xlu0 %1181, %v262
        %v1183 = vpop.permute.xlu0 %1182
        %1185 = vset.pattern.permute.xlu0 1
        %1186 = vperm.xlu0 %1185, %v263
        %v1187 = vpop.permute.xlu0 %1186
        %1189 = vset.pattern.permute.xlu0 1
        %1190 = vperm.xlu0 %1189, %v264
        %v1191 = vpop.permute.xlu0 %1190
        %1193 = vset.pattern.permute.xlu0 1
        %1194 = vperm.xlu0 %1193, %v265
        %v1195 = vpop.permute.xlu0 %1194
        %1197 = vset.pattern.permute.xlu0 1
        %1198 = vperm.xlu0 %1197, %v266
        %v1199 = vpop.permute.xlu0 %1198
        %1201 = vset.pattern.permute.xlu0 1
        %1202 = vperm.xlu0 %1201, %v267
        %v1203 = vpop.permute.xlu0 %1202
        %1205 = vset.pattern.permute.xlu0 1
        %1206 = vperm.xlu0 %1205, %v268
        %v1207 = vpop.permute.xlu0 %1206
        %1209 = vset.pattern.permute.xlu0 1
        %1210 = vperm.xlu0 %1209, %v269
        %v1211 = vpop.permute.xlu0 %1210
        %1213 = vset.pattern.permute.xlu0 1
        %1214 = vperm.xlu0 %1213, %v270
        %v1215 = vpop.permute.xlu0 %1214
        %1217 = vset.pattern.permute.xlu0 1
        %1218 = vperm.xlu0 %1217, %v271
        %v1219 = vpop.permute.xlu0 %1218
        %1221 = vset.pattern.permute.xlu0 1
        %1222 = vperm.xlu0 %1221, %v272
        %v1223 = vpop.permute.xlu0 %1222
        %1225 = vset.pattern.permute.xlu0 1
        %1226 = vperm.xlu0 %1225, %v273
        %v1227 = vpop.permute.xlu0 %1226
        %1229 = vset.pattern.permute.xlu0 1
        %1230 = vperm.xlu0 %1229, %v274
        %v1231 = vpop.permute.xlu0 %1230
        %1233 = vset.pattern.permute.xlu0 1
        %1234 = vperm.xlu0 %1233, %v275
        %v1235 = vpop.permute.xlu0 %1234
        %1237 = vset.pattern.permute.xlu0 1
        %1238 = vperm.xlu0 %1237, %v276
        %v1239 = vpop.permute.xlu0 %1238
        %1241 = vset.pattern.permute.xlu0 1
        %1242 = vperm.xlu0 %1241, %v277
        %v1243 = vpop.permute.xlu0 %1242
        %1245 = vset.pattern.permute.xlu0 1
        %1246 = vperm.xlu0 %1245, %v278
        %v1247 = vpop.permute.xlu0 %1246
        %1249 = vset.pattern.permute.xlu0 1
        %1250 = vperm.xlu0 %1249, %v279
        %v1251 = vpop.permute.xlu0 %1250
        %1253 = vset.pattern.permute.xlu0 1
        %1254 = vperm.xlu0 %1253, %v280
        %v1255 = vpop.permute.xlu0 %1254
        %1257 = vset.pattern.permute.xlu0 1
        %1258 = vperm.xlu0 %1257, %v281
        %v1259 = vpop.permute.xlu0 %1258
        %1261 = vset.pattern.permute.xlu0 1
        %1262 = vperm.xlu0 %1261, %v282
        %v1263 = vpop.permute.xlu0 %1262
        %1265 = vset.pattern.permute.xlu0 1
        %1266 = vperm.xlu0 %1265, %v283
        %v1267 = vpop.permute.xlu0 %1266
        %1269 = vset.pattern.permute.xlu0 1
        %1270 = vperm.xlu0 %1269, %v284
        %v1271 = vpop.permute.xlu0 %1270
        %1273 = vset.pattern.permute.xlu0 1
        %1274 = vperm.xlu0 %1273, %v285
        %v1275 = vpop.permute.xlu0 %1274
        %1277 = vset.pattern.permute.xlu0 1
        %1278 = vperm.xlu0 %1277, %v286
        %v1279 = vpop.permute.xlu0 %1278
        %1281 = vset.pattern.permute.xlu0 1
        %1282 = vperm.xlu0 %1281, %v287
        %v1283 = vpop.permute.xlu0 %1282
        %1285 = vset.pattern.permute.xlu0 1
        %1286 = vperm.xlu0 %1285, %v288
        %v1287 = vpop.permute.xlu0 %1286
        %1289 = vset.pattern.permute.xlu0 1
        %1290 = vperm.xlu0 %1289, %v289
        %v1291 = vpop.permute.xlu0 %1290
        %1293 = vset.pattern.permute.xlu0 1
        %1294 = vperm.xlu0 %1293, %v290
        %v1295 = vpop.permute.xlu0 %1294
        %1297 = vset.pattern.permute.xlu0 1
        %1298 = vperm.xlu0 %1297, %v291
        %v1299 = vpop.permute.xlu0 %1298
        %1301 = vset.pattern.permute.xlu0 1
        %1302 = vperm.xlu0 %1301, %v292
        %v1303 = vpop.permute.xlu0 %1302
        %1305 = vset.pattern.permute.xlu0 1
        %1306 = vperm.xlu0 %1305, %v293
        %v1307 = vpop.permute.xlu0 %1306
        %1309 = vset.pattern.permute.xlu0 1
        %1310 = vperm.xlu0 %1309, %v294
        %v1311 = vpop.permute.xlu0 %1310
        %1313 = vset.pattern.permute.xlu0 1
        %1314 = vperm.xlu0 %1313, %v295
        %v1315 = vpop.permute.xlu0 %1314
        %1317 = vset.pattern.permute.xlu0 1
        %1318 = vperm.xlu0 %1317, %v296
        %v1319 = vpop.permute.xlu0 %1318
        %1321 = vset.pattern.permute.xlu0 1
        %1322 = vperm.xlu0 %1321, %v297
        %v1323 = vpop.permute.xlu0 %1322
        %1325 = vset.pattern.permute.xlu0 1
        %1326 = vperm.xlu0 %1325, %v298
        %v1327 = vpop.permute.xlu0 %1326
        %1329 = vset.pattern.permute.xlu0 1
        %1330 = vperm.xlu0 %1329, %v299
        %v1331 = vpop.permute.xlu0 %1330
        %1333 = vset.pattern.permute.xlu0 1
        %1334 = vperm.xlu0 %1333, %v300
        %v1335 = vpop.permute.xlu0 %1334
        %1337 = vset.pattern.permute.xlu0 1
        %1338 = vperm.xlu0 %1337, %v301
        %v1339 = vpop.permute.xlu0 %1338
        %1341 = vset.pattern.permute.xlu0 1
        %1342 = vperm.xlu0 %1341, %v302
        %v1343 = vpop.permute.xlu0 %1342
        %1345 = vset.pattern.permute.xlu0 1
        %1346 = vperm.xlu0 %1345, %v303
        %v1347 = vpop.permute.xlu0 %1346
        %1349 = vset.pattern.permute.xlu0 1
        %1350 = vperm.xlu0 %1349, %v304
        %v1351 = vpop.permute.xlu0 %1350
        %1353 = vset.pattern.permute.xlu0 1
        %1354 = vperm.xlu0 %1353, %v305
        %v1355 = vpop.permute.xlu0 %1354
        %1357 = vset.pattern.permute.xlu0 1
        %1358 = vperm.xlu0 %1357, %v306
        %v1359 = vpop.permute.xlu0 %1358
        %1361 = vset.pattern.permute.xlu0 1
        %1362 = vperm.xlu0 %1361, %v307
        %v1363 = vpop.permute.xlu0 %1362
        %1365 = vset.pattern.permute.xlu0 1
        %1366 = vperm.xlu0 %1365, %v308
        %v1367 = vpop.permute.xlu0 %1366
        %1369 = vset.pattern.permute.xlu0 1
        %1370 = vperm.xlu0 %1369, %v309
        %v1371 = vpop.permute.xlu0 %1370
        %1373 = vset.pattern.permute.xlu0 1
        %1374 = vperm.xlu0 %1373, %v310
        %v1375 = vpop.permute.xlu0 %1374
        %1377 = vset.pattern.permute.xlu0 1
        %1378 = vperm.xlu0 %1377, %v311
        %v1379 = vpop.permute.xlu0 %1378
        %1381 = vset.pattern.permute.xlu0 1
        %1382 = vperm.xlu0 %1381, %v312
        %v1383 = vpop.permute.xlu0 %1382
        %1385 = vset.pattern.permute.xlu0 1
        %1386 = vperm.xlu0 %1385, %v313
        %v1387 = vpop.permute.xlu0 %1386
        %1389 = vset.pattern.permute.xlu0 1
        %1390 = vperm.xlu0 %1389, %v314
        %v1391 = vpop.permute.xlu0 %1390
        %1393 = vset.pattern.permute.xlu0 1
        %1394 = vperm.xlu0 %1393, %v315
        %v1395 = vpop.permute.xlu0 %1394
        %1397 = vset.pattern.permute.xlu0 1
        %1398 = vperm.xlu0 %1397, %v316
        %v1399 = vpop.permute.xlu0 %1398
        %1401 = vset.pattern.permute.xlu0 1
        %1402 = vperm.xlu0 %1401, %v317
        %v1403 = vpop.permute.xlu0 %1402
        %1405 = vset.pattern.permute.xlu0 1
        %1406 = vperm.xlu0 %1405, %v318
        %v1407 = vpop.permute.xlu0 %1406
        %1409 = vset.pattern.permute.xlu0 1
        %1410 = vperm.xlu0 %1409, %v319
        %v1411 = vpop.permute.xlu0 %1410
        %1413 = vset.pattern.permute.xlu0 1
        %1414 = vperm.xlu0 %1413, %v320
        %v1415 = vpop.permute.xlu0 %1414
        %1417 = vset.pattern.permute.xlu0 1
        %1418 = vperm.xlu0 %1417, %v321
        %v1419 = vpop.permute.xlu0 %1418
        %1421 = vset.pattern.permute.xlu0 1
        %1422 = vperm.xlu0 %1421, %v322
        %v1423 = vpop.permute.xlu0 %1422
        %1425 = vset.pattern.permute.xlu0 1
        %1426 = vperm.xlu0 %1425, %v323
        %v1427 = vpop.permute.xlu0 %1426
        %1429 = vset.pattern.permute.xlu0 1
        %1430 = vperm.xlu0 %1429, %v324
        %v1431 = vpop.permute.xlu0 %1430
        %1433 = vset.pattern.permute.xlu0 1
        %1434 = vperm.xlu0 %1433, %v325
        %v1435 = vpop.permute.xlu0 %1434
        %1437 = vset.pattern.permute.xlu0 1
        %1438 = vperm.xlu0 %1437, %v326
        %v1439 = vpop.permute.xlu0 %1438
        %1441 = vset.pattern.permute.xlu0 1
        %1442 = vperm.xlu0 %1441, %v327
        %v1443 = vpop.permute.xlu0 %1442
        %1445 = vset.pattern.permute.xlu0 1
        %1446 = vperm.xlu0 %1445, %v328
        %v1447 = vpop.permute.xlu0 %1446
        %1449 = vset.pattern.permute.xlu0 1
        %1450 = vperm.xlu0 %1449, %v329
        %v1451 = vpop.permute.xlu0 %1450
        %1453 = vset.pattern.permute.xlu0 1
        %1454 = vperm.xlu0 %1453, %v330
        %v1455 = vpop.permute.xlu0 %1454
        %1457 = vset.pattern.permute.xlu0 1
        %1458 = vperm.xlu0 %1457, %v331
        %v1459 = vpop.permute.xlu0 %1458
        %1461 = vset.pattern.permute.xlu0 1
        %1462 = vperm.xlu0 %1461, %v332
        %v1463 = vpop.permute.xlu0 %1462
        %1465 = vset.pattern.permute.xlu0 1
        %1466 = vperm.xlu0 %1465, %v333
        %v1467 = vpop.permute.xlu0 %1466
        %1469 = vset.pattern.permute.xlu0 1
        %1470 = vperm.xlu0 %1469, %v334
        %v1471 = vpop.permute.xlu0 %1470
        %1473 = vset.pattern.permute.xlu0 1
        %1474 = vperm.xlu0 %1473, %v335
        %v1475 = vpop.permute.xlu0 %1474
        %1477 = vset.pattern.permute.xlu0 1
        %1478 = vperm.xlu0 %1477, %v336
        %v1479 = vpop.permute.xlu0 %1478
        %1481 = vset.pattern.permute.xlu0 1
        %1482 = vperm.xlu0 %1481, %v337
        %v1483 = vpop.permute.xlu0 %1482
        %1485 = vset.pattern.permute.xlu0 1
        %1486 = vperm.xlu0 %1485, %v338
        %v1487 = vpop.permute.xlu0 %1486
        %1489 = vset.pattern.permute.xlu0 1
        %1490 = vperm.xlu0 %1489, %v339
        %v1491 = vpop.permute.xlu0 %1490
        %1493 = vset.pattern.permute.xlu0 1
        %1494 = vperm.xlu0 %1493, %v340
        %v1495 = vpop.permute.xlu0 %1494
        %1497 = vset.pattern.permute.xlu0 1
        %1498 = vperm.xlu0 %1497, %v341
        %v1499 = vpop.permute.xlu0 %1498
        %1501 = vset.pattern.permute.xlu0 1
        %1502 = vperm.xlu0 %1501, %v342
        %v1503 = vpop.permute.xlu0 %1502
        %1505 = vset.pattern.permute.xlu0 1
        %1506 = vperm.xlu0 %1505, %v343
        %v1507 = vpop.permute.xlu0 %1506
        %1509 = vset.pattern.permute.xlu0 1
        %1510 = vperm.xlu0 %1509, %v344
        %v1511 = vpop.permute.xlu0 %1510
        %1513 = vset.pattern.permute.xlu0 1
        %1514 = vperm.xlu0 %1513, %v345
        %v1515 = vpop.permute.xlu0 %1514
        %1517 = vset.pattern.permute.xlu0 1
        %1518 = vperm.xlu0 %1517, %v346
        %v1519 = vpop.permute.xlu0 %1518
        %1521 = vset.pattern.permute.xlu0 1
        %1522 = vperm.xlu0 %1521, %v347
        %v1523 = vpop.permute.xlu0 %1522
        %1525 = vset.pattern.permute.xlu0 1
        %1526 = vperm.xlu0 %1525, %v348
        %v1527 = vpop.permute.xlu0 %1526
        %1529 = vset.pattern.permute.xlu0 1
        %1530 = vperm.xlu0 %1529, %v349
        %v1531 = vpop.permute.xlu0 %1530
        %1533 = vset.pattern.permute.xlu0 1
        %1534 = vperm.xlu0 %1533, %v350
        %v1535 = vpop.permute.xlu0 %1534
        %1537 = vset.pattern.permute.xlu0 1
        %1538 = vperm.xlu0 %1537, %v351
        %v1539 = vpop.permute.xlu0 %1538
        %1541 = vset.pattern.permute.xlu0 1
        %1542 = vperm.xlu0 %1541, %v352
        %v1543 = vpop.permute.xlu0 %1542
        %1545 = vset.pattern.permute.xlu0 1
        %1546 = vperm.xlu0 %1545, %v353
        %v1547 = vpop.permute.xlu0 %1546
        %1549 = vset.pattern.permute.xlu0 1
        %1550 = vperm.xlu0 %1549, %v354
        %v1551 = vpop.permute.xlu0 %1550
        %1553 = vset.pattern.permute.xlu0 1
        %1554 = vperm.xlu0 %1553, %v355
        %v1555 = vpop.permute.xlu0 %1554
        %1557 = vset.pattern.permute.xlu0 1
        %1558 = vperm.xlu0 %1557, %v356
        %v1559 = vpop.permute.xlu0 %1558
        %1561 = vset.pattern.permute.xlu0 1
        %1562 = vperm.xlu0 %1561, %v357
        %v1563 = vpop.permute.xlu0 %1562
        %1565 = vset.pattern.permute.xlu0 1
        %1566 = vperm.xlu0 %1565, %v358
        %v1567 = vpop.permute.xlu0 %1566
        %1569 = vset.pattern.permute.xlu0 1
        %1570 = vperm.xlu0 %1569, %v359
        %v1571 = vpop.permute.xlu0 %1570
        %1573 = vset.pattern.permute.xlu0 1
        %1574 = vperm.xlu0 %1573, %v360
        %v1575 = vpop.permute.xlu0 %1574
        %1577 = vset.pattern.permute.xlu0 1
        %1578 = vperm.xlu0 %1577, %v361
        %v1579 = vpop.permute.xlu0 %1578
        %1581 = vset.pattern.permute.xlu0 1
        %1582 = vperm.xlu0 %1581, %v362
        %v1583 = vpop.permute.xlu0 %1582
        %1585 = vset.pattern.permute.xlu0 1
        %1586 = vperm.xlu0 %1585, %v363
        %v1587 = vpop.permute.xlu0 %1586
        %1589 = vset.pattern.permute.xlu0 1
        %1590 = vperm.xlu0 %1589, %v364
        %v1591 = vpop.permute.xlu0 %1590
        %1593 = vset.pattern.permute.xlu0 1
        %1594 = vperm.xlu0 %1593, %v365
        %v1595 = vpop.permute.xlu0 %1594
        %1597 = vset.pattern.permute.xlu0 1
        %1598 = vperm.xlu0 %1597, %v366
        %v1599 = vpop.permute.xlu0 %1598
        %1601 = vset.pattern.permute.xlu0 1
        %1602 = vperm.xlu0 %1601, %v367
        %v1603 = vpop.permute.xlu0 %1602
        %1605 = vset.pattern.permute.xlu0 1
        %1606 = vperm.xlu0 %1605, %v368
        %v1607 = vpop.permute.xlu0 %1606
        %1609 = vset.pattern.permute.xlu0 1
        %1610 = vperm.xlu0 %1609, %v369
        %v1611 = vpop.permute.xlu0 %1610
        %1613 = vset.pattern.permute.xlu0 1
        %1614 = vperm.xlu0 %1613, %v370
        %v1615 = vpop.permute.xlu0 %1614
        %1617 = vset.pattern.permute.xlu0 1
        %1618 = vperm.xlu0 %1617, %v371
        %v1619 = vpop.permute.xlu0 %1618
        %1621 = vset.pattern.permute.xlu0 1
        %1622 = vperm.xlu0 %1621, %v372
        %v1623 = vpop.permute.xlu0 %1622
        %1625 = vset.pattern.permute.xlu0 1
        %1626 = vperm.xlu0 %1625, %v373
        %v1627 = vpop.permute.xlu0 %1626
        %1629 = vset.pattern.permute.xlu0 1
        %1630 = vperm.xlu0 %1629, %v374
        %v1631 = vpop.permute.xlu0 %1630
        %1633 = vset.pattern.permute.xlu0 1
        %1634 = vperm.xlu0 %1633, %v375
        %v1635 = vpop.permute.xlu0 %1634
        %1637 = vset.pattern.permute.xlu0 1
        %1638 = vperm.xlu0 %1637, %v376
        %v1639 = vpop.permute.xlu0 %1638
        %1641 = vset.pattern.permute.xlu0 1
        %1642 = vperm.xlu0 %1641, %v377
        %v1643 = vpop.permute.xlu0 %1642
        %1645 = vset.pattern.permute.xlu0 1
        %1646 = vperm.xlu0 %1645, %v378
        %v1647 = vpop.permute.xlu0 %1646
        %1649 = vset.pattern.permute.xlu0 1
        %1650 = vperm.xlu0 %1649, %v379
        %v1651 = vpop.permute.xlu0 %1650
        %1653 = vset.pattern.permute.xlu0 1
        %1654 = vperm.xlu0 %1653, %v380
        %v1655 = vpop.permute.xlu0 %1654
        %1657 = vset.pattern.permute.xlu0 1
        %1658 = vperm.xlu0 %1657, %v381
        %v1659 = vpop.permute.xlu0 %1658
        %1661 = vset.pattern.permute.xlu0 1
        %1662 = vperm.xlu0 %1661, %v382
        %v1663 = vpop.permute.xlu0 %1662
        %1665 = vset.pattern.permute.xlu0 1
        %1666 = vperm.xlu0 %1665, %v383
        %v1667 = vpop.permute.xlu0 %1666
        %v1669 = vlaneseq
        %v1670 = vshrl.u32 %v1669, 7
        %v1671 = vsub.s32 1, %v1670
        %v1672 = vrot.slane %v384, %v1671
        %v1673 = vmul.f32 %v1159, %v1672
        %v1674 = vmul.f32 %v1163, %v1672
        %v1675 = vmul.f32 %v1167, %v1672
        %v1676 = vmul.f32 %v1171, %v1672
        %v1677 = vmul.f32 %v1175, %v1672
        %v1678 = vmul.f32 %v1179, %v1672
        %v1679 = vmul.f32 %v1183, %v1672
        %v1680 = vmul.f32 %v1187, %v1672
        %v1681 = vmul.f32 %v1191, %v1672
        %v1682 = vmul.f32 %v1195, %v1672
        %v1683 = vmul.f32 %v1199, %v1672
        %v1684 = vmul.f32 %v1203, %v1672
        %v1685 = vmul.f32 %v1207, %v1672
        %v1686 = vmul.f32 %v1211, %v1672
        %v1687 = vmul.f32 %v1215, %v1672
        %v1688 = vmul.f32 %v1219, %v1672
        %v1689 = vmul.f32 %v1223, %v1672
        %v1690 = vmul.f32 %v1227, %v1672
        %v1691 = vmul.f32 %v1231, %v1672
        %v1692 = vmul.f32 %v1235, %v1672
        %v1693 = vmul.f32 %v1239, %v1672
        %v1694 = vmul.f32 %v1243, %v1672
        %v1695 = vmul.f32 %v1247, %v1672
        %v1696 = vmul.f32 %v1251, %v1672
        %v1697 = vmul.f32 %v1255, %v1672
        %v1698 = vmul.f32 %v1259, %v1672
        %v1699 = vmul.f32 %v1263, %v1672
        %v1700 = vmul.f32 %v1267, %v1672
        %v1701 = vmul.f32 %v1271, %v1672
        %v1702 = vmul.f32 %v1275, %v1672
        %v1703 = vmul.f32 %v1279, %v1672
        %v1704 = vmul.f32 %v1283, %v1672
        %v1705 = vmul.f32 %v1287, %v1672
        %v1706 = vmul.f32 %v1291, %v1672
        %v1707 = vmul.f32 %v1295, %v1672
        %v1708 = vmul.f32 %v1299, %v1672
        %v1709 = vmul.f32 %v1303, %v1672
        %v1710 = vmul.f32 %v1307, %v1672
        %v1711 = vmul.f32 %v1311, %v1672
        %v1712 = vmul.f32 %v1315, %v1672
        %v1713 = vmul.f32 %v1319, %v1672
        %v1714 = vmul.f32 %v1323, %v1672
        %v1715 = vmul.f32 %v1327, %v1672
        %v1716 = vmul.f32 %v1331, %v1672
        %v1717 = vmul.f32 %v1335, %v1672
        %v1718 = vmul.f32 %v1339, %v1672
        %v1719 = vmul.f32 %v1343, %v1672
        %v1720 = vmul.f32 %v1347, %v1672
        %v1721 = vmul.f32 %v1351, %v1672
        %v1722 = vmul.f32 %v1355, %v1672
        %v1723 = vmul.f32 %v1359, %v1672
        %v1724 = vmul.f32 %v1363, %v1672
        %v1725 = vmul.f32 %v1367, %v1672
        %v1726 = vmul.f32 %v1371, %v1672
        %v1727 = vmul.f32 %v1375, %v1672
        %v1728 = vmul.f32 %v1379, %v1672
        %v1729 = vmul.f32 %v1383, %v1672
        %v1730 = vmul.f32 %v1387, %v1672
        %v1731 = vmul.f32 %v1391, %v1672
        %v1732 = vmul.f32 %v1395, %v1672
        %v1733 = vmul.f32 %v1399, %v1672
        %v1734 = vmul.f32 %v1403, %v1672
        %v1735 = vmul.f32 %v1407, %v1672
        %v1736 = vmul.f32 %v1411, %v1672
        %v1737 = vmul.f32 %v1415, %v1672
        %v1738 = vmul.f32 %v1419, %v1672
        %v1739 = vmul.f32 %v1423, %v1672
        %v1740 = vmul.f32 %v1427, %v1672
        %v1741 = vmul.f32 %v1431, %v1672
        %v1742 = vmul.f32 %v1435, %v1672
        %v1743 = vmul.f32 %v1439, %v1672
        %v1744 = vmul.f32 %v1443, %v1672
        %v1745 = vmul.f32 %v1447, %v1672
        %v1746 = vmul.f32 %v1451, %v1672
        %v1747 = vmul.f32 %v1455, %v1672
        %v1748 = vmul.f32 %v1459, %v1672
        %v1749 = vmul.f32 %v1463, %v1672
        %v1750 = vmul.f32 %v1467, %v1672
        %v1751 = vmul.f32 %v1471, %v1672
        %v1752 = vmul.f32 %v1475, %v1672
        %v1753 = vmul.f32 %v1479, %v1672
        %v1754 = vmul.f32 %v1483, %v1672
        %v1755 = vmul.f32 %v1487, %v1672
        %v1756 = vmul.f32 %v1491, %v1672
        %v1757 = vmul.f32 %v1495, %v1672
        %v1758 = vmul.f32 %v1499, %v1672
        %v1759 = vmul.f32 %v1503, %v1672
        %v1760 = vmul.f32 %v1507, %v1672
        %v1761 = vmul.f32 %v1511, %v1672
        %v1762 = vmul.f32 %v1515, %v1672
        %v1763 = vmul.f32 %v1519, %v1672
        %v1764 = vmul.f32 %v1523, %v1672
        %v1765 = vmul.f32 %v1527, %v1672
        %v1766 = vmul.f32 %v1531, %v1672
        %v1767 = vmul.f32 %v1535, %v1672
        %v1768 = vmul.f32 %v1539, %v1672
        %v1769 = vmul.f32 %v1543, %v1672
        %v1770 = vmul.f32 %v1547, %v1672
        %v1771 = vmul.f32 %v1551, %v1672
        %v1772 = vmul.f32 %v1555, %v1672
        %v1773 = vmul.f32 %v1559, %v1672
        %v1774 = vmul.f32 %v1563, %v1672
        %v1775 = vmul.f32 %v1567, %v1672
        %v1776 = vmul.f32 %v1571, %v1672
        %v1777 = vmul.f32 %v1575, %v1672
        %v1778 = vmul.f32 %v1579, %v1672
        %v1779 = vmul.f32 %v1583, %v1672
        %v1780 = vmul.f32 %v1587, %v1672
        %v1781 = vmul.f32 %v1591, %v1672
        %v1782 = vmul.f32 %v1595, %v1672
        %v1783 = vmul.f32 %v1599, %v1672
        %v1784 = vmul.f32 %v1603, %v1672
        %v1785 = vmul.f32 %v1607, %v1672
        %v1786 = vmul.f32 %v1611, %v1672
        %v1787 = vmul.f32 %v1615, %v1672
        %v1788 = vmul.f32 %v1619, %v1672
        %v1789 = vmul.f32 %v1623, %v1672
        %v1790 = vmul.f32 %v1627, %v1672
        %v1791 = vmul.f32 %v1631, %v1672
        %v1792 = vmul.f32 %v1635, %v1672
        %v1793 = vmul.f32 %v1639, %v1672
        %v1794 = vmul.f32 %v1643, %v1672
        %v1795 = vmul.f32 %v1647, %v1672
        %v1796 = vmul.f32 %v1651, %v1672
        %v1797 = vmul.f32 %v1655, %v1672
        %v1798 = vmul.f32 %v1659, %v1672
        %v1799 = vmul.f32 %v1663, %v1672
        %v1800 = vmul.f32 %v1667, %v1672
        %v1801 = vadd.f32 %v1029, %v1673
        %v1802 = vadd.f32 %v1030, %v1674
        %v1803 = vadd.f32 %v1031, %v1675
        %v1804 = vadd.f32 %v1032, %v1676
        %v1805 = vadd.f32 %v1033, %v1677
        %v1806 = vadd.f32 %v1034, %v1678
        %v1807 = vadd.f32 %v1035, %v1679
        %v1808 = vadd.f32 %v1036, %v1680
        %v1809 = vadd.f32 %v1037, %v1681
        %v1810 = vadd.f32 %v1038, %v1682
        %v1811 = vadd.f32 %v1039, %v1683
        %v1812 = vadd.f32 %v1040, %v1684
        %v1813 = vadd.f32 %v1041, %v1685
        %v1814 = vadd.f32 %v1042, %v1686
        %v1815 = vadd.f32 %v1043, %v1687
        %v1816 = vadd.f32 %v1044, %v1688
        %v1817 = vadd.f32 %v1045, %v1689
        %v1818 = vadd.f32 %v1046, %v1690
        %v1819 = vadd.f32 %v1047, %v1691
        %v1820 = vadd.f32 %v1048, %v1692
        %v1821 = vadd.f32 %v1049, %v1693
        %v1822 = vadd.f32 %v1050, %v1694
        %v1823 = vadd.f32 %v1051, %v1695
        %v1824 = vadd.f32 %v1052, %v1696
        %v1825 = vadd.f32 %v1053, %v1697
        %v1826 = vadd.f32 %v1054, %v1698
        %v1827 = vadd.f32 %v1055, %v1699
        %v1828 = vadd.f32 %v1056, %v1700
        %v1829 = vadd.f32 %v1057, %v1701
        %v1830 = vadd.f32 %v1058, %v1702
        %v1831 = vadd.f32 %v1059, %v1703
        %v1832 = vadd.f32 %v1060, %v1704
        %v1833 = vadd.f32 %v1061, %v1705
        %v1834 = vadd.f32 %v1062, %v1706
        %v1835 = vadd.f32 %v1063, %v1707
        %v1836 = vadd.f32 %v1064, %v1708
        %v1837 = vadd.f32 %v1065, %v1709
        %v1838 = vadd.f32 %v1066, %v1710
        %v1839 = vadd.f32 %v1067, %v1711
        %v1840 = vadd.f32 %v1068, %v1712
        %v1841 = vadd.f32 %v1069, %v1713
        %v1842 = vadd.f32 %v1070, %v1714
        %v1843 = vadd.f32 %v1071, %v1715
        %v1844 = vadd.f32 %v1072, %v1716
        %v1845 = vadd.f32 %v1073, %v1717
        %v1846 = vadd.f32 %v1074, %v1718
        %v1847 = vadd.f32 %v1075, %v1719
        %v1848 = vadd.f32 %v1076, %v1720
        %v1849 = vadd.f32 %v1077, %v1721
        %v1850 = vadd.f32 %v1078, %v1722
        %v1851 = vadd.f32 %v1079, %v1723
        %v1852 = vadd.f32 %v1080, %v1724
        %v1853 = vadd.f32 %v1081, %v1725
        %v1854 = vadd.f32 %v1082, %v1726
        %v1855 = vadd.f32 %v1083, %v1727
        %v1856 = vadd.f32 %v1084, %v1728
        %v1857 = vadd.f32 %v1085, %v1729
        %v1858 = vadd.f32 %v1086, %v1730
        %v1859 = vadd.f32 %v1087, %v1731
        %v1860 = vadd.f32 %v1088, %v1732
        %v1861 = vadd.f32 %v1089, %v1733
        %v1862 = vadd.f32 %v1090, %v1734
        %v1863 = vadd.f32 %v1091, %v1735
        %v1864 = vadd.f32 %v1092, %v1736
        %v1865 = vadd.f32 %v1093, %v1737
        %v1866 = vadd.f32 %v1094, %v1738
        %v1867 = vadd.f32 %v1095, %v1739
        %v1868 = vadd.f32 %v1096, %v1740
        %v1869 = vadd.f32 %v1097, %v1741
        %v1870 = vadd.f32 %v1098, %v1742
        %v1871 = vadd.f32 %v1099, %v1743
        %v1872 = vadd.f32 %v1100, %v1744
        %v1873 = vadd.f32 %v1101, %v1745
        %v1874 = vadd.f32 %v1102, %v1746
        %v1875 = vadd.f32 %v1103, %v1747
        %v1876 = vadd.f32 %v1104, %v1748
        %v1877 = vadd.f32 %v1105, %v1749
        %v1878 = vadd.f32 %v1106, %v1750
        %v1879 = vadd.f32 %v1107, %v1751
        %v1880 = vadd.f32 %v1108, %v1752
        %v1881 = vadd.f32 %v1109, %v1753
        %v1882 = vadd.f32 %v1110, %v1754
        %v1883 = vadd.f32 %v1111, %v1755
        %v1884 = vadd.f32 %v1112, %v1756
        %v1885 = vadd.f32 %v1113, %v1757
        %v1886 = vadd.f32 %v1114, %v1758
        %v1887 = vadd.f32 %v1115, %v1759
        %v1888 = vadd.f32 %v1116, %v1760
        %v1889 = vadd.f32 %v1117, %v1761
        %v1890 = vadd.f32 %v1118, %v1762
        %v1891 = vadd.f32 %v1119, %v1763
        %v1892 = vadd.f32 %v1120, %v1764
        %v1893 = vadd.f32 %v1121, %v1765
        %v1894 = vadd.f32 %v1122, %v1766
        %v1895 = vadd.f32 %v1123, %v1767
        %v1896 = vadd.f32 %v1124, %v1768
        %v1897 = vadd.f32 %v1125, %v1769
        %v1898 = vadd.f32 %v1126, %v1770
        %v1899 = vadd.f32 %v1127, %v1771
        %v1900 = vadd.f32 %v1128, %v1772
        %v1901 = vadd.f32 %v1129, %v1773
        %v1902 = vadd.f32 %v1130, %v1774
        %v1903 = vadd.f32 %v1131, %v1775
        %v1904 = vadd.f32 %v1132, %v1776
        %v1905 = vadd.f32 %v1133, %v1777
        %v1906 = vadd.f32 %v1134, %v1778
        %v1907 = vadd.f32 %v1135, %v1779
        %v1908 = vadd.f32 %v1136, %v1780
        %v1909 = vadd.f32 %v1137, %v1781
        %v1910 = vadd.f32 %v1138, %v1782
        %v1911 = vadd.f32 %v1139, %v1783
        %v1912 = vadd.f32 %v1140, %v1784
        %v1913 = vadd.f32 %v1141, %v1785
        %v1914 = vadd.f32 %v1142, %v1786
        %v1915 = vadd.f32 %v1143, %v1787
        %v1916 = vadd.f32 %v1144, %v1788
        %v1917 = vadd.f32 %v1145, %v1789
        %v1918 = vadd.f32 %v1146, %v1790
        %v1919 = vadd.f32 %v1147, %v1791
        %v1920 = vadd.f32 %v1148, %v1792
        %v1921 = vadd.f32 %v1149, %v1793
        %v1922 = vadd.f32 %v1150, %v1794
        %v1923 = vadd.f32 %v1151, %v1795
        %v1924 = vadd.f32 %v1152, %v1796
        %v1925 = vadd.f32 %v1153, %v1797
        %v1926 = vadd.f32 %v1154, %v1798
        %v1927 = vadd.f32 %v1155, %v1799
        %v1928 = vadd.f32 %v1156, %v1800
        %1929 = vset.pattern.permute.xlu0 2
        %1930 = vperm.xlu0 %1929, %v256
        %v1931 = vpop.permute.xlu0 %1930
        %1933 = vset.pattern.permute.xlu0 2
        %1934 = vperm.xlu0 %1933, %v257
        %v1935 = vpop.permute.xlu0 %1934
        %1937 = vset.pattern.permute.xlu0 2
        %1938 = vperm.xlu0 %1937, %v258
        %v1939 = vpop.permute.xlu0 %1938
        %1941 = vset.pattern.permute.xlu0 2
        %1942 = vperm.xlu0 %1941, %v259
        %v1943 = vpop.permute.xlu0 %1942
        %1945 = vset.pattern.permute.xlu0 2
        %1946 = vperm.xlu0 %1945, %v260
        %v1947 = vpop.permute.xlu0 %1946
        %1949 = vset.pattern.permute.xlu0 2
        %1950 = vperm.xlu0 %1949, %v261
        %v1951 = vpop.permute.xlu0 %1950
        %1953 = vset.pattern.permute.xlu0 2
        %1954 = vperm.xlu0 %1953, %v262
        %v1955 = vpop.permute.xlu0 %1954
        %1957 = vset.pattern.permute.xlu0 2
        %1958 = vperm.xlu0 %1957, %v263
        %v1959 = vpop.permute.xlu0 %1958
        %1961 = vset.pattern.permute.xlu0 2
        %1962 = vperm.xlu0 %1961, %v264
        %v1963 = vpop.permute.xlu0 %1962
        %1965 = vset.pattern.permute.xlu0 2
        %1966 = vperm.xlu0 %1965, %v265
        %v1967 = vpop.permute.xlu0 %1966
        %1969 = vset.pattern.permute.xlu0 2
        %1970 = vperm.xlu0 %1969, %v266
        %v1971 = vpop.permute.xlu0 %1970
        %1973 = vset.pattern.permute.xlu0 2
        %1974 = vperm.xlu0 %1973, %v267
        %v1975 = vpop.permute.xlu0 %1974
        %1977 = vset.pattern.permute.xlu0 2
        %1978 = vperm.xlu0 %1977, %v268
        %v1979 = vpop.permute.xlu0 %1978
        %1981 = vset.pattern.permute.xlu0 2
        %1982 = vperm.xlu0 %1981, %v269
        %v1983 = vpop.permute.xlu0 %1982
        %1985 = vset.pattern.permute.xlu0 2
        %1986 = vperm.xlu0 %1985, %v270
        %v1987 = vpop.permute.xlu0 %1986
        %1989 = vset.pattern.permute.xlu0 2
        %1990 = vperm.xlu0 %1989, %v271
        %v1991 = vpop.permute.xlu0 %1990
        %1993 = vset.pattern.permute.xlu0 2
        %1994 = vperm.xlu0 %1993, %v272
        %v1995 = vpop.permute.xlu0 %1994
        %1997 = vset.pattern.permute.xlu0 2
        %1998 = vperm.xlu0 %1997, %v273
        %v1999 = vpop.permute.xlu0 %1998
        %2001 = vset.pattern.permute.xlu0 2
        %2002 = vperm.xlu0 %2001, %v274
        %v2003 = vpop.permute.xlu0 %2002
        %2005 = vset.pattern.permute.xlu0 2
        %2006 = vperm.xlu0 %2005, %v275
        %v2007 = vpop.permute.xlu0 %2006
        %2009 = vset.pattern.permute.xlu0 2
        %2010 = vperm.xlu0 %2009, %v276
        %v2011 = vpop.permute.xlu0 %2010
        %2013 = vset.pattern.permute.xlu0 2
        %2014 = vperm.xlu0 %2013, %v277
        %v2015 = vpop.permute.xlu0 %2014
        %2017 = vset.pattern.permute.xlu0 2
        %2018 = vperm.xlu0 %2017, %v278
        %v2019 = vpop.permute.xlu0 %2018
        %2021 = vset.pattern.permute.xlu0 2
        %2022 = vperm.xlu0 %2021, %v279
        %v2023 = vpop.permute.xlu0 %2022
        %2025 = vset.pattern.permute.xlu0 2
        %2026 = vperm.xlu0 %2025, %v280
        %v2027 = vpop.permute.xlu0 %2026
        %2029 = vset.pattern.permute.xlu0 2
        %2030 = vperm.xlu0 %2029, %v281
        %v2031 = vpop.permute.xlu0 %2030
        %2033 = vset.pattern.permute.xlu0 2
        %2034 = vperm.xlu0 %2033, %v282
        %v2035 = vpop.permute.xlu0 %2034
        %2037 = vset.pattern.permute.xlu0 2
        %2038 = vperm.xlu0 %2037, %v283
        %v2039 = vpop.permute.xlu0 %2038
        %2041 = vset.pattern.permute.xlu0 2
        %2042 = vperm.xlu0 %2041, %v284
        %v2043 = vpop.permute.xlu0 %2042
        %2045 = vset.pattern.permute.xlu0 2
        %2046 = vperm.xlu0 %2045, %v285
        %v2047 = vpop.permute.xlu0 %2046
        %2049 = vset.pattern.permute.xlu0 2
        %2050 = vperm.xlu0 %2049, %v286
        %v2051 = vpop.permute.xlu0 %2050
        %2053 = vset.pattern.permute.xlu0 2
        %2054 = vperm.xlu0 %2053, %v287
        %v2055 = vpop.permute.xlu0 %2054
        %2057 = vset.pattern.permute.xlu0 2
        %2058 = vperm.xlu0 %2057, %v288
        %v2059 = vpop.permute.xlu0 %2058
        %2061 = vset.pattern.permute.xlu0 2
        %2062 = vperm.xlu0 %2061, %v289
        %v2063 = vpop.permute.xlu0 %2062
        %2065 = vset.pattern.permute.xlu0 2
        %2066 = vperm.xlu0 %2065, %v290
        %v2067 = vpop.permute.xlu0 %2066
        %2069 = vset.pattern.permute.xlu0 2
        %2070 = vperm.xlu0 %2069, %v291
        %v2071 = vpop.permute.xlu0 %2070
        %2073 = vset.pattern.permute.xlu0 2
        %2074 = vperm.xlu0 %2073, %v292
        %v2075 = vpop.permute.xlu0 %2074
        %2077 = vset.pattern.permute.xlu0 2
        %2078 = vperm.xlu0 %2077, %v293
        %v2079 = vpop.permute.xlu0 %2078
        %2081 = vset.pattern.permute.xlu0 2
        %2082 = vperm.xlu0 %2081, %v294
        %v2083 = vpop.permute.xlu0 %2082
        %2085 = vset.pattern.permute.xlu0 2
        %2086 = vperm.xlu0 %2085, %v295
        %v2087 = vpop.permute.xlu0 %2086
        %2089 = vset.pattern.permute.xlu0 2
        %2090 = vperm.xlu0 %2089, %v296
        %v2091 = vpop.permute.xlu0 %2090
        %2093 = vset.pattern.permute.xlu0 2
        %2094 = vperm.xlu0 %2093, %v297
        %v2095 = vpop.permute.xlu0 %2094
        %2097 = vset.pattern.permute.xlu0 2
        %2098 = vperm.xlu0 %2097, %v298
        %v2099 = vpop.permute.xlu0 %2098
        %2101 = vset.pattern.permute.xlu0 2
        %2102 = vperm.xlu0 %2101, %v299
        %v2103 = vpop.permute.xlu0 %2102
        %2105 = vset.pattern.permute.xlu0 2
        %2106 = vperm.xlu0 %2105, %v300
        %v2107 = vpop.permute.xlu0 %2106
        %2109 = vset.pattern.permute.xlu0 2
        %2110 = vperm.xlu0 %2109, %v301
        %v2111 = vpop.permute.xlu0 %2110
        %2113 = vset.pattern.permute.xlu0 2
        %2114 = vperm.xlu0 %2113, %v302
        %v2115 = vpop.permute.xlu0 %2114
        %2117 = vset.pattern.permute.xlu0 2
        %2118 = vperm.xlu0 %2117, %v303
        %v2119 = vpop.permute.xlu0 %2118
        %2121 = vset.pattern.permute.xlu0 2
        %2122 = vperm.xlu0 %2121, %v304
        %v2123 = vpop.permute.xlu0 %2122
        %2125 = vset.pattern.permute.xlu0 2
        %2126 = vperm.xlu0 %2125, %v305
        %v2127 = vpop.permute.xlu0 %2126
        %2129 = vset.pattern.permute.xlu0 2
        %2130 = vperm.xlu0 %2129, %v306
        %v2131 = vpop.permute.xlu0 %2130
        %2133 = vset.pattern.permute.xlu0 2
        %2134 = vperm.xlu0 %2133, %v307
        %v2135 = vpop.permute.xlu0 %2134
        %2137 = vset.pattern.permute.xlu0 2
        %2138 = vperm.xlu0 %2137, %v308
        %v2139 = vpop.permute.xlu0 %2138
        %2141 = vset.pattern.permute.xlu0 2
        %2142 = vperm.xlu0 %2141, %v309
        %v2143 = vpop.permute.xlu0 %2142
        %2145 = vset.pattern.permute.xlu0 2
        %2146 = vperm.xlu0 %2145, %v310
        %v2147 = vpop.permute.xlu0 %2146
        %2149 = vset.pattern.permute.xlu0 2
        %2150 = vperm.xlu0 %2149, %v311
        %v2151 = vpop.permute.xlu0 %2150
        %2153 = vset.pattern.permute.xlu0 2
        %2154 = vperm.xlu0 %2153, %v312
        %v2155 = vpop.permute.xlu0 %2154
        %2157 = vset.pattern.permute.xlu0 2
        %2158 = vperm.xlu0 %2157, %v313
        %v2159 = vpop.permute.xlu0 %2158
        %2161 = vset.pattern.permute.xlu0 2
        %2162 = vperm.xlu0 %2161, %v314
        %v2163 = vpop.permute.xlu0 %2162
        %2165 = vset.pattern.permute.xlu0 2
        %2166 = vperm.xlu0 %2165, %v315
        %v2167 = vpop.permute.xlu0 %2166
        %2169 = vset.pattern.permute.xlu0 2
        %2170 = vperm.xlu0 %2169, %v316
        %v2171 = vpop.permute.xlu0 %2170
        %2173 = vset.pattern.permute.xlu0 2
        %2174 = vperm.xlu0 %2173, %v317
        %v2175 = vpop.permute.xlu0 %2174
        %2177 = vset.pattern.permute.xlu0 2
        %2178 = vperm.xlu0 %2177, %v318
        %v2179 = vpop.permute.xlu0 %2178
        %2181 = vset.pattern.permute.xlu0 2
        %2182 = vperm.xlu0 %2181, %v319
        %v2183 = vpop.permute.xlu0 %2182
        %2185 = vset.pattern.permute.xlu0 2
        %2186 = vperm.xlu0 %2185, %v320
        %v2187 = vpop.permute.xlu0 %2186
        %2189 = vset.pattern.permute.xlu0 2
        %2190 = vperm.xlu0 %2189, %v321
        %v2191 = vpop.permute.xlu0 %2190
        %2193 = vset.pattern.permute.xlu0 2
        %2194 = vperm.xlu0 %2193, %v322
        %v2195 = vpop.permute.xlu0 %2194
        %2197 = vset.pattern.permute.xlu0 2
        %2198 = vperm.xlu0 %2197, %v323
        %v2199 = vpop.permute.xlu0 %2198
        %2201 = vset.pattern.permute.xlu0 2
        %2202 = vperm.xlu0 %2201, %v324
        %v2203 = vpop.permute.xlu0 %2202
        %2205 = vset.pattern.permute.xlu0 2
        %2206 = vperm.xlu0 %2205, %v325
        %v2207 = vpop.permute.xlu0 %2206
        %2209 = vset.pattern.permute.xlu0 2
        %2210 = vperm.xlu0 %2209, %v326
        %v2211 = vpop.permute.xlu0 %2210
        %2213 = vset.pattern.permute.xlu0 2
        %2214 = vperm.xlu0 %2213, %v327
        %v2215 = vpop.permute.xlu0 %2214
        %2217 = vset.pattern.permute.xlu0 2
        %2218 = vperm.xlu0 %2217, %v328
        %v2219 = vpop.permute.xlu0 %2218
        %2221 = vset.pattern.permute.xlu0 2
        %2222 = vperm.xlu0 %2221, %v329
        %v2223 = vpop.permute.xlu0 %2222
        %2225 = vset.pattern.permute.xlu0 2
        %2226 = vperm.xlu0 %2225, %v330
        %v2227 = vpop.permute.xlu0 %2226
        %2229 = vset.pattern.permute.xlu0 2
        %2230 = vperm.xlu0 %2229, %v331
        %v2231 = vpop.permute.xlu0 %2230
        %2233 = vset.pattern.permute.xlu0 2
        %2234 = vperm.xlu0 %2233, %v332
        %v2235 = vpop.permute.xlu0 %2234
        %2237 = vset.pattern.permute.xlu0 2
        %2238 = vperm.xlu0 %2237, %v333
        %v2239 = vpop.permute.xlu0 %2238
        %2241 = vset.pattern.permute.xlu0 2
        %2242 = vperm.xlu0 %2241, %v334
        %v2243 = vpop.permute.xlu0 %2242
        %2245 = vset.pattern.permute.xlu0 2
        %2246 = vperm.xlu0 %2245, %v335
        %v2247 = vpop.permute.xlu0 %2246
        %2249 = vset.pattern.permute.xlu0 2
        %2250 = vperm.xlu0 %2249, %v336
        %v2251 = vpop.permute.xlu0 %2250
        %2253 = vset.pattern.permute.xlu0 2
        %2254 = vperm.xlu0 %2253, %v337
        %v2255 = vpop.permute.xlu0 %2254
        %2257 = vset.pattern.permute.xlu0 2
        %2258 = vperm.xlu0 %2257, %v338
        %v2259 = vpop.permute.xlu0 %2258
        %2261 = vset.pattern.permute.xlu0 2
        %2262 = vperm.xlu0 %2261, %v339
        %v2263 = vpop.permute.xlu0 %2262
        %2265 = vset.pattern.permute.xlu0 2
        %2266 = vperm.xlu0 %2265, %v340
        %v2267 = vpop.permute.xlu0 %2266
        %2269 = vset.pattern.permute.xlu0 2
        %2270 = vperm.xlu0 %2269, %v341
        %v2271 = vpop.permute.xlu0 %2270
        %2273 = vset.pattern.permute.xlu0 2
        %2274 = vperm.xlu0 %2273, %v342
        %v2275 = vpop.permute.xlu0 %2274
        %2277 = vset.pattern.permute.xlu0 2
        %2278 = vperm.xlu0 %2277, %v343
        %v2279 = vpop.permute.xlu0 %2278
        %2281 = vset.pattern.permute.xlu0 2
        %2282 = vperm.xlu0 %2281, %v344
        %v2283 = vpop.permute.xlu0 %2282
        %2285 = vset.pattern.permute.xlu0 2
        %2286 = vperm.xlu0 %2285, %v345
        %v2287 = vpop.permute.xlu0 %2286
        %2289 = vset.pattern.permute.xlu0 2
        %2290 = vperm.xlu0 %2289, %v346
        %v2291 = vpop.permute.xlu0 %2290
        %2293 = vset.pattern.permute.xlu0 2
        %2294 = vperm.xlu0 %2293, %v347
        %v2295 = vpop.permute.xlu0 %2294
        %2297 = vset.pattern.permute.xlu0 2
        %2298 = vperm.xlu0 %2297, %v348
        %v2299 = vpop.permute.xlu0 %2298
        %2301 = vset.pattern.permute.xlu0 2
        %2302 = vperm.xlu0 %2301, %v349
        %v2303 = vpop.permute.xlu0 %2302
        %2305 = vset.pattern.permute.xlu0 2
        %2306 = vperm.xlu0 %2305, %v350
        %v2307 = vpop.permute.xlu0 %2306
        %2309 = vset.pattern.permute.xlu0 2
        %2310 = vperm.xlu0 %2309, %v351
        %v2311 = vpop.permute.xlu0 %2310
        %2313 = vset.pattern.permute.xlu0 2
        %2314 = vperm.xlu0 %2313, %v352
        %v2315 = vpop.permute.xlu0 %2314
        %2317 = vset.pattern.permute.xlu0 2
        %2318 = vperm.xlu0 %2317, %v353
        %v2319 = vpop.permute.xlu0 %2318
        %2321 = vset.pattern.permute.xlu0 2
        %2322 = vperm.xlu0 %2321, %v354
        %v2323 = vpop.permute.xlu0 %2322
        %2325 = vset.pattern.permute.xlu0 2
        %2326 = vperm.xlu0 %2325, %v355
        %v2327 = vpop.permute.xlu0 %2326
        %2329 = vset.pattern.permute.xlu0 2
        %2330 = vperm.xlu0 %2329, %v356
        %v2331 = vpop.permute.xlu0 %2330
        %2333 = vset.pattern.permute.xlu0 2
        %2334 = vperm.xlu0 %2333, %v357
        %v2335 = vpop.permute.xlu0 %2334
        %2337 = vset.pattern.permute.xlu0 2
        %2338 = vperm.xlu0 %2337, %v358
        %v2339 = vpop.permute.xlu0 %2338
        %2341 = vset.pattern.permute.xlu0 2
        %2342 = vperm.xlu0 %2341, %v359
        %v2343 = vpop.permute.xlu0 %2342
        %2345 = vset.pattern.permute.xlu0 2
        %2346 = vperm.xlu0 %2345, %v360
        %v2347 = vpop.permute.xlu0 %2346
        %2349 = vset.pattern.permute.xlu0 2
        %2350 = vperm.xlu0 %2349, %v361
        %v2351 = vpop.permute.xlu0 %2350
        %2353 = vset.pattern.permute.xlu0 2
        %2354 = vperm.xlu0 %2353, %v362
        %v2355 = vpop.permute.xlu0 %2354
        %2357 = vset.pattern.permute.xlu0 2
        %2358 = vperm.xlu0 %2357, %v363
        %v2359 = vpop.permute.xlu0 %2358
        %2361 = vset.pattern.permute.xlu0 2
        %2362 = vperm.xlu0 %2361, %v364
        %v2363 = vpop.permute.xlu0 %2362
        %2365 = vset.pattern.permute.xlu0 2
        %2366 = vperm.xlu0 %2365, %v365
        %v2367 = vpop.permute.xlu0 %2366
        %2369 = vset.pattern.permute.xlu0 2
        %2370 = vperm.xlu0 %2369, %v366
        %v2371 = vpop.permute.xlu0 %2370
        %2373 = vset.pattern.permute.xlu0 2
        %2374 = vperm.xlu0 %2373, %v367
        %v2375 = vpop.permute.xlu0 %2374
        %2377 = vset.pattern.permute.xlu0 2
        %2378 = vperm.xlu0 %2377, %v368
        %v2379 = vpop.permute.xlu0 %2378
        %2381 = vset.pattern.permute.xlu0 2
        %2382 = vperm.xlu0 %2381, %v369
        %v2383 = vpop.permute.xlu0 %2382
        %2385 = vset.pattern.permute.xlu0 2
        %2386 = vperm.xlu0 %2385, %v370
        %v2387 = vpop.permute.xlu0 %2386
        %2389 = vset.pattern.permute.xlu0 2
        %2390 = vperm.xlu0 %2389, %v371
        %v2391 = vpop.permute.xlu0 %2390
        %2393 = vset.pattern.permute.xlu0 2
        %2394 = vperm.xlu0 %2393, %v372
        %v2395 = vpop.permute.xlu0 %2394
        %2397 = vset.pattern.permute.xlu0 2
        %2398 = vperm.xlu0 %2397, %v373
        %v2399 = vpop.permute.xlu0 %2398
        %2401 = vset.pattern.permute.xlu0 2
        %2402 = vperm.xlu0 %2401, %v374
        %v2403 = vpop.permute.xlu0 %2402
        %2405 = vset.pattern.permute.xlu0 2
        %2406 = vperm.xlu0 %2405, %v375
        %v2407 = vpop.permute.xlu0 %2406
        %2409 = vset.pattern.permute.xlu0 2
        %2410 = vperm.xlu0 %2409, %v376
        %v2411 = vpop.permute.xlu0 %2410
        %2413 = vset.pattern.permute.xlu0 2
        %2414 = vperm.xlu0 %2413, %v377
        %v2415 = vpop.permute.xlu0 %2414
        %2417 = vset.pattern.permute.xlu0 2
        %2418 = vperm.xlu0 %2417, %v378
        %v2419 = vpop.permute.xlu0 %2418
        %2421 = vset.pattern.permute.xlu0 2
        %2422 = vperm.xlu0 %2421, %v379
        %v2423 = vpop.permute.xlu0 %2422
        %2425 = vset.pattern.permute.xlu0 2
        %2426 = vperm.xlu0 %2425, %v380
        %v2427 = vpop.permute.xlu0 %2426
        %2429 = vset.pattern.permute.xlu0 2
        %2430 = vperm.xlu0 %2429, %v381
        %v2431 = vpop.permute.xlu0 %2430
        %2433 = vset.pattern.permute.xlu0 2
        %2434 = vperm.xlu0 %2433, %v382
        %v2435 = vpop.permute.xlu0 %2434
        %2437 = vset.pattern.permute.xlu0 2
        %2438 = vperm.xlu0 %2437, %v383
        %v2439 = vpop.permute.xlu0 %2438
        %v2441 = vlaneseq
        %v2442 = vshrl.u32 %v2441, 7
        %v2443 = vsub.s32 2, %v2442
        %v2444 = vrot.slane %v384, %v2443
        %v2445 = vmul.f32 %v1931, %v2444
        %v2446 = vmul.f32 %v1935, %v2444
        %v2447 = vmul.f32 %v1939, %v2444
        %v2448 = vmul.f32 %v1943, %v2444
        %v2449 = vmul.f32 %v1947, %v2444
        %v2450 = vmul.f32 %v1951, %v2444
        %v2451 = vmul.f32 %v1955, %v2444
        %v2452 = vmul.f32 %v1959, %v2444
        %v2453 = vmul.f32 %v1963, %v2444
        %v2454 = vmul.f32 %v1967, %v2444
        %v2455 = vmul.f32 %v1971, %v2444
        %v2456 = vmul.f32 %v1975, %v2444
        %v2457 = vmul.f32 %v1979, %v2444
        %v2458 = vmul.f32 %v1983, %v2444
        %v2459 = vmul.f32 %v1987, %v2444
        %v2460 = vmul.f32 %v1991, %v2444
        %v2461 = vmul.f32 %v1995, %v2444
        %v2462 = vmul.f32 %v1999, %v2444
        %v2463 = vmul.f32 %v2003, %v2444
        %v2464 = vmul.f32 %v2007, %v2444
        %v2465 = vmul.f32 %v2011, %v2444
        %v2466 = vmul.f32 %v2015, %v2444
        %v2467 = vmul.f32 %v2019, %v2444
        %v2468 = vmul.f32 %v2023, %v2444
        %v2469 = vmul.f32 %v2027, %v2444
        %v2470 = vmul.f32 %v2031, %v2444
        %v2471 = vmul.f32 %v2035, %v2444
        %v2472 = vmul.f32 %v2039, %v2444
        %v2473 = vmul.f32 %v2043, %v2444
        %v2474 = vmul.f32 %v2047, %v2444
        %v2475 = vmul.f32 %v2051, %v2444
        %v2476 = vmul.f32 %v2055, %v2444
        %v2477 = vmul.f32 %v2059, %v2444
        %v2478 = vmul.f32 %v2063, %v2444
        %v2479 = vmul.f32 %v2067, %v2444
        %v2480 = vmul.f32 %v2071, %v2444
        %v2481 = vmul.f32 %v2075, %v2444
        %v2482 = vmul.f32 %v2079, %v2444
        %v2483 = vmul.f32 %v2083, %v2444
        %v2484 = vmul.f32 %v2087, %v2444
        %v2485 = vmul.f32 %v2091, %v2444
        %v2486 = vmul.f32 %v2095, %v2444
        %v2487 = vmul.f32 %v2099, %v2444
        %v2488 = vmul.f32 %v2103, %v2444
        %v2489 = vmul.f32 %v2107, %v2444
        %v2490 = vmul.f32 %v2111, %v2444
        %v2491 = vmul.f32 %v2115, %v2444
        %v2492 = vmul.f32 %v2119, %v2444
        %v2493 = vmul.f32 %v2123, %v2444
        %v2494 = vmul.f32 %v2127, %v2444
        %v2495 = vmul.f32 %v2131, %v2444
        %v2496 = vmul.f32 %v2135, %v2444
        %v2497 = vmul.f32 %v2139, %v2444
        %v2498 = vmul.f32 %v2143, %v2444
        %v2499 = vmul.f32 %v2147, %v2444
        %v2500 = vmul.f32 %v2151, %v2444
        %v2501 = vmul.f32 %v2155, %v2444
        %v2502 = vmul.f32 %v2159, %v2444
        %v2503 = vmul.f32 %v2163, %v2444
        %v2504 = vmul.f32 %v2167, %v2444
        %v2505 = vmul.f32 %v2171, %v2444
        %v2506 = vmul.f32 %v2175, %v2444
        %v2507 = vmul.f32 %v2179, %v2444
        %v2508 = vmul.f32 %v2183, %v2444
        %v2509 = vmul.f32 %v2187, %v2444
        %v2510 = vmul.f32 %v2191, %v2444
        %v2511 = vmul.f32 %v2195, %v2444
        %v2512 = vmul.f32 %v2199, %v2444
        %v2513 = vmul.f32 %v2203, %v2444
        %v2514 = vmul.f32 %v2207, %v2444
        %v2515 = vmul.f32 %v2211, %v2444
        %v2516 = vmul.f32 %v2215, %v2444
        %v2517 = vmul.f32 %v2219, %v2444
        %v2518 = vmul.f32 %v2223, %v2444
        %v2519 = vmul.f32 %v2227, %v2444
        %v2520 = vmul.f32 %v2231, %v2444
        %v2521 = vmul.f32 %v2235, %v2444
        %v2522 = vmul.f32 %v2239, %v2444
        %v2523 = vmul.f32 %v2243, %v2444
        %v2524 = vmul.f32 %v2247, %v2444
        %v2525 = vmul.f32 %v2251, %v2444
        %v2526 = vmul.f32 %v2255, %v2444
        %v2527 = vmul.f32 %v2259, %v2444
        %v2528 = vmul.f32 %v2263, %v2444
        %v2529 = vmul.f32 %v2267, %v2444
        %v2530 = vmul.f32 %v2271, %v2444
        %v2531 = vmul.f32 %v2275, %v2444
        %v2532 = vmul.f32 %v2279, %v2444
        %v2533 = vmul.f32 %v2283, %v2444
        %v2534 = vmul.f32 %v2287, %v2444
        %v2535 = vmul.f32 %v2291, %v2444
        %v2536 = vmul.f32 %v2295, %v2444
        %v2537 = vmul.f32 %v2299, %v2444
        %v2538 = vmul.f32 %v2303, %v2444
        %v2539 = vmul.f32 %v2307, %v2444
        %v2540 = vmul.f32 %v2311, %v2444
        %v2541 = vmul.f32 %v2315, %v2444
        %v2542 = vmul.f32 %v2319, %v2444
        %v2543 = vmul.f32 %v2323, %v2444
        %v2544 = vmul.f32 %v2327, %v2444
        %v2545 = vmul.f32 %v2331, %v2444
        %v2546 = vmul.f32 %v2335, %v2444
        %v2547 = vmul.f32 %v2339, %v2444
        %v2548 = vmul.f32 %v2343, %v2444
        %v2549 = vmul.f32 %v2347, %v2444
        %v2550 = vmul.f32 %v2351, %v2444
        %v2551 = vmul.f32 %v2355, %v2444
        %v2552 = vmul.f32 %v2359, %v2444
        %v2553 = vmul.f32 %v2363, %v2444
        %v2554 = vmul.f32 %v2367, %v2444
        %v2555 = vmul.f32 %v2371, %v2444
        %v2556 = vmul.f32 %v2375, %v2444
        %v2557 = vmul.f32 %v2379, %v2444
        %v2558 = vmul.f32 %v2383, %v2444
        %v2559 = vmul.f32 %v2387, %v2444
        %v2560 = vmul.f32 %v2391, %v2444
        %v2561 = vmul.f32 %v2395, %v2444
        %v2562 = vmul.f32 %v2399, %v2444
        %v2563 = vmul.f32 %v2403, %v2444
        %v2564 = vmul.f32 %v2407, %v2444
        %v2565 = vmul.f32 %v2411, %v2444
        %v2566 = vmul.f32 %v2415, %v2444
        %v2567 = vmul.f32 %v2419, %v2444
        %v2568 = vmul.f32 %v2423, %v2444
        %v2569 = vmul.f32 %v2427, %v2444
        %v2570 = vmul.f32 %v2431, %v2444
        %v2571 = vmul.f32 %v2435, %v2444
        %v2572 = vmul.f32 %v2439, %v2444
        %v2573 = vadd.f32 %v1801, %v2445
        %v2574 = vadd.f32 %v1802, %v2446
        %v2575 = vadd.f32 %v1803, %v2447
        %v2576 = vadd.f32 %v1804, %v2448
        %v2577 = vadd.f32 %v1805, %v2449
        %v2578 = vadd.f32 %v1806, %v2450
        %v2579 = vadd.f32 %v1807, %v2451
        %v2580 = vadd.f32 %v1808, %v2452
        %v2581 = vadd.f32 %v1809, %v2453
        %v2582 = vadd.f32 %v1810, %v2454
        %v2583 = vadd.f32 %v1811, %v2455
        %v2584 = vadd.f32 %v1812, %v2456
        %v2585 = vadd.f32 %v1813, %v2457
        %v2586 = vadd.f32 %v1814, %v2458
        %v2587 = vadd.f32 %v1815, %v2459
        %v2588 = vadd.f32 %v1816, %v2460
        %v2589 = vadd.f32 %v1817, %v2461
        %v2590 = vadd.f32 %v1818, %v2462
        %v2591 = vadd.f32 %v1819, %v2463
        %v2592 = vadd.f32 %v1820, %v2464
        %v2593 = vadd.f32 %v1821, %v2465
        %v2594 = vadd.f32 %v1822, %v2466
        %v2595 = vadd.f32 %v1823, %v2467
        %v2596 = vadd.f32 %v1824, %v2468
        %v2597 = vadd.f32 %v1825, %v2469
        %v2598 = vadd.f32 %v1826, %v2470
        %v2599 = vadd.f32 %v1827, %v2471
        %v2600 = vadd.f32 %v1828, %v2472
        %v2601 = vadd.f32 %v1829, %v2473
        %v2602 = vadd.f32 %v1830, %v2474
        %v2603 = vadd.f32 %v1831, %v2475
        %v2604 = vadd.f32 %v1832, %v2476
        %v2605 = vadd.f32 %v1833, %v2477
        %v2606 = vadd.f32 %v1834, %v2478
        %v2607 = vadd.f32 %v1835, %v2479
        %v2608 = vadd.f32 %v1836, %v2480
        %v2609 = vadd.f32 %v1837, %v2481
        %v2610 = vadd.f32 %v1838, %v2482
        %v2611 = vadd.f32 %v1839, %v2483
        %v2612 = vadd.f32 %v1840, %v2484
        %v2613 = vadd.f32 %v1841, %v2485
        %v2614 = vadd.f32 %v1842, %v2486
        %v2615 = vadd.f32 %v1843, %v2487
        %v2616 = vadd.f32 %v1844, %v2488
        %v2617 = vadd.f32 %v1845, %v2489
        %v2618 = vadd.f32 %v1846, %v2490
        %v2619 = vadd.f32 %v1847, %v2491
        %v2620 = vadd.f32 %v1848, %v2492
        %v2621 = vadd.f32 %v1849, %v2493
        %v2622 = vadd.f32 %v1850, %v2494
        %v2623 = vadd.f32 %v1851, %v2495
        %v2624 = vadd.f32 %v1852, %v2496
        %v2625 = vadd.f32 %v1853, %v2497
        %v2626 = vadd.f32 %v1854, %v2498
        %v2627 = vadd.f32 %v1855, %v2499
        %v2628 = vadd.f32 %v1856, %v2500
        %v2629 = vadd.f32 %v1857, %v2501
        %v2630 = vadd.f32 %v1858, %v2502
        %v2631 = vadd.f32 %v1859, %v2503
        %v2632 = vadd.f32 %v1860, %v2504
        %v2633 = vadd.f32 %v1861, %v2505
        %v2634 = vadd.f32 %v1862, %v2506
        %v2635 = vadd.f32 %v1863, %v2507
        %v2636 = vadd.f32 %v1864, %v2508
        %v2637 = vadd.f32 %v1865, %v2509
        %v2638 = vadd.f32 %v1866, %v2510
        %v2639 = vadd.f32 %v1867, %v2511
        %v2640 = vadd.f32 %v1868, %v2512
        %v2641 = vadd.f32 %v1869, %v2513
        %v2642 = vadd.f32 %v1870, %v2514
        %v2643 = vadd.f32 %v1871, %v2515
        %v2644 = vadd.f32 %v1872, %v2516
        %v2645 = vadd.f32 %v1873, %v2517
        %v2646 = vadd.f32 %v1874, %v2518
        %v2647 = vadd.f32 %v1875, %v2519
        %v2648 = vadd.f32 %v1876, %v2520
        %v2649 = vadd.f32 %v1877, %v2521
        %v2650 = vadd.f32 %v1878, %v2522
        %v2651 = vadd.f32 %v1879, %v2523
        %v2652 = vadd.f32 %v1880, %v2524
        %v2653 = vadd.f32 %v1881, %v2525
        %v2654 = vadd.f32 %v1882, %v2526
        %v2655 = vadd.f32 %v1883, %v2527
        %v2656 = vadd.f32 %v1884, %v2528
        %v2657 = vadd.f32 %v1885, %v2529
        %v2658 = vadd.f32 %v1886, %v2530
        %v2659 = vadd.f32 %v1887, %v2531
        %v2660 = vadd.f32 %v1888, %v2532
        %v2661 = vadd.f32 %v1889, %v2533
        %v2662 = vadd.f32 %v1890, %v2534
        %v2663 = vadd.f32 %v1891, %v2535
        %v2664 = vadd.f32 %v1892, %v2536
        %v2665 = vadd.f32 %v1893, %v2537
        %v2666 = vadd.f32 %v1894, %v2538
        %v2667 = vadd.f32 %v1895, %v2539
        %v2668 = vadd.f32 %v1896, %v2540
        %v2669 = vadd.f32 %v1897, %v2541
        %v2670 = vadd.f32 %v1898, %v2542
        %v2671 = vadd.f32 %v1899, %v2543
        %v2672 = vadd.f32 %v1900, %v2544
        %v2673 = vadd.f32 %v1901, %v2545
        %v2674 = vadd.f32 %v1902, %v2546
        %v2675 = vadd.f32 %v1903, %v2547
        %v2676 = vadd.f32 %v1904, %v2548
        %v2677 = vadd.f32 %v1905, %v2549
        %v2678 = vadd.f32 %v1906, %v2550
        %v2679 = vadd.f32 %v1907, %v2551
        %v2680 = vadd.f32 %v1908, %v2552
        %v2681 = vadd.f32 %v1909, %v2553
        %v2682 = vadd.f32 %v1910, %v2554
        %v2683 = vadd.f32 %v1911, %v2555
        %v2684 = vadd.f32 %v1912, %v2556
        %v2685 = vadd.f32 %v1913, %v2557
        %v2686 = vadd.f32 %v1914, %v2558
        %v2687 = vadd.f32 %v1915, %v2559
        %v2688 = vadd.f32 %v1916, %v2560
        %v2689 = vadd.f32 %v1917, %v2561
        %v2690 = vadd.f32 %v1918, %v2562
        %v2691 = vadd.f32 %v1919, %v2563
        %v2692 = vadd.f32 %v1920, %v2564
        %v2693 = vadd.f32 %v1921, %v2565
        %v2694 = vadd.f32 %v1922, %v2566
        %v2695 = vadd.f32 %v1923, %v2567
        %v2696 = vadd.f32 %v1924, %v2568
        %v2697 = vadd.f32 %v1925, %v2569
        %v2698 = vadd.f32 %v1926, %v2570
        %v2699 = vadd.f32 %v1927, %v2571
        %v2700 = vadd.f32 %v1928, %v2572
        %2701 = vset.pattern.permute.xlu0 3
        %2702 = vperm.xlu0 %2701, %v256
        %v2703 = vpop.permute.xlu0 %2702
        %2705 = vset.pattern.permute.xlu0 3
        %2706 = vperm.xlu0 %2705, %v257
        %v2707 = vpop.permute.xlu0 %2706
        %2709 = vset.pattern.permute.xlu0 3
        %2710 = vperm.xlu0 %2709, %v258
        %v2711 = vpop.permute.xlu0 %2710
        %2713 = vset.pattern.permute.xlu0 3
        %2714 = vperm.xlu0 %2713, %v259
        %v2715 = vpop.permute.xlu0 %2714
        %2717 = vset.pattern.permute.xlu0 3
        %2718 = vperm.xlu0 %2717, %v260
        %v2719 = vpop.permute.xlu0 %2718
        %2721 = vset.pattern.permute.xlu0 3
        %2722 = vperm.xlu0 %2721, %v261
        %v2723 = vpop.permute.xlu0 %2722
        %2725 = vset.pattern.permute.xlu0 3
        %2726 = vperm.xlu0 %2725, %v262
        %v2727 = vpop.permute.xlu0 %2726
        %2729 = vset.pattern.permute.xlu0 3
        %2730 = vperm.xlu0 %2729, %v263
        %v2731 = vpop.permute.xlu0 %2730
        %2733 = vset.pattern.permute.xlu0 3
        %2734 = vperm.xlu0 %2733, %v264
        %v2735 = vpop.permute.xlu0 %2734
        %2737 = vset.pattern.permute.xlu0 3
        %2738 = vperm.xlu0 %2737, %v265
        %v2739 = vpop.permute.xlu0 %2738
        %2741 = vset.pattern.permute.xlu0 3
        %2742 = vperm.xlu0 %2741, %v266
        %v2743 = vpop.permute.xlu0 %2742
        %2745 = vset.pattern.permute.xlu0 3
        %2746 = vperm.xlu0 %2745, %v267
        %v2747 = vpop.permute.xlu0 %2746
        %2749 = vset.pattern.permute.xlu0 3
        %2750 = vperm.xlu0 %2749, %v268
        %v2751 = vpop.permute.xlu0 %2750
        %2753 = vset.pattern.permute.xlu0 3
        %2754 = vperm.xlu0 %2753, %v269
        %v2755 = vpop.permute.xlu0 %2754
        %2757 = vset.pattern.permute.xlu0 3
        %2758 = vperm.xlu0 %2757, %v270
        %v2759 = vpop.permute.xlu0 %2758
        %2761 = vset.pattern.permute.xlu0 3
        %2762 = vperm.xlu0 %2761, %v271
        %v2763 = vpop.permute.xlu0 %2762
        %2765 = vset.pattern.permute.xlu0 3
        %2766 = vperm.xlu0 %2765, %v272
        %v2767 = vpop.permute.xlu0 %2766
        %2769 = vset.pattern.permute.xlu0 3
        %2770 = vperm.xlu0 %2769, %v273
        %v2771 = vpop.permute.xlu0 %2770
        %2773 = vset.pattern.permute.xlu0 3
        %2774 = vperm.xlu0 %2773, %v274
        %v2775 = vpop.permute.xlu0 %2774
        %2777 = vset.pattern.permute.xlu0 3
        %2778 = vperm.xlu0 %2777, %v275
        %v2779 = vpop.permute.xlu0 %2778
        %2781 = vset.pattern.permute.xlu0 3
        %2782 = vperm.xlu0 %2781, %v276
        %v2783 = vpop.permute.xlu0 %2782
        %2785 = vset.pattern.permute.xlu0 3
        %2786 = vperm.xlu0 %2785, %v277
        %v2787 = vpop.permute.xlu0 %2786
        %2789 = vset.pattern.permute.xlu0 3
        %2790 = vperm.xlu0 %2789, %v278
        %v2791 = vpop.permute.xlu0 %2790
        %2793 = vset.pattern.permute.xlu0 3
        %2794 = vperm.xlu0 %2793, %v279
        %v2795 = vpop.permute.xlu0 %2794
        %2797 = vset.pattern.permute.xlu0 3
        %2798 = vperm.xlu0 %2797, %v280
        %v2799 = vpop.permute.xlu0 %2798
        %2801 = vset.pattern.permute.xlu0 3
        %2802 = vperm.xlu0 %2801, %v281
        %v2803 = vpop.permute.xlu0 %2802
        %2805 = vset.pattern.permute.xlu0 3
        %2806 = vperm.xlu0 %2805, %v282
        %v2807 = vpop.permute.xlu0 %2806
        %2809 = vset.pattern.permute.xlu0 3
        %2810 = vperm.xlu0 %2809, %v283
        %v2811 = vpop.permute.xlu0 %2810
        %2813 = vset.pattern.permute.xlu0 3
        %2814 = vperm.xlu0 %2813, %v284
        %v2815 = vpop.permute.xlu0 %2814
        %2817 = vset.pattern.permute.xlu0 3
        %2818 = vperm.xlu0 %2817, %v285
        %v2819 = vpop.permute.xlu0 %2818
        %2821 = vset.pattern.permute.xlu0 3
        %2822 = vperm.xlu0 %2821, %v286
        %v2823 = vpop.permute.xlu0 %2822
        %2825 = vset.pattern.permute.xlu0 3
        %2826 = vperm.xlu0 %2825, %v287
        %v2827 = vpop.permute.xlu0 %2826
        %2829 = vset.pattern.permute.xlu0 3
        %2830 = vperm.xlu0 %2829, %v288
        %v2831 = vpop.permute.xlu0 %2830
        %2833 = vset.pattern.permute.xlu0 3
        %2834 = vperm.xlu0 %2833, %v289
        %v2835 = vpop.permute.xlu0 %2834
        %2837 = vset.pattern.permute.xlu0 3
        %2838 = vperm.xlu0 %2837, %v290
        %v2839 = vpop.permute.xlu0 %2838
        %2841 = vset.pattern.permute.xlu0 3
        %2842 = vperm.xlu0 %2841, %v291
        %v2843 = vpop.permute.xlu0 %2842
        %2845 = vset.pattern.permute.xlu0 3
        %2846 = vperm.xlu0 %2845, %v292
        %v2847 = vpop.permute.xlu0 %2846
        %2849 = vset.pattern.permute.xlu0 3
        %2850 = vperm.xlu0 %2849, %v293
        %v2851 = vpop.permute.xlu0 %2850
        %2853 = vset.pattern.permute.xlu0 3
        %2854 = vperm.xlu0 %2853, %v294
        %v2855 = vpop.permute.xlu0 %2854
        %2857 = vset.pattern.permute.xlu0 3
        %2858 = vperm.xlu0 %2857, %v295
        %v2859 = vpop.permute.xlu0 %2858
        %2861 = vset.pattern.permute.xlu0 3
        %2862 = vperm.xlu0 %2861, %v296
        %v2863 = vpop.permute.xlu0 %2862
        %2865 = vset.pattern.permute.xlu0 3
        %2866 = vperm.xlu0 %2865, %v297
        %v2867 = vpop.permute.xlu0 %2866
        %2869 = vset.pattern.permute.xlu0 3
        %2870 = vperm.xlu0 %2869, %v298
        %v2871 = vpop.permute.xlu0 %2870
        %2873 = vset.pattern.permute.xlu0 3
        %2874 = vperm.xlu0 %2873, %v299
        %v2875 = vpop.permute.xlu0 %2874
        %2877 = vset.pattern.permute.xlu0 3
        %2878 = vperm.xlu0 %2877, %v300
        %v2879 = vpop.permute.xlu0 %2878
        %2881 = vset.pattern.permute.xlu0 3
        %2882 = vperm.xlu0 %2881, %v301
        %v2883 = vpop.permute.xlu0 %2882
        %2885 = vset.pattern.permute.xlu0 3
        %2886 = vperm.xlu0 %2885, %v302
        %v2887 = vpop.permute.xlu0 %2886
        %2889 = vset.pattern.permute.xlu0 3
        %2890 = vperm.xlu0 %2889, %v303
        %v2891 = vpop.permute.xlu0 %2890
        %2893 = vset.pattern.permute.xlu0 3
        %2894 = vperm.xlu0 %2893, %v304
        %v2895 = vpop.permute.xlu0 %2894
        %2897 = vset.pattern.permute.xlu0 3
        %2898 = vperm.xlu0 %2897, %v305
        %v2899 = vpop.permute.xlu0 %2898
        %2901 = vset.pattern.permute.xlu0 3
        %2902 = vperm.xlu0 %2901, %v306
        %v2903 = vpop.permute.xlu0 %2902
        %2905 = vset.pattern.permute.xlu0 3
        %2906 = vperm.xlu0 %2905, %v307
        %v2907 = vpop.permute.xlu0 %2906
        %2909 = vset.pattern.permute.xlu0 3
        %2910 = vperm.xlu0 %2909, %v308
        %v2911 = vpop.permute.xlu0 %2910
        %2913 = vset.pattern.permute.xlu0 3
        %2914 = vperm.xlu0 %2913, %v309
        %v2915 = vpop.permute.xlu0 %2914
        %2917 = vset.pattern.permute.xlu0 3
        %2918 = vperm.xlu0 %2917, %v310
        %v2919 = vpop.permute.xlu0 %2918
        %2921 = vset.pattern.permute.xlu0 3
        %2922 = vperm.xlu0 %2921, %v311
        %v2923 = vpop.permute.xlu0 %2922
        %2925 = vset.pattern.permute.xlu0 3
        %2926 = vperm.xlu0 %2925, %v312
        %v2927 = vpop.permute.xlu0 %2926
        %2929 = vset.pattern.permute.xlu0 3
        %2930 = vperm.xlu0 %2929, %v313
        %v2931 = vpop.permute.xlu0 %2930
        %2933 = vset.pattern.permute.xlu0 3
        %2934 = vperm.xlu0 %2933, %v314
        %v2935 = vpop.permute.xlu0 %2934
        %2937 = vset.pattern.permute.xlu0 3
        %2938 = vperm.xlu0 %2937, %v315
        %v2939 = vpop.permute.xlu0 %2938
        %2941 = vset.pattern.permute.xlu0 3
        %2942 = vperm.xlu0 %2941, %v316
        %v2943 = vpop.permute.xlu0 %2942
        %2945 = vset.pattern.permute.xlu0 3
        %2946 = vperm.xlu0 %2945, %v317
        %v2947 = vpop.permute.xlu0 %2946
        %2949 = vset.pattern.permute.xlu0 3
        %2950 = vperm.xlu0 %2949, %v318
        %v2951 = vpop.permute.xlu0 %2950
        %2953 = vset.pattern.permute.xlu0 3
        %2954 = vperm.xlu0 %2953, %v319
        %v2955 = vpop.permute.xlu0 %2954
        %2957 = vset.pattern.permute.xlu0 3
        %2958 = vperm.xlu0 %2957, %v320
        %v2959 = vpop.permute.xlu0 %2958
        %2961 = vset.pattern.permute.xlu0 3
        %2962 = vperm.xlu0 %2961, %v321
        %v2963 = vpop.permute.xlu0 %2962
        %2965 = vset.pattern.permute.xlu0 3
        %2966 = vperm.xlu0 %2965, %v322
        %v2967 = vpop.permute.xlu0 %2966
        %2969 = vset.pattern.permute.xlu0 3
        %2970 = vperm.xlu0 %2969, %v323
        %v2971 = vpop.permute.xlu0 %2970
        %2973 = vset.pattern.permute.xlu0 3
        %2974 = vperm.xlu0 %2973, %v324
        %v2975 = vpop.permute.xlu0 %2974
        %2977 = vset.pattern.permute.xlu0 3
        %2978 = vperm.xlu0 %2977, %v325
        %v2979 = vpop.permute.xlu0 %2978
        %2981 = vset.pattern.permute.xlu0 3
        %2982 = vperm.xlu0 %2981, %v326
        %v2983 = vpop.permute.xlu0 %2982
        %2985 = vset.pattern.permute.xlu0 3
        %2986 = vperm.xlu0 %2985, %v327
        %v2987 = vpop.permute.xlu0 %2986
        %2989 = vset.pattern.permute.xlu0 3
        %2990 = vperm.xlu0 %2989, %v328
        %v2991 = vpop.permute.xlu0 %2990
        %2993 = vset.pattern.permute.xlu0 3
        %2994 = vperm.xlu0 %2993, %v329
        %v2995 = vpop.permute.xlu0 %2994
        %2997 = vset.pattern.permute.xlu0 3
        %2998 = vperm.xlu0 %2997, %v330
        %v2999 = vpop.permute.xlu0 %2998
        %3001 = vset.pattern.permute.xlu0 3
        %3002 = vperm.xlu0 %3001, %v331
        %v3003 = vpop.permute.xlu0 %3002
        %3005 = vset.pattern.permute.xlu0 3
        %3006 = vperm.xlu0 %3005, %v332
        %v3007 = vpop.permute.xlu0 %3006
        %3009 = vset.pattern.permute.xlu0 3
        %3010 = vperm.xlu0 %3009, %v333
        %v3011 = vpop.permute.xlu0 %3010
        %3013 = vset.pattern.permute.xlu0 3
        %3014 = vperm.xlu0 %3013, %v334
        %v3015 = vpop.permute.xlu0 %3014
        %3017 = vset.pattern.permute.xlu0 3
        %3018 = vperm.xlu0 %3017, %v335
        %v3019 = vpop.permute.xlu0 %3018
        %3021 = vset.pattern.permute.xlu0 3
        %3022 = vperm.xlu0 %3021, %v336
        %v3023 = vpop.permute.xlu0 %3022
        %3025 = vset.pattern.permute.xlu0 3
        %3026 = vperm.xlu0 %3025, %v337
        %v3027 = vpop.permute.xlu0 %3026
        %3029 = vset.pattern.permute.xlu0 3
        %3030 = vperm.xlu0 %3029, %v338
        %v3031 = vpop.permute.xlu0 %3030
        %3033 = vset.pattern.permute.xlu0 3
        %3034 = vperm.xlu0 %3033, %v339
        %v3035 = vpop.permute.xlu0 %3034
        %3037 = vset.pattern.permute.xlu0 3
        %3038 = vperm.xlu0 %3037, %v340
        %v3039 = vpop.permute.xlu0 %3038
        %3041 = vset.pattern.permute.xlu0 3
        %3042 = vperm.xlu0 %3041, %v341
        %v3043 = vpop.permute.xlu0 %3042
        %3045 = vset.pattern.permute.xlu0 3
        %3046 = vperm.xlu0 %3045, %v342
        %v3047 = vpop.permute.xlu0 %3046
        %3049 = vset.pattern.permute.xlu0 3
        %3050 = vperm.xlu0 %3049, %v343
        %v3051 = vpop.permute.xlu0 %3050
        %3053 = vset.pattern.permute.xlu0 3
        %3054 = vperm.xlu0 %3053, %v344
        %v3055 = vpop.permute.xlu0 %3054
        %3057 = vset.pattern.permute.xlu0 3
        %3058 = vperm.xlu0 %3057, %v345
        %v3059 = vpop.permute.xlu0 %3058
        %3061 = vset.pattern.permute.xlu0 3
        %3062 = vperm.xlu0 %3061, %v346
        %v3063 = vpop.permute.xlu0 %3062
        %3065 = vset.pattern.permute.xlu0 3
        %3066 = vperm.xlu0 %3065, %v347
        %v3067 = vpop.permute.xlu0 %3066
        %3069 = vset.pattern.permute.xlu0 3
        %3070 = vperm.xlu0 %3069, %v348
        %v3071 = vpop.permute.xlu0 %3070
        %3073 = vset.pattern.permute.xlu0 3
        %3074 = vperm.xlu0 %3073, %v349
        %v3075 = vpop.permute.xlu0 %3074
        %3077 = vset.pattern.permute.xlu0 3
        %3078 = vperm.xlu0 %3077, %v350
        %v3079 = vpop.permute.xlu0 %3078
        %3081 = vset.pattern.permute.xlu0 3
        %3082 = vperm.xlu0 %3081, %v351
        %v3083 = vpop.permute.xlu0 %3082
        %3085 = vset.pattern.permute.xlu0 3
        %3086 = vperm.xlu0 %3085, %v352
        %v3087 = vpop.permute.xlu0 %3086
        %3089 = vset.pattern.permute.xlu0 3
        %3090 = vperm.xlu0 %3089, %v353
        %v3091 = vpop.permute.xlu0 %3090
        %3093 = vset.pattern.permute.xlu0 3
        %3094 = vperm.xlu0 %3093, %v354
        %v3095 = vpop.permute.xlu0 %3094
        %3097 = vset.pattern.permute.xlu0 3
        %3098 = vperm.xlu0 %3097, %v355
        %v3099 = vpop.permute.xlu0 %3098
        %3101 = vset.pattern.permute.xlu0 3
        %3102 = vperm.xlu0 %3101, %v356
        %v3103 = vpop.permute.xlu0 %3102
        %3105 = vset.pattern.permute.xlu0 3
        %3106 = vperm.xlu0 %3105, %v357
        %v3107 = vpop.permute.xlu0 %3106
        %3109 = vset.pattern.permute.xlu0 3
        %3110 = vperm.xlu0 %3109, %v358
        %v3111 = vpop.permute.xlu0 %3110
        %3113 = vset.pattern.permute.xlu0 3
        %3114 = vperm.xlu0 %3113, %v359
        %v3115 = vpop.permute.xlu0 %3114
        %3117 = vset.pattern.permute.xlu0 3
        %3118 = vperm.xlu0 %3117, %v360
        %v3119 = vpop.permute.xlu0 %3118
        %3121 = vset.pattern.permute.xlu0 3
        %3122 = vperm.xlu0 %3121, %v361
        %v3123 = vpop.permute.xlu0 %3122
        %3125 = vset.pattern.permute.xlu0 3
        %3126 = vperm.xlu0 %3125, %v362
        %v3127 = vpop.permute.xlu0 %3126
        %3129 = vset.pattern.permute.xlu0 3
        %3130 = vperm.xlu0 %3129, %v363
        %v3131 = vpop.permute.xlu0 %3130
        %3133 = vset.pattern.permute.xlu0 3
        %3134 = vperm.xlu0 %3133, %v364
        %v3135 = vpop.permute.xlu0 %3134
        %3137 = vset.pattern.permute.xlu0 3
        %3138 = vperm.xlu0 %3137, %v365
        %v3139 = vpop.permute.xlu0 %3138
        %3141 = vset.pattern.permute.xlu0 3
        %3142 = vperm.xlu0 %3141, %v366
        %v3143 = vpop.permute.xlu0 %3142
        %3145 = vset.pattern.permute.xlu0 3
        %3146 = vperm.xlu0 %3145, %v367
        %v3147 = vpop.permute.xlu0 %3146
        %3149 = vset.pattern.permute.xlu0 3
        %3150 = vperm.xlu0 %3149, %v368
        %v3151 = vpop.permute.xlu0 %3150
        %3153 = vset.pattern.permute.xlu0 3
        %3154 = vperm.xlu0 %3153, %v369
        %v3155 = vpop.permute.xlu0 %3154
        %3157 = vset.pattern.permute.xlu0 3
        %3158 = vperm.xlu0 %3157, %v370
        %v3159 = vpop.permute.xlu0 %3158
        %3161 = vset.pattern.permute.xlu0 3
        %3162 = vperm.xlu0 %3161, %v371
        %v3163 = vpop.permute.xlu0 %3162
        %3165 = vset.pattern.permute.xlu0 3
        %3166 = vperm.xlu0 %3165, %v372
        %v3167 = vpop.permute.xlu0 %3166
        %3169 = vset.pattern.permute.xlu0 3
        %3170 = vperm.xlu0 %3169, %v373
        %v3171 = vpop.permute.xlu0 %3170
        %3173 = vset.pattern.permute.xlu0 3
        %3174 = vperm.xlu0 %3173, %v374
        %v3175 = vpop.permute.xlu0 %3174
        %3177 = vset.pattern.permute.xlu0 3
        %3178 = vperm.xlu0 %3177, %v375
        %v3179 = vpop.permute.xlu0 %3178
        %3181 = vset.pattern.permute.xlu0 3
        %3182 = vperm.xlu0 %3181, %v376
        %v3183 = vpop.permute.xlu0 %3182
        %3185 = vset.pattern.permute.xlu0 3
        %3186 = vperm.xlu0 %3185, %v377
        %v3187 = vpop.permute.xlu0 %3186
        %3189 = vset.pattern.permute.xlu0 3
        %3190 = vperm.xlu0 %3189, %v378
        %v3191 = vpop.permute.xlu0 %3190
        %3193 = vset.pattern.permute.xlu0 3
        %3194 = vperm.xlu0 %3193, %v379
        %v3195 = vpop.permute.xlu0 %3194
        %3197 = vset.pattern.permute.xlu0 3
        %3198 = vperm.xlu0 %3197, %v380
        %v3199 = vpop.permute.xlu0 %3198
        %3201 = vset.pattern.permute.xlu0 3
        %3202 = vperm.xlu0 %3201, %v381
        %v3203 = vpop.permute.xlu0 %3202
        %3205 = vset.pattern.permute.xlu0 3
        %3206 = vperm.xlu0 %3205, %v382
        %v3207 = vpop.permute.xlu0 %3206
        %3209 = vset.pattern.permute.xlu0 3
        %3210 = vperm.xlu0 %3209, %v383
        %v3211 = vpop.permute.xlu0 %3210
        %v3213 = vlaneseq
        %v3214 = vshrl.u32 %v3213, 7
        %v3215 = vsub.s32 3, %v3214
        %v3216 = vrot.slane %v384, %v3215
        %v3217 = vmul.f32 %v2703, %v3216
        %v3218 = vmul.f32 %v2707, %v3216
        %v3219 = vmul.f32 %v2711, %v3216
        %v3220 = vmul.f32 %v2715, %v3216
        %v3221 = vmul.f32 %v2719, %v3216
        %v3222 = vmul.f32 %v2723, %v3216
        %v3223 = vmul.f32 %v2727, %v3216
        %v3224 = vmul.f32 %v2731, %v3216
        %v3225 = vmul.f32 %v2735, %v3216
        %v3226 = vmul.f32 %v2739, %v3216
        %v3227 = vmul.f32 %v2743, %v3216
        %v3228 = vmul.f32 %v2747, %v3216
        %v3229 = vmul.f32 %v2751, %v3216
        %v3230 = vmul.f32 %v2755, %v3216
        %v3231 = vmul.f32 %v2759, %v3216
        %v3232 = vmul.f32 %v2763, %v3216
        %v3233 = vmul.f32 %v2767, %v3216
        %v3234 = vmul.f32 %v2771, %v3216
        %v3235 = vmul.f32 %v2775, %v3216
        %v3236 = vmul.f32 %v2779, %v3216
        %v3237 = vmul.f32 %v2783, %v3216
        %v3238 = vmul.f32 %v2787, %v3216
        %v3239 = vmul.f32 %v2791, %v3216
        %v3240 = vmul.f32 %v2795, %v3216
        %v3241 = vmul.f32 %v2799, %v3216
        %v3242 = vmul.f32 %v2803, %v3216
        %v3243 = vmul.f32 %v2807, %v3216
        %v3244 = vmul.f32 %v2811, %v3216
        %v3245 = vmul.f32 %v2815, %v3216
        %v3246 = vmul.f32 %v2819, %v3216
        %v3247 = vmul.f32 %v2823, %v3216
        %v3248 = vmul.f32 %v2827, %v3216
        %v3249 = vmul.f32 %v2831, %v3216
        %v3250 = vmul.f32 %v2835, %v3216
        %v3251 = vmul.f32 %v2839, %v3216
        %v3252 = vmul.f32 %v2843, %v3216
        %v3253 = vmul.f32 %v2847, %v3216
        %v3254 = vmul.f32 %v2851, %v3216
        %v3255 = vmul.f32 %v2855, %v3216
        %v3256 = vmul.f32 %v2859, %v3216
        %v3257 = vmul.f32 %v2863, %v3216
        %v3258 = vmul.f32 %v2867, %v3216
        %v3259 = vmul.f32 %v2871, %v3216
        %v3260 = vmul.f32 %v2875, %v3216
        %v3261 = vmul.f32 %v2879, %v3216
        %v3262 = vmul.f32 %v2883, %v3216
        %v3263 = vmul.f32 %v2887, %v3216
        %v3264 = vmul.f32 %v2891, %v3216
        %v3265 = vmul.f32 %v2895, %v3216
        %v3266 = vmul.f32 %v2899, %v3216
        %v3267 = vmul.f32 %v2903, %v3216
        %v3268 = vmul.f32 %v2907, %v3216
        %v3269 = vmul.f32 %v2911, %v3216
        %v3270 = vmul.f32 %v2915, %v3216
        %v3271 = vmul.f32 %v2919, %v3216
        %v3272 = vmul.f32 %v2923, %v3216
        %v3273 = vmul.f32 %v2927, %v3216
        %v3274 = vmul.f32 %v2931, %v3216
        %v3275 = vmul.f32 %v2935, %v3216
        %v3276 = vmul.f32 %v2939, %v3216
        %v3277 = vmul.f32 %v2943, %v3216
        %v3278 = vmul.f32 %v2947, %v3216
        %v3279 = vmul.f32 %v2951, %v3216
        %v3280 = vmul.f32 %v2955, %v3216
        %v3281 = vmul.f32 %v2959, %v3216
        %v3282 = vmul.f32 %v2963, %v3216
        %v3283 = vmul.f32 %v2967, %v3216
        %v3284 = vmul.f32 %v2971, %v3216
        %v3285 = vmul.f32 %v2975, %v3216
        %v3286 = vmul.f32 %v2979, %v3216
        %v3287 = vmul.f32 %v2983, %v3216
        %v3288 = vmul.f32 %v2987, %v3216
        %v3289 = vmul.f32 %v2991, %v3216
        %v3290 = vmul.f32 %v2995, %v3216
        %v3291 = vmul.f32 %v2999, %v3216
        %v3292 = vmul.f32 %v3003, %v3216
        %v3293 = vmul.f32 %v3007, %v3216
        %v3294 = vmul.f32 %v3011, %v3216
        %v3295 = vmul.f32 %v3015, %v3216
        %v3296 = vmul.f32 %v3019, %v3216
        %v3297 = vmul.f32 %v3023, %v3216
        %v3298 = vmul.f32 %v3027, %v3216
        %v3299 = vmul.f32 %v3031, %v3216
        %v3300 = vmul.f32 %v3035, %v3216
        %v3301 = vmul.f32 %v3039, %v3216
        %v3302 = vmul.f32 %v3043, %v3216
        %v3303 = vmul.f32 %v3047, %v3216
        %v3304 = vmul.f32 %v3051, %v3216
        %v3305 = vmul.f32 %v3055, %v3216
        %v3306 = vmul.f32 %v3059, %v3216
        %v3307 = vmul.f32 %v3063, %v3216
        %v3308 = vmul.f32 %v3067, %v3216
        %v3309 = vmul.f32 %v3071, %v3216
        %v3310 = vmul.f32 %v3075, %v3216
        %v3311 = vmul.f32 %v3079, %v3216
        %v3312 = vmul.f32 %v3083, %v3216
        %v3313 = vmul.f32 %v3087, %v3216
        %v3314 = vmul.f32 %v3091, %v3216
        %v3315 = vmul.f32 %v3095, %v3216
        %v3316 = vmul.f32 %v3099, %v3216
        %v3317 = vmul.f32 %v3103, %v3216
        %v3318 = vmul.f32 %v3107, %v3216
        %v3319 = vmul.f32 %v3111, %v3216
        %v3320 = vmul.f32 %v3115, %v3216
        %v3321 = vmul.f32 %v3119, %v3216
        %v3322 = vmul.f32 %v3123, %v3216
        %v3323 = vmul.f32 %v3127, %v3216
        %v3324 = vmul.f32 %v3131, %v3216
        %v3325 = vmul.f32 %v3135, %v3216
        %v3326 = vmul.f32 %v3139, %v3216
        %v3327 = vmul.f32 %v3143, %v3216
        %v3328 = vmul.f32 %v3147, %v3216
        %v3329 = vmul.f32 %v3151, %v3216
        %v3330 = vmul.f32 %v3155, %v3216
        %v3331 = vmul.f32 %v3159, %v3216
        %v3332 = vmul.f32 %v3163, %v3216
        %v3333 = vmul.f32 %v3167, %v3216
        %v3334 = vmul.f32 %v3171, %v3216
        %v3335 = vmul.f32 %v3175, %v3216
        %v3336 = vmul.f32 %v3179, %v3216
        %v3337 = vmul.f32 %v3183, %v3216
        %v3338 = vmul.f32 %v3187, %v3216
        %v3339 = vmul.f32 %v3191, %v3216
        %v3340 = vmul.f32 %v3195, %v3216
        %v3341 = vmul.f32 %v3199, %v3216
        %v3342 = vmul.f32 %v3203, %v3216
        %v3343 = vmul.f32 %v3207, %v3216
        %v3344 = vmul.f32 %v3211, %v3216
        %v3345 = vadd.f32 %v2573, %v3217
        %v3346 = vadd.f32 %v2574, %v3218
        %v3347 = vadd.f32 %v2575, %v3219
        %v3348 = vadd.f32 %v2576, %v3220
        %v3349 = vadd.f32 %v2577, %v3221
        %v3350 = vadd.f32 %v2578, %v3222
        %v3351 = vadd.f32 %v2579, %v3223
        %v3352 = vadd.f32 %v2580, %v3224
        %v3353 = vadd.f32 %v2581, %v3225
        %v3354 = vadd.f32 %v2582, %v3226
        %v3355 = vadd.f32 %v2583, %v3227
        %v3356 = vadd.f32 %v2584, %v3228
        %v3357 = vadd.f32 %v2585, %v3229
        %v3358 = vadd.f32 %v2586, %v3230
        %v3359 = vadd.f32 %v2587, %v3231
        %v3360 = vadd.f32 %v2588, %v3232
        %v3361 = vadd.f32 %v2589, %v3233
        %v3362 = vadd.f32 %v2590, %v3234
        %v3363 = vadd.f32 %v2591, %v3235
        %v3364 = vadd.f32 %v2592, %v3236
        %v3365 = vadd.f32 %v2593, %v3237
        %v3366 = vadd.f32 %v2594, %v3238
        %v3367 = vadd.f32 %v2595, %v3239
        %v3368 = vadd.f32 %v2596, %v3240
        %v3369 = vadd.f32 %v2597, %v3241
        %v3370 = vadd.f32 %v2598, %v3242
        %v3371 = vadd.f32 %v2599, %v3243
        %v3372 = vadd.f32 %v2600, %v3244
        %v3373 = vadd.f32 %v2601, %v3245
        %v3374 = vadd.f32 %v2602, %v3246
        %v3375 = vadd.f32 %v2603, %v3247
        %v3376 = vadd.f32 %v2604, %v3248
        %v3377 = vadd.f32 %v2605, %v3249
        %v3378 = vadd.f32 %v2606, %v3250
        %v3379 = vadd.f32 %v2607, %v3251
        %v3380 = vadd.f32 %v2608, %v3252
        %v3381 = vadd.f32 %v2609, %v3253
        %v3382 = vadd.f32 %v2610, %v3254
        %v3383 = vadd.f32 %v2611, %v3255
        %v3384 = vadd.f32 %v2612, %v3256
        %v3385 = vadd.f32 %v2613, %v3257
        %v3386 = vadd.f32 %v2614, %v3258
        %v3387 = vadd.f32 %v2615, %v3259
        %v3388 = vadd.f32 %v2616, %v3260
        %v3389 = vadd.f32 %v2617, %v3261
        %v3390 = vadd.f32 %v2618, %v3262
        %v3391 = vadd.f32 %v2619, %v3263
        %v3392 = vadd.f32 %v2620, %v3264
        %v3393 = vadd.f32 %v2621, %v3265
        %v3394 = vadd.f32 %v2622, %v3266
        %v3395 = vadd.f32 %v2623, %v3267
        %v3396 = vadd.f32 %v2624, %v3268
        %v3397 = vadd.f32 %v2625, %v3269
        %v3398 = vadd.f32 %v2626, %v3270
        %v3399 = vadd.f32 %v2627, %v3271
        %v3400 = vadd.f32 %v2628, %v3272
        %v3401 = vadd.f32 %v2629, %v3273
        %v3402 = vadd.f32 %v2630, %v3274
        %v3403 = vadd.f32 %v2631, %v3275
        %v3404 = vadd.f32 %v2632, %v3276
        %v3405 = vadd.f32 %v2633, %v3277
        %v3406 = vadd.f32 %v2634, %v3278
        %v3407 = vadd.f32 %v2635, %v3279
        %v3408 = vadd.f32 %v2636, %v3280
        %v3409 = vadd.f32 %v2637, %v3281
        %v3410 = vadd.f32 %v2638, %v3282
        %v3411 = vadd.f32 %v2639, %v3283
        %v3412 = vadd.f32 %v2640, %v3284
        %v3413 = vadd.f32 %v2641, %v3285
        %v3414 = vadd.f32 %v2642, %v3286
        %v3415 = vadd.f32 %v2643, %v3287
        %v3416 = vadd.f32 %v2644, %v3288
        %v3417 = vadd.f32 %v2645, %v3289
        %v3418 = vadd.f32 %v2646, %v3290
        %v3419 = vadd.f32 %v2647, %v3291
        %v3420 = vadd.f32 %v2648, %v3292
        %v3421 = vadd.f32 %v2649, %v3293
        %v3422 = vadd.f32 %v2650, %v3294
        %v3423 = vadd.f32 %v2651, %v3295
        %v3424 = vadd.f32 %v2652, %v3296
        %v3425 = vadd.f32 %v2653, %v3297
        %v3426 = vadd.f32 %v2654, %v3298
        %v3427 = vadd.f32 %v2655, %v3299
        %v3428 = vadd.f32 %v2656, %v3300
        %v3429 = vadd.f32 %v2657, %v3301
        %v3430 = vadd.f32 %v2658, %v3302
        %v3431 = vadd.f32 %v2659, %v3303
        %v3432 = vadd.f32 %v2660, %v3304
        %v3433 = vadd.f32 %v2661, %v3305
        %v3434 = vadd.f32 %v2662, %v3306
        %v3435 = vadd.f32 %v2663, %v3307
        %v3436 = vadd.f32 %v2664, %v3308
        %v3437 = vadd.f32 %v2665, %v3309
        %v3438 = vadd.f32 %v2666, %v3310
        %v3439 = vadd.f32 %v2667, %v3311
        %v3440 = vadd.f32 %v2668, %v3312
        %v3441 = vadd.f32 %v2669, %v3313
        %v3442 = vadd.f32 %v2670, %v3314
        %v3443 = vadd.f32 %v2671, %v3315
        %v3444 = vadd.f32 %v2672, %v3316
        %v3445 = vadd.f32 %v2673, %v3317
        %v3446 = vadd.f32 %v2674, %v3318
        %v3447 = vadd.f32 %v2675, %v3319
        %v3448 = vadd.f32 %v2676, %v3320
        %v3449 = vadd.f32 %v2677, %v3321
        %v3450 = vadd.f32 %v2678, %v3322
        %v3451 = vadd.f32 %v2679, %v3323
        %v3452 = vadd.f32 %v2680, %v3324
        %v3453 = vadd.f32 %v2681, %v3325
        %v3454 = vadd.f32 %v2682, %v3326
        %v3455 = vadd.f32 %v2683, %v3327
        %v3456 = vadd.f32 %v2684, %v3328
        %v3457 = vadd.f32 %v2685, %v3329
        %v3458 = vadd.f32 %v2686, %v3330
        %v3459 = vadd.f32 %v2687, %v3331
        %v3460 = vadd.f32 %v2688, %v3332
        %v3461 = vadd.f32 %v2689, %v3333
        %v3462 = vadd.f32 %v2690, %v3334
        %v3463 = vadd.f32 %v2691, %v3335
        %v3464 = vadd.f32 %v2692, %v3336
        %v3465 = vadd.f32 %v2693, %v3337
        %v3466 = vadd.f32 %v2694, %v3338
        %v3467 = vadd.f32 %v2695, %v3339
        %v3468 = vadd.f32 %v2696, %v3340
        %v3469 = vadd.f32 %v2697, %v3341
        %v3470 = vadd.f32 %v2698, %v3342
        %v3471 = vadd.f32 %v2699, %v3343
        %v3472 = vadd.f32 %v2700, %v3344
        %v3473 = vld [vmem:[%s2] sm:$0x1]
        %v3475 = vlaneseq
        %v3476 = vshrl.u32 %v3475, 7
        %v3477 = vsub.s32 0, %v3476
        %v3478 = vrot.slane %v3473, %v3477
        %v3480 = vadd.f32 %v3345, %v3478
        %v3481 = vadd.f32 %v3346, %v3478
        %v3482 = vadd.f32 %v3347, %v3478
        %v3483 = vadd.f32 %v3348, %v3478
        %v3484 = vadd.f32 %v3349, %v3478
        %v3485 = vadd.f32 %v3350, %v3478
        %v3486 = vadd.f32 %v3351, %v3478
        %v3487 = vadd.f32 %v3352, %v3478
        %v3488 = vadd.f32 %v3353, %v3478
        %v3489 = vadd.f32 %v3354, %v3478
        %v3490 = vadd.f32 %v3355, %v3478
        %v3491 = vadd.f32 %v3356, %v3478
        %v3492 = vadd.f32 %v3357, %v3478
        %v3493 = vadd.f32 %v3358, %v3478
        %v3494 = vadd.f32 %v3359, %v3478
        %v3495 = vadd.f32 %v3360, %v3478
        %v3496 = vadd.f32 %v3361, %v3478
        %v3497 = vadd.f32 %v3362, %v3478
        %v3498 = vadd.f32 %v3363, %v3478
        %v3499 = vadd.f32 %v3364, %v3478
        %v3500 = vadd.f32 %v3365, %v3478
        %v3501 = vadd.f32 %v3366, %v3478
        %v3502 = vadd.f32 %v3367, %v3478
        %v3503 = vadd.f32 %v3368, %v3478
        %v3504 = vadd.f32 %v3369, %v3478
        %v3505 = vadd.f32 %v3370, %v3478
        %v3506 = vadd.f32 %v3371, %v3478
        %v3507 = vadd.f32 %v3372, %v3478
        %v3508 = vadd.f32 %v3373, %v3478
        %v3509 = vadd.f32 %v3374, %v3478
        %v3510 = vadd.f32 %v3375, %v3478
        %v3511 = vadd.f32 %v3376, %v3478
        %v3512 = vadd.f32 %v3377, %v3478
        %v3513 = vadd.f32 %v3378, %v3478
        %v3514 = vadd.f32 %v3379, %v3478
        %v3515 = vadd.f32 %v3380, %v3478
        %v3516 = vadd.f32 %v3381, %v3478
        %v3517 = vadd.f32 %v3382, %v3478
        %v3518 = vadd.f32 %v3383, %v3478
        %v3519 = vadd.f32 %v3384, %v3478
        %v3520 = vadd.f32 %v3385, %v3478
        %v3521 = vadd.f32 %v3386, %v3478
        %v3522 = vadd.f32 %v3387, %v3478
        %v3523 = vadd.f32 %v3388, %v3478
        %v3524 = vadd.f32 %v3389, %v3478
        %v3525 = vadd.f32 %v3390, %v3478
        %v3526 = vadd.f32 %v3391, %v3478
        %v3527 = vadd.f32 %v3392, %v3478
        %v3528 = vadd.f32 %v3393, %v3478
        %v3529 = vadd.f32 %v3394, %v3478
        %v3530 = vadd.f32 %v3395, %v3478
        %v3531 = vadd.f32 %v3396, %v3478
        %v3532 = vadd.f32 %v3397, %v3478
        %v3533 = vadd.f32 %v3398, %v3478
        %v3534 = vadd.f32 %v3399, %v3478
        %v3535 = vadd.f32 %v3400, %v3478
        %v3536 = vadd.f32 %v3401, %v3478
        %v3537 = vadd.f32 %v3402, %v3478
        %v3538 = vadd.f32 %v3403, %v3478
        %v3539 = vadd.f32 %v3404, %v3478
        %v3540 = vadd.f32 %v3405, %v3478
        %v3541 = vadd.f32 %v3406, %v3478
        %v3542 = vadd.f32 %v3407, %v3478
        %v3543 = vadd.f32 %v3408, %v3478
        %v3544 = vadd.f32 %v3409, %v3478
        %v3545 = vadd.f32 %v3410, %v3478
        %v3546 = vadd.f32 %v3411, %v3478
        %v3547 = vadd.f32 %v3412, %v3478
        %v3548 = vadd.f32 %v3413, %v3478
        %v3549 = vadd.f32 %v3414, %v3478
        %v3550 = vadd.f32 %v3415, %v3478
        %v3551 = vadd.f32 %v3416, %v3478
        %v3552 = vadd.f32 %v3417, %v3478
        %v3553 = vadd.f32 %v3418, %v3478
        %v3554 = vadd.f32 %v3419, %v3478
        %v3555 = vadd.f32 %v3420, %v3478
        %v3556 = vadd.f32 %v3421, %v3478
        %v3557 = vadd.f32 %v3422, %v3478
        %v3558 = vadd.f32 %v3423, %v3478
        %v3559 = vadd.f32 %v3424, %v3478
        %v3560 = vadd.f32 %v3425, %v3478
        %v3561 = vadd.f32 %v3426, %v3478
        %v3562 = vadd.f32 %v3427, %v3478
        %v3563 = vadd.f32 %v3428, %v3478
        %v3564 = vadd.f32 %v3429, %v3478
        %v3565 = vadd.f32 %v3430, %v3478
        %v3566 = vadd.f32 %v3431, %v3478
        %v3567 = vadd.f32 %v3432, %v3478
        %v3568 = vadd.f32 %v3433, %v3478
        %v3569 = vadd.f32 %v3434, %v3478
        %v3570 = vadd.f32 %v3435, %v3478
        %v3571 = vadd.f32 %v3436, %v3478
        %v3572 = vadd.f32 %v3437, %v3478
        %v3573 = vadd.f32 %v3438, %v3478
        %v3574 = vadd.f32 %v3439, %v3478
        %v3575 = vadd.f32 %v3440, %v3478
        %v3576 = vadd.f32 %v3441, %v3478
        %v3577 = vadd.f32 %v3442, %v3478
        %v3578 = vadd.f32 %v3443, %v3478
        %v3579 = vadd.f32 %v3444, %v3478
        %v3580 = vadd.f32 %v3445, %v3478
        %v3581 = vadd.f32 %v3446, %v3478
        %v3582 = vadd.f32 %v3447, %v3478
        %v3583 = vadd.f32 %v3448, %v3478
        %v3584 = vadd.f32 %v3449, %v3478
        %v3585 = vadd.f32 %v3450, %v3478
        %v3586 = vadd.f32 %v3451, %v3478
        %v3587 = vadd.f32 %v3452, %v3478
        %v3588 = vadd.f32 %v3453, %v3478
        %v3589 = vadd.f32 %v3454, %v3478
        %v3590 = vadd.f32 %v3455, %v3478
        %v3591 = vadd.f32 %v3456, %v3478
        %v3592 = vadd.f32 %v3457, %v3478
        %v3593 = vadd.f32 %v3458, %v3478
        %v3594 = vadd.f32 %v3459, %v3478
        %v3595 = vadd.f32 %v3460, %v3478
        %v3596 = vadd.f32 %v3461, %v3478
        %v3597 = vadd.f32 %v3462, %v3478
        %v3598 = vadd.f32 %v3463, %v3478
        %v3599 = vadd.f32 %v3464, %v3478
        %v3600 = vadd.f32 %v3465, %v3478
        %v3601 = vadd.f32 %v3466, %v3478
        %v3602 = vadd.f32 %v3467, %v3478
        %v3603 = vadd.f32 %v3468, %v3478
        %v3604 = vadd.f32 %v3469, %v3478
        %v3605 = vadd.f32 %v3470, %v3478
        %v3606 = vadd.f32 %v3471, %v3478
        %v3607 = vadd.f32 %v3472, %v3478
        %v3608 = vmax.f32 %v3480, 0.0
        %v3609 = vmax.f32 %v3481, 0.0
        %v3610 = vmax.f32 %v3482, 0.0
        %v3611 = vmax.f32 %v3483, 0.0
        %v3612 = vmax.f32 %v3484, 0.0
        %v3613 = vmax.f32 %v3485, 0.0
        %v3614 = vmax.f32 %v3486, 0.0
        %v3615 = vmax.f32 %v3487, 0.0
        %v3616 = vmax.f32 %v3488, 0.0
        %v3617 = vmax.f32 %v3489, 0.0
        %v3618 = vmax.f32 %v3490, 0.0
        %v3619 = vmax.f32 %v3491, 0.0
        %v3620 = vmax.f32 %v3492, 0.0
        %v3621 = vmax.f32 %v3493, 0.0
        %v3622 = vmax.f32 %v3494, 0.0
        %v3623 = vmax.f32 %v3495, 0.0
        %v3624 = vmax.f32 %v3496, 0.0
        %v3625 = vmax.f32 %v3497, 0.0
        %v3626 = vmax.f32 %v3498, 0.0
        %v3627 = vmax.f32 %v3499, 0.0
        %v3628 = vmax.f32 %v3500, 0.0
        %v3629 = vmax.f32 %v3501, 0.0
        %v3630 = vmax.f32 %v3502, 0.0
        %v3631 = vmax.f32 %v3503, 0.0
        %v3632 = vmax.f32 %v3504, 0.0
        %v3633 = vmax.f32 %v3505, 0.0
        %v3634 = vmax.f32 %v3506, 0.0
        %v3635 = vmax.f32 %v3507, 0.0
        %v3636 = vmax.f32 %v3508, 0.0
        %v3637 = vmax.f32 %v3509, 0.0
        %v3638 = vmax.f32 %v3510, 0.0
        %v3639 = vmax.f32 %v3511, 0.0
        %v3640 = vmax.f32 %v3512, 0.0
        %v3641 = vmax.f32 %v3513, 0.0
        %v3642 = vmax.f32 %v3514, 0.0
        %v3643 = vmax.f32 %v3515, 0.0
        %v3644 = vmax.f32 %v3516, 0.0
        %v3645 = vmax.f32 %v3517, 0.0
        %v3646 = vmax.f32 %v3518, 0.0
        %v3647 = vmax.f32 %v3519, 0.0
        %v3648 = vmax.f32 %v3520, 0.0
        %v3649 = vmax.f32 %v3521, 0.0
        %v3650 = vmax.f32 %v3522, 0.0
        %v3651 = vmax.f32 %v3523, 0.0
        %v3652 = vmax.f32 %v3524, 0.0
        %v3653 = vmax.f32 %v3525, 0.0
        %v3654 = vmax.f32 %v3526, 0.0
        %v3655 = vmax.f32 %v3527, 0.0
        %v3656 = vmax.f32 %v3528, 0.0
        %v3657 = vmax.f32 %v3529, 0.0
        %v3658 = vmax.f32 %v3530, 0.0
        %v3659 = vmax.f32 %v3531, 0.0
        %v3660 = vmax.f32 %v3532, 0.0
        %v3661 = vmax.f32 %v3533, 0.0
        %v3662 = vmax.f32 %v3534, 0.0
        %v3663 = vmax.f32 %v3535, 0.0
        %v3664 = vmax.f32 %v3536, 0.0
        %v3665 = vmax.f32 %v3537, 0.0
        %v3666 = vmax.f32 %v3538, 0.0
        %v3667 = vmax.f32 %v3539, 0.0
        %v3668 = vmax.f32 %v3540, 0.0
        %v3669 = vmax.f32 %v3541, 0.0
        %v3670 = vmax.f32 %v3542, 0.0
        %v3671 = vmax.f32 %v3543, 0.0
        %v3672 = vmax.f32 %v3544, 0.0
        %v3673 = vmax.f32 %v3545, 0.0
        %v3674 = vmax.f32 %v3546, 0.0
        %v3675 = vmax.f32 %v3547, 0.0
        %v3676 = vmax.f32 %v3548, 0.0
        %v3677 = vmax.f32 %v3549, 0.0
        %v3678 = vmax.f32 %v3550, 0.0
        %v3679 = vmax.f32 %v3551, 0.0
        %v3680 = vmax.f32 %v3552, 0.0
        %v3681 = vmax.f32 %v3553, 0.0
        %v3682 = vmax.f32 %v3554, 0.0
        %v3683 = vmax.f32 %v3555, 0.0
        %v3684 = vmax.f32 %v3556, 0.0
        %v3685 = vmax.f32 %v3557, 0.0
        %v3686 = vmax.f32 %v3558, 0.0
        %v3687 = vmax.f32 %v3559, 0.0
        %v3688 = vmax.f32 %v3560, 0.0
        %v3689 = vmax.f32 %v3561, 0.0
        %v3690 = vmax.f32 %v3562, 0.0
        %v3691 = vmax.f32 %v3563, 0.0
        %v3692 = vmax.f32 %v3564, 0.0
        %v3693 = vmax.f32 %v3565, 0.0
        %v3694 = vmax.f32 %v3566, 0.0
        %v3695 = vmax.f32 %v3567, 0.0
        %v3696 = vmax.f32 %v3568, 0.0
        %v3697 = vmax.f32 %v3569, 0.0
        %v3698 = vmax.f32 %v3570, 0.0
        %v3699 = vmax.f32 %v3571, 0.0
        %v3700 = vmax.f32 %v3572, 0.0
        %v3701 = vmax.f32 %v3573, 0.0
        %v3702 = vmax.f32 %v3574, 0.0
        %v3703 = vmax.f32 %v3575, 0.0
        %v3704 = vmax.f32 %v3576, 0.0
        %v3705 = vmax.f32 %v3577, 0.0
        %v3706 = vmax.f32 %v3578, 0.0
        %v3707 = vmax.f32 %v3579, 0.0
        %v3708 = vmax.f32 %v3580, 0.0
        %v3709 = vmax.f32 %v3581, 0.0
        %v3710 = vmax.f32 %v3582, 0.0
        %v3711 = vmax.f32 %v3583, 0.0
        %v3712 = vmax.f32 %v3584, 0.0
        %v3713 = vmax.f32 %v3585, 0.0
        %v3714 = vmax.f32 %v3586, 0.0
        %v3715 = vmax.f32 %v3587, 0.0
        %v3716 = vmax.f32 %v3588, 0.0
        %v3717 = vmax.f32 %v3589, 0.0
        %v3718 = vmax.f32 %v3590, 0.0
        %v3719 = vmax.f32 %v3591, 0.0
        %v3720 = vmax.f32 %v3592, 0.0
        %v3721 = vmax.f32 %v3593, 0.0
        %v3722 = vmax.f32 %v3594, 0.0
        %v3723 = vmax.f32 %v3595, 0.0
        %v3724 = vmax.f32 %v3596, 0.0
        %v3725 = vmax.f32 %v3597, 0.0
        %v3726 = vmax.f32 %v3598, 0.0
        %v3727 = vmax.f32 %v3599, 0.0
        %v3728 = vmax.f32 %v3600, 0.0
        %v3729 = vmax.f32 %v3601, 0.0
        %v3730 = vmax.f32 %v3602, 0.0
        %v3731 = vmax.f32 %v3603, 0.0
        %v3732 = vmax.f32 %v3604, 0.0
        %v3733 = vmax.f32 %v3605, 0.0
        %v3734 = vmax.f32 %v3606, 0.0
        %v3735 = vmax.f32 %v3607, 0.0
        %v3736 = vpack.c.bf16 %v3609, %v3608
        %v3737 = vpack.c.bf16 %v3611, %v3610
        %v3738 = vpack.c.bf16 %v3613, %v3612
        %v3739 = vpack.c.bf16 %v3615, %v3614
        %v3740 = vpack.c.bf16 %v3617, %v3616
        %v3741 = vpack.c.bf16 %v3619, %v3618
        %v3742 = vpack.c.bf16 %v3621, %v3620
        %v3743 = vpack.c.bf16 %v3623, %v3622
        %v3744 = vpack.c.bf16 %v3625, %v3624
        %v3745 = vpack.c.bf16 %v3627, %v3626
        %v3746 = vpack.c.bf16 %v3629, %v3628
        %v3747 = vpack.c.bf16 %v3631, %v3630
        %v3748 = vpack.c.bf16 %v3633, %v3632
        %v3749 = vpack.c.bf16 %v3635, %v3634
        %v3750 = vpack.c.bf16 %v3637, %v3636
        %v3751 = vpack.c.bf16 %v3639, %v3638
        %v3752 = vpack.c.bf16 %v3641, %v3640
        %v3753 = vpack.c.bf16 %v3643, %v3642
        %v3754 = vpack.c.bf16 %v3645, %v3644
        %v3755 = vpack.c.bf16 %v3647, %v3646
        %v3756 = vpack.c.bf16 %v3649, %v3648
        %v3757 = vpack.c.bf16 %v3651, %v3650
        %v3758 = vpack.c.bf16 %v3653, %v3652
        %v3759 = vpack.c.bf16 %v3655, %v3654
        %v3760 = vpack.c.bf16 %v3657, %v3656
        %v3761 = vpack.c.bf16 %v3659, %v3658
        %v3762 = vpack.c.bf16 %v3661, %v3660
        %v3763 = vpack.c.bf16 %v3663, %v3662
        %v3764 = vpack.c.bf16 %v3665, %v3664
        %v3765 = vpack.c.bf16 %v3667, %v3666
        %v3766 = vpack.c.bf16 %v3669, %v3668
        %v3767 = vpack.c.bf16 %v3671, %v3670
        %v3768 = vpack.c.bf16 %v3673, %v3672
        %v3769 = vpack.c.bf16 %v3675, %v3674
        %v3770 = vpack.c.bf16 %v3677, %v3676
        %v3771 = vpack.c.bf16 %v3679, %v3678
        %v3772 = vpack.c.bf16 %v3681, %v3680
        %v3773 = vpack.c.bf16 %v3683, %v3682
        %v3774 = vpack.c.bf16 %v3685, %v3684
        %v3775 = vpack.c.bf16 %v3687, %v3686
        %v3776 = vpack.c.bf16 %v3689, %v3688
        %v3777 = vpack.c.bf16 %v3691, %v3690
        %v3778 = vpack.c.bf16 %v3693, %v3692
        %v3779 = vpack.c.bf16 %v3695, %v3694
        %v3780 = vpack.c.bf16 %v3697, %v3696
        %v3781 = vpack.c.bf16 %v3699, %v3698
        %v3782 = vpack.c.bf16 %v3701, %v3700
        %v3783 = vpack.c.bf16 %v3703, %v3702
        %v3784 = vpack.c.bf16 %v3705, %v3704
        %v3785 = vpack.c.bf16 %v3707, %v3706
        %v3786 = vpack.c.bf16 %v3709, %v3708
        %v3787 = vpack.c.bf16 %v3711, %v3710
        %v3788 = vpack.c.bf16 %v3713, %v3712
        %v3789 = vpack.c.bf16 %v3715, %v3714
        %v3790 = vpack.c.bf16 %v3717, %v3716
        %v3791 = vpack.c.bf16 %v3719, %v3718
        %v3792 = vpack.c.bf16 %v3721, %v3720
        %v3793 = vpack.c.bf16 %v3723, %v3722
        %v3794 = vpack.c.bf16 %v3725, %v3724
        %v3795 = vpack.c.bf16 %v3727, %v3726
        %v3796 = vpack.c.bf16 %v3729, %v3728
        %v3797 = vpack.c.bf16 %v3731, %v3730
        %v3798 = vpack.c.bf16 %v3733, %v3732
        %v3799 = vpack.c.bf16 %v3735, %v3734
        %v3800 = vld [vmem:[%s3] sm:$0xff]
        %v3801 = vld [vmem:[%s3 + $0x8] sm:$0xff]
        %v3802 = vld [vmem:[%s3 + $0x10] sm:$0xff]
        %v3803 = vld [vmem:[%s3 + $0x18] sm:$0xff]
        %v3804 = vld [vmem:[%s3 + $0x20] sm:$0xff]
        %v3805 = vld [vmem:[%s3 + $0x28] sm:$0xff]
        %v3806 = vld [vmem:[%s3 + $0x30] sm:$0xff]
        %v3807 = vld [vmem:[%s3 + $0x38] sm:$0xff]
        %v3816 = vunpack.c.l.b16 %v3800
        %v3817 = vunpack.c.h.b16 %v3800
        %v3818 = vunpack.c.l.b16 %v3801
        %v3819 = vunpack.c.h.b16 %v3801
        %v3820 = vunpack.c.l.b16 %v3802
        %v3821 = vunpack.c.h.b16 %v3802
        %v3822 = vunpack.c.l.b16 %v3803
        %v3823 = vunpack.c.h.b16 %v3803
        %v3824 = vunpack.c.l.b16 %v3804
        %v3825 = vunpack.c.h.b16 %v3804
        %v3826 = vunpack.c.l.b16 %v3805
        %v3827 = vunpack.c.h.b16 %v3805
        %v3828 = vunpack.c.l.b16 %v3806
        %v3829 = vunpack.c.h.b16 %v3806
        %v3830 = vunpack.c.l.b16 %v3807
        %v3831 = vunpack.c.h.b16 %v3807
        %v3832 = vpack.c.b16 %v3818, %v3816
        %v3833 = vpack.c.b16 %v3819, %v3817
        %v3834 = vpack.c.b16 %v3822, %v3820
        %v3835 = vpack.c.b16 %v3823, %v3821
        %v3836 = vpack.c.b16 %v3826, %v3824
        %v3837 = vpack.c.b16 %v3827, %v3825
        %v3838 = vpack.c.b16 %v3830, %v3828
        %v3839 = vpack.c.b16 %v3831, %v3829
        %vm3848 = vcmask 523264
        %v3850 = vsel %vm3848, %v3736, 0
        %v3853 = vsel %vm3848, %v3737, 0
        %v3856 = vsel %vm3848, %v3738, 0
        %v3859 = vsel %vm3848, %v3739, 0
        %v3862 = vsel %vm3848, %v3740, 0
        %v3865 = vsel %vm3848, %v3741, 0
        %v3868 = vsel %vm3848, %v3742, 0
        %v3871 = vsel %vm3848, %v3743, 0
        %v3874 = vsel %vm3848, %v3744, 0
        %v3877 = vsel %vm3848, %v3745, 0
        %v3880 = vsel %vm3848, %v3746, 0
        %v3883 = vsel %vm3848, %v3747, 0
        %v3886 = vsel %vm3848, %v3748, 0
        %v3889 = vsel %vm3848, %v3749, 0
        %v3892 = vsel %vm3848, %v3750, 0
        %v3895 = vsel %vm3848, %v3751, 0
        %v3898 = vsel %vm3848, %v3752, 0
        %v3901 = vsel %vm3848, %v3753, 0
        %v3904 = vsel %vm3848, %v3754, 0
        %v3907 = vsel %vm3848, %v3755, 0
        %v3910 = vsel %vm3848, %v3756, 0
        %v3913 = vsel %vm3848, %v3757, 0
        %v3916 = vsel %vm3848, %v3758, 0
        %v3919 = vsel %vm3848, %v3759, 0
        %v3922 = vsel %vm3848, %v3760, 0
        %v3925 = vsel %vm3848, %v3761, 0
        %v3928 = vsel %vm3848, %v3762, 0
        %v3931 = vsel %vm3848, %v3763, 0
        %v3934 = vsel %vm3848, %v3764, 0
        %v3937 = vsel %vm3848, %v3765, 0
        %v3940 = vsel %vm3848, %v3766, 0
        %v3943 = vsel %vm3848, %v3767, 0
        %v3946 = vsel %vm3848, %v3768, 0
        %v3949 = vsel %vm3848, %v3769, 0
        %v3952 = vsel %vm3848, %v3770, 0
        %v3955 = vsel %vm3848, %v3771, 0
        %v3958 = vsel %vm3848, %v3772, 0
        %v3961 = vsel %vm3848, %v3773, 0
        %v3964 = vsel %vm3848, %v3774, 0
        %v3967 = vsel %vm3848, %v3775, 0
        %v3970 = vsel %vm3848, %v3776, 0
        %v3973 = vsel %vm3848, %v3777, 0
        %v3976 = vsel %vm3848, %v3778, 0
        %v3979 = vsel %vm3848, %v3779, 0
        %v3982 = vsel %vm3848, %v3780, 0
        %v3985 = vsel %vm3848, %v3781, 0
        %v3988 = vsel %vm3848, %v3782, 0
        %v3991 = vsel %vm3848, %v3783, 0
        %v3994 = vsel %vm3848, %v3784, 0
        %v3997 = vsel %vm3848, %v3785, 0
        %v4000 = vsel %vm3848, %v3786, 0
        %v4003 = vsel %vm3848, %v3787, 0
        %v4006 = vsel %vm3848, %v3788, 0
        %v4009 = vsel %vm3848, %v3789, 0
        %v4012 = vsel %vm3848, %v3790, 0
        %v4015 = vsel %vm3848, %v3791, 0
        %v4018 = vsel %vm3848, %v3792, 0
        %v4021 = vsel %vm3848, %v3793, 0
        %v4024 = vsel %vm3848, %v3794, 0
        %v4027 = vsel %vm3848, %v3795, 0
        %v4030 = vsel %vm3848, %v3796, 0
        %v4033 = vsel %vm3848, %v3797, 0
        %v4036 = vsel %vm3848, %v3798, 0
        %v4039 = vsel %vm3848, %v3799, 0
        %4041 = vmatprep.subr.bf16.mxu0 0
        %4042 = vmatpush1.bf16.msra.mxu0 0
        %4043 = vmatprep.subr.bf16.mxu0 0
        %4044 = vmatpush1.bf16.msra.mxu0 0
        %4045 = vmatprep.subr.bf16.mxu0 0
        %4046 = vmatpush1.bf16.msra.mxu0 0
        %4047 = vmatprep.subr.bf16.mxu0 0
        %4048 = vmatpush1.bf16.msra.mxu0 0
        %4049 = vmatprep.subr.bf16.mxu0 %v3839
        %4050 = vmatpush1.bf16.msra.mxu0 %v3838
        %4051 = vmatprep.subr.bf16.mxu0 %v3837
        %4052 = vmatpush1.bf16.msra.mxu0 %v3836
        %4053 = vmatprep.subr.bf16.mxu0 %v3835
        %4054 = vmatpush1.bf16.msra.mxu0 %v3834
        %4055 = vmatprep.subr.bf16.mxu0 %v3833
        %4056 = vmatpush1.bf16.msra.mxu0 %v3832
        %4057 = vmatprep.subr.bf16.mxu0 0
        %4058 = vmatpush2.bf16.msra.mxu0 0
        %4059 = vmatprep.subr.bf16.mxu0 0
        %4060 = vmatpush2.bf16.msra.mxu0 0
        %4061 = vmatprep.subr.bf16.mxu0 0
        %4062 = vmatpush2.bf16.msra.mxu0 0
        %4063 = vmatprep.subr.bf16.mxu0 0
        %4064 = vmatpush2.bf16.msra.mxu0 0
        %4065 = vmatprep.subr.bf16.mxu0 0
        %4066 = vmatpush2.bf16.msra.mxu0 0
        %4067 = vmatprep.subr.bf16.mxu0 0
        %4068 = vmatpush2.bf16.msra.mxu0 0
        %4069 = vmatprep.subr.bf16.mxu0 0
        %4070 = vmatpush2.bf16.msra.mxu0 0
        %4071 = vmatprep.subr.bf16.mxu0 0
        %4072 = vmatpush2.bf16.msra.mxu0 0
        %4073 = vmatprep.mubr.bf16.mxu0 0
        %4074 = vmatmul.mubr.bf16.gmra.mxu0 %v3850
        %v4075 = vpop.f32.mrf.mxu0
        %v4076 = vadd.f32 0.0, %v4075
        %v4077 = vpop.f32.mrf.mxu0
        %v4078 = vadd.f32 0.0, %v4077
        %v4079 = vpop.f32.mrf.mxu0
        %v4080 = vadd.f32 0.0, %v4079
        %v4081 = vpop.f32.mrf.mxu0
        %v4082 = vadd.f32 0.0, %v4081
        %4083 = vmatprep.mubr.bf16.mxu0 0
        %4084 = vmatmul.mubr.bf16.gmra.mxu0 %v3853
        %v4085 = vpop.f32.mrf.mxu0
        %v4086 = vadd.f32 0.0, %v4085
        %v4087 = vpop.f32.mrf.mxu0
        %v4088 = vadd.f32 0.0, %v4087
        %v4089 = vpop.f32.mrf.mxu0
        %v4090 = vadd.f32 0.0, %v4089
        %v4091 = vpop.f32.mrf.mxu0
        %v4092 = vadd.f32 0.0, %v4091
        %4093 = vmatprep.mubr.bf16.mxu0 0
        %4094 = vmatmul.mubr.bf16.gmra.mxu0 %v3856
        %v4095 = vpop.f32.mrf.mxu0
        %v4096 = vadd.f32 0.0, %v4095
        %v4097 = vpop.f32.mrf.mxu0
        %v4098 = vadd.f32 0.0, %v4097
        %v4099 = vpop.f32.mrf.mxu0
        %v4100 = vadd.f32 0.0, %v4099
        %v4101 = vpop.f32.mrf.mxu0
        %v4102 = vadd.f32 0.0, %v4101
        %4103 = vmatprep.mubr.bf16.mxu0 0
        %4104 = vmatmul.mubr.bf16.gmra.mxu0 %v3859
        %v4105 = vpop.f32.mrf.mxu0
        %v4106 = vadd.f32 0.0, %v4105
        %v4107 = vpop.f32.mrf.mxu0
        %v4108 = vadd.f32 0.0, %v4107
        %v4109 = vpop.f32.mrf.mxu0
        %v4110 = vadd.f32 0.0, %v4109
        %v4111 = vpop.f32.mrf.mxu0
        %v4112 = vadd.f32 0.0, %v4111
        %4113 = vmatprep.mubr.bf16.mxu0 0
        %4114 = vmatmul.mubr.bf16.gmra.mxu0 %v3862
        %v4115 = vpop.f32.mrf.mxu0
        %v4116 = vadd.f32 0.0, %v4115
        %v4117 = vpop.f32.mrf.mxu0
        %v4118 = vadd.f32 0.0, %v4117
        %v4119 = vpop.f32.mrf.mxu0
        %v4120 = vadd.f32 0.0, %v4119
        %v4121 = vpop.f32.mrf.mxu0
        %v4122 = vadd.f32 0.0, %v4121
        %4123 = vmatprep.mubr.bf16.mxu0 0
        %4124 = vmatmul.mubr.bf16.gmra.mxu0 %v3865
        %v4125 = vpop.f32.mrf.mxu0
        %v4126 = vadd.f32 0.0, %v4125
        %v4127 = vpop.f32.mrf.mxu0
        %v4128 = vadd.f32 0.0, %v4127
        %v4129 = vpop.f32.mrf.mxu0
        %v4130 = vadd.f32 0.0, %v4129
        %v4131 = vpop.f32.mrf.mxu0
        %v4132 = vadd.f32 0.0, %v4131
        %4133 = vmatprep.mubr.bf16.mxu0 0
        %4134 = vmatmul.mubr.bf16.gmra.mxu0 %v3868
        %v4135 = vpop.f32.mrf.mxu0
        %v4136 = vadd.f32 0.0, %v4135
        %v4137 = vpop.f32.mrf.mxu0
        %v4138 = vadd.f32 0.0, %v4137
        %v4139 = vpop.f32.mrf.mxu0
        %v4140 = vadd.f32 0.0, %v4139
        %v4141 = vpop.f32.mrf.mxu0
        %v4142 = vadd.f32 0.0, %v4141
        %4143 = vmatprep.mubr.bf16.mxu0 0
        %4144 = vmatmul.mubr.bf16.gmra.mxu0 %v3871
        %v4145 = vpop.f32.mrf.mxu0
        %v4146 = vadd.f32 0.0, %v4145
        %v4147 = vpop.f32.mrf.mxu0
        %v4148 = vadd.f32 0.0, %v4147
        %v4149 = vpop.f32.mrf.mxu0
        %v4150 = vadd.f32 0.0, %v4149
        %v4151 = vpop.f32.mrf.mxu0
        %v4152 = vadd.f32 0.0, %v4151
        %4153 = vmatprep.mubr.bf16.mxu0 0
        %4154 = vmatmul.mubr.bf16.gmra.mxu0 %v3874
        %v4155 = vpop.f32.mrf.mxu0
        %v4156 = vadd.f32 0.0, %v4155
        %v4157 = vpop.f32.mrf.mxu0
        %v4158 = vadd.f32 0.0, %v4157
        %v4159 = vpop.f32.mrf.mxu0
        %v4160 = vadd.f32 0.0, %v4159
        %v4161 = vpop.f32.mrf.mxu0
        %v4162 = vadd.f32 0.0, %v4161
        %4163 = vmatprep.mubr.bf16.mxu0 0
        %4164 = vmatmul.mubr.bf16.gmra.mxu0 %v3877
        %v4165 = vpop.f32.mrf.mxu0
        %v4166 = vadd.f32 0.0, %v4165
        %v4167 = vpop.f32.mrf.mxu0
        %v4168 = vadd.f32 0.0, %v4167
        %v4169 = vpop.f32.mrf.mxu0
        %v4170 = vadd.f32 0.0, %v4169
        %v4171 = vpop.f32.mrf.mxu0
        %v4172 = vadd.f32 0.0, %v4171
        %4173 = vmatprep.mubr.bf16.mxu0 0
        %4174 = vmatmul.mubr.bf16.gmra.mxu0 %v3880
        %v4175 = vpop.f32.mrf.mxu0
        %v4176 = vadd.f32 0.0, %v4175
        %v4177 = vpop.f32.mrf.mxu0
        %v4178 = vadd.f32 0.0, %v4177
        %v4179 = vpop.f32.mrf.mxu0
        %v4180 = vadd.f32 0.0, %v4179
        %v4181 = vpop.f32.mrf.mxu0
        %v4182 = vadd.f32 0.0, %v4181
        %4183 = vmatprep.mubr.bf16.mxu0 0
        %4184 = vmatmul.mubr.bf16.gmra.mxu0 %v3883
        %v4185 = vpop.f32.mrf.mxu0
        %v4186 = vadd.f32 0.0, %v4185
        %v4187 = vpop.f32.mrf.mxu0
        %v4188 = vadd.f32 0.0, %v4187
        %v4189 = vpop.f32.mrf.mxu0
        %v4190 = vadd.f32 0.0, %v4189
        %v4191 = vpop.f32.mrf.mxu0
        %v4192 = vadd.f32 0.0, %v4191
        %4193 = vmatprep.mubr.bf16.mxu0 0
        %4194 = vmatmul.mubr.bf16.gmra.mxu0 %v3886
        %v4195 = vpop.f32.mrf.mxu0
        %v4196 = vadd.f32 0.0, %v4195
        %v4197 = vpop.f32.mrf.mxu0
        %v4198 = vadd.f32 0.0, %v4197
        %v4199 = vpop.f32.mrf.mxu0
        %v4200 = vadd.f32 0.0, %v4199
        %v4201 = vpop.f32.mrf.mxu0
        %v4202 = vadd.f32 0.0, %v4201
        %4203 = vmatprep.mubr.bf16.mxu0 0
        %4204 = vmatmul.mubr.bf16.gmra.mxu0 %v3889
        %v4205 = vpop.f32.mrf.mxu0
        %v4206 = vadd.f32 0.0, %v4205
        %v4207 = vpop.f32.mrf.mxu0
        %v4208 = vadd.f32 0.0, %v4207
        %v4209 = vpop.f32.mrf.mxu0
        %v4210 = vadd.f32 0.0, %v4209
        %v4211 = vpop.f32.mrf.mxu0
        %v4212 = vadd.f32 0.0, %v4211
        %4213 = vmatprep.mubr.bf16.mxu0 0
        %4214 = vmatmul.mubr.bf16.gmra.mxu0 %v3892
        %v4215 = vpop.f32.mrf.mxu0
        %v4216 = vadd.f32 0.0, %v4215
        %v4217 = vpop.f32.mrf.mxu0
        %v4218 = vadd.f32 0.0, %v4217
        %v4219 = vpop.f32.mrf.mxu0
        %v4220 = vadd.f32 0.0, %v4219
        %v4221 = vpop.f32.mrf.mxu0
        %v4222 = vadd.f32 0.0, %v4221
        %4223 = vmatprep.mubr.bf16.mxu0 0
        %4224 = vmatmul.mubr.bf16.gmra.mxu0 %v3895
        %v4225 = vpop.f32.mrf.mxu0
        %v4226 = vadd.f32 0.0, %v4225
        %v4227 = vpop.f32.mrf.mxu0
        %v4228 = vadd.f32 0.0, %v4227
        %v4229 = vpop.f32.mrf.mxu0
        %v4230 = vadd.f32 0.0, %v4229
        %v4231 = vpop.f32.mrf.mxu0
        %v4232 = vadd.f32 0.0, %v4231
        %4233 = vmatprep.mubr.bf16.mxu0 0
        %4234 = vmatmul.mubr.bf16.gmra.mxu0 %v3898
        %v4235 = vpop.f32.mrf.mxu0
        %v4236 = vadd.f32 0.0, %v4235
        %v4237 = vpop.f32.mrf.mxu0
        %v4238 = vadd.f32 0.0, %v4237
        %v4239 = vpop.f32.mrf.mxu0
        %v4240 = vadd.f32 0.0, %v4239
        %v4241 = vpop.f32.mrf.mxu0
        %v4242 = vadd.f32 0.0, %v4241
        %4243 = vmatprep.mubr.bf16.mxu0 0
        %4244 = vmatmul.mubr.bf16.gmra.mxu0 %v3901
        %v4245 = vpop.f32.mrf.mxu0
        %v4246 = vadd.f32 0.0, %v4245
        %v4247 = vpop.f32.mrf.mxu0
        %v4248 = vadd.f32 0.0, %v4247
        %v4249 = vpop.f32.mrf.mxu0
        %v4250 = vadd.f32 0.0, %v4249
        %v4251 = vpop.f32.mrf.mxu0
        %v4252 = vadd.f32 0.0, %v4251
        %4253 = vmatprep.mubr.bf16.mxu0 0
        %4254 = vmatmul.mubr.bf16.gmra.mxu0 %v3904
        %v4255 = vpop.f32.mrf.mxu0
        %v4256 = vadd.f32 0.0, %v4255
        %v4257 = vpop.f32.mrf.mxu0
        %v4258 = vadd.f32 0.0, %v4257
        %v4259 = vpop.f32.mrf.mxu0
        %v4260 = vadd.f32 0.0, %v4259
        %v4261 = vpop.f32.mrf.mxu0
        %v4262 = vadd.f32 0.0, %v4261
        %4263 = vmatprep.mubr.bf16.mxu0 0
        %4264 = vmatmul.mubr.bf16.gmra.mxu0 %v3907
        %v4265 = vpop.f32.mrf.mxu0
        %v4266 = vadd.f32 0.0, %v4265
        %v4267 = vpop.f32.mrf.mxu0
        %v4268 = vadd.f32 0.0, %v4267
        %v4269 = vpop.f32.mrf.mxu0
        %v4270 = vadd.f32 0.0, %v4269
        %v4271 = vpop.f32.mrf.mxu0
        %v4272 = vadd.f32 0.0, %v4271
        %4273 = vmatprep.mubr.bf16.mxu0 0
        %4274 = vmatmul.mubr.bf16.gmra.mxu0 %v3910
        %v4275 = vpop.f32.mrf.mxu0
        %v4276 = vadd.f32 0.0, %v4275
        %v4277 = vpop.f32.mrf.mxu0
        %v4278 = vadd.f32 0.0, %v4277
        %v4279 = vpop.f32.mrf.mxu0
        %v4280 = vadd.f32 0.0, %v4279
        %v4281 = vpop.f32.mrf.mxu0
        %v4282 = vadd.f32 0.0, %v4281
        %4283 = vmatprep.mubr.bf16.mxu0 0
        %4284 = vmatmul.mubr.bf16.gmra.mxu0 %v3913
        %v4285 = vpop.f32.mrf.mxu0
        %v4286 = vadd.f32 0.0, %v4285
        %v4287 = vpop.f32.mrf.mxu0
        %v4288 = vadd.f32 0.0, %v4287
        %v4289 = vpop.f32.mrf.mxu0
        %v4290 = vadd.f32 0.0, %v4289
        %v4291 = vpop.f32.mrf.mxu0
        %v4292 = vadd.f32 0.0, %v4291
        %4293 = vmatprep.mubr.bf16.mxu0 0
        %4294 = vmatmul.mubr.bf16.gmra.mxu0 %v3916
        %v4295 = vpop.f32.mrf.mxu0
        %v4296 = vadd.f32 0.0, %v4295
        %v4297 = vpop.f32.mrf.mxu0
        %v4298 = vadd.f32 0.0, %v4297
        %v4299 = vpop.f32.mrf.mxu0
        %v4300 = vadd.f32 0.0, %v4299
        %v4301 = vpop.f32.mrf.mxu0
        %v4302 = vadd.f32 0.0, %v4301
        %4303 = vmatprep.mubr.bf16.mxu0 0
        %4304 = vmatmul.mubr.bf16.gmra.mxu0 %v3919
        %v4305 = vpop.f32.mrf.mxu0
        %v4306 = vadd.f32 0.0, %v4305
        %v4307 = vpop.f32.mrf.mxu0
        %v4308 = vadd.f32 0.0, %v4307
        %v4309 = vpop.f32.mrf.mxu0
        %v4310 = vadd.f32 0.0, %v4309
        %v4311 = vpop.f32.mrf.mxu0
        %v4312 = vadd.f32 0.0, %v4311
        %4313 = vmatprep.mubr.bf16.mxu0 0
        %4314 = vmatmul.mubr.bf16.gmra.mxu0 %v3922
        %v4315 = vpop.f32.mrf.mxu0
        %v4316 = vadd.f32 0.0, %v4315
        %v4317 = vpop.f32.mrf.mxu0
        %v4318 = vadd.f32 0.0, %v4317
        %v4319 = vpop.f32.mrf.mxu0
        %v4320 = vadd.f32 0.0, %v4319
        %v4321 = vpop.f32.mrf.mxu0
        %v4322 = vadd.f32 0.0, %v4321
        %4323 = vmatprep.mubr.bf16.mxu0 0
        %4324 = vmatmul.mubr.bf16.gmra.mxu0 %v3925
        %v4325 = vpop.f32.mrf.mxu0
        %v4326 = vadd.f32 0.0, %v4325
        %v4327 = vpop.f32.mrf.mxu0
        %v4328 = vadd.f32 0.0, %v4327
        %v4329 = vpop.f32.mrf.mxu0
        %v4330 = vadd.f32 0.0, %v4329
        %v4331 = vpop.f32.mrf.mxu0
        %v4332 = vadd.f32 0.0, %v4331
        %4333 = vmatprep.mubr.bf16.mxu0 0
        %4334 = vmatmul.mubr.bf16.gmra.mxu0 %v3928
        %v4335 = vpop.f32.mrf.mxu0
        %v4336 = vadd.f32 0.0, %v4335
        %v4337 = vpop.f32.mrf.mxu0
        %v4338 = vadd.f32 0.0, %v4337
        %v4339 = vpop.f32.mrf.mxu0
        %v4340 = vadd.f32 0.0, %v4339
        %v4341 = vpop.f32.mrf.mxu0
        %v4342 = vadd.f32 0.0, %v4341
        %4343 = vmatprep.mubr.bf16.mxu0 0
        %4344 = vmatmul.mubr.bf16.gmra.mxu0 %v3931
        %v4345 = vpop.f32.mrf.mxu0
        %v4346 = vadd.f32 0.0, %v4345
        %v4347 = vpop.f32.mrf.mxu0
        %v4348 = vadd.f32 0.0, %v4347
        %v4349 = vpop.f32.mrf.mxu0
        %v4350 = vadd.f32 0.0, %v4349
        %v4351 = vpop.f32.mrf.mxu0
        %v4352 = vadd.f32 0.0, %v4351
        %4353 = vmatprep.mubr.bf16.mxu0 0
        %4354 = vmatmul.mubr.bf16.gmra.mxu0 %v3934
        %v4355 = vpop.f32.mrf.mxu0
        %v4356 = vadd.f32 0.0, %v4355
        %v4357 = vpop.f32.mrf.mxu0
        %v4358 = vadd.f32 0.0, %v4357
        %v4359 = vpop.f32.mrf.mxu0
        %v4360 = vadd.f32 0.0, %v4359
        %v4361 = vpop.f32.mrf.mxu0
        %v4362 = vadd.f32 0.0, %v4361
        %4363 = vmatprep.mubr.bf16.mxu0 0
        %4364 = vmatmul.mubr.bf16.gmra.mxu0 %v3937
        %v4365 = vpop.f32.mrf.mxu0
        %v4366 = vadd.f32 0.0, %v4365
        %v4367 = vpop.f32.mrf.mxu0
        %v4368 = vadd.f32 0.0, %v4367
        %v4369 = vpop.f32.mrf.mxu0
        %v4370 = vadd.f32 0.0, %v4369
        %v4371 = vpop.f32.mrf.mxu0
        %v4372 = vadd.f32 0.0, %v4371
        %4373 = vmatprep.mubr.bf16.mxu0 0
        %4374 = vmatmul.mubr.bf16.gmra.mxu0 %v3940
        %v4375 = vpop.f32.mrf.mxu0
        %v4376 = vadd.f32 0.0, %v4375
        %v4377 = vpop.f32.mrf.mxu0
        %v4378 = vadd.f32 0.0, %v4377
        %v4379 = vpop.f32.mrf.mxu0
        %v4380 = vadd.f32 0.0, %v4379
        %v4381 = vpop.f32.mrf.mxu0
        %v4382 = vadd.f32 0.0, %v4381
        %4383 = vmatprep.mubr.bf16.mxu0 0
        %4384 = vmatmul.mubr.bf16.gmra.mxu0 %v3943
        %v4385 = vpop.f32.mrf.mxu0
        %v4386 = vadd.f32 0.0, %v4385
        %v4387 = vpop.f32.mrf.mxu0
        %v4388 = vadd.f32 0.0, %v4387
        %v4389 = vpop.f32.mrf.mxu0
        %v4390 = vadd.f32 0.0, %v4389
        %v4391 = vpop.f32.mrf.mxu0
        %v4392 = vadd.f32 0.0, %v4391
        %4393 = vmatprep.mubr.bf16.mxu0 0
        %4394 = vmatmul.mubr.bf16.gmra.mxu0 %v3946
        %v4395 = vpop.f32.mrf.mxu0
        %v4396 = vadd.f32 0.0, %v4395
        %v4397 = vpop.f32.mrf.mxu0
        %v4398 = vadd.f32 0.0, %v4397
        %v4399 = vpop.f32.mrf.mxu0
        %v4400 = vadd.f32 0.0, %v4399
        %v4401 = vpop.f32.mrf.mxu0
        %v4402 = vadd.f32 0.0, %v4401
        %4403 = vmatprep.mubr.bf16.mxu0 0
        %4404 = vmatmul.mubr.bf16.gmra.mxu0 %v3949
        %v4405 = vpop.f32.mrf.mxu0
        %v4406 = vadd.f32 0.0, %v4405
        %v4407 = vpop.f32.mrf.mxu0
        %v4408 = vadd.f32 0.0, %v4407
        %v4409 = vpop.f32.mrf.mxu0
        %v4410 = vadd.f32 0.0, %v4409
        %v4411 = vpop.f32.mrf.mxu0
        %v4412 = vadd.f32 0.0, %v4411
        %4413 = vmatprep.mubr.bf16.mxu0 0
        %4414 = vmatmul.mubr.bf16.gmra.mxu0 %v3952
        %v4415 = vpop.f32.mrf.mxu0
        %v4416 = vadd.f32 0.0, %v4415
        %v4417 = vpop.f32.mrf.mxu0
        %v4418 = vadd.f32 0.0, %v4417
        %v4419 = vpop.f32.mrf.mxu0
        %v4420 = vadd.f32 0.0, %v4419
        %v4421 = vpop.f32.mrf.mxu0
        %v4422 = vadd.f32 0.0, %v4421
        %4423 = vmatprep.mubr.bf16.mxu0 0
        %4424 = vmatmul.mubr.bf16.gmra.mxu0 %v3955
        %v4425 = vpop.f32.mrf.mxu0
        %v4426 = vadd.f32 0.0, %v4425
        %v4427 = vpop.f32.mrf.mxu0
        %v4428 = vadd.f32 0.0, %v4427
        %v4429 = vpop.f32.mrf.mxu0
        %v4430 = vadd.f32 0.0, %v4429
        %v4431 = vpop.f32.mrf.mxu0
        %v4432 = vadd.f32 0.0, %v4431
        %4433 = vmatprep.mubr.bf16.mxu0 0
        %4434 = vmatmul.mubr.bf16.gmra.mxu0 %v3958
        %v4435 = vpop.f32.mrf.mxu0
        %v4436 = vadd.f32 0.0, %v4435
        %v4437 = vpop.f32.mrf.mxu0
        %v4438 = vadd.f32 0.0, %v4437
        %v4439 = vpop.f32.mrf.mxu0
        %v4440 = vadd.f32 0.0, %v4439
        %v4441 = vpop.f32.mrf.mxu0
        %v4442 = vadd.f32 0.0, %v4441
        %4443 = vmatprep.mubr.bf16.mxu0 0
        %4444 = vmatmul.mubr.bf16.gmra.mxu0 %v3961
        %v4445 = vpop.f32.mrf.mxu0
        %v4446 = vadd.f32 0.0, %v4445
        %v4447 = vpop.f32.mrf.mxu0
        %v4448 = vadd.f32 0.0, %v4447
        %v4449 = vpop.f32.mrf.mxu0
        %v4450 = vadd.f32 0.0, %v4449
        %v4451 = vpop.f32.mrf.mxu0
        %v4452 = vadd.f32 0.0, %v4451
        %4453 = vmatprep.mubr.bf16.mxu0 0
        %4454 = vmatmul.mubr.bf16.gmra.mxu0 %v3964
        %v4455 = vpop.f32.mrf.mxu0
        %v4456 = vadd.f32 0.0, %v4455
        %v4457 = vpop.f32.mrf.mxu0
        %v4458 = vadd.f32 0.0, %v4457
        %v4459 = vpop.f32.mrf.mxu0
        %v4460 = vadd.f32 0.0, %v4459
        %v4461 = vpop.f32.mrf.mxu0
        %v4462 = vadd.f32 0.0, %v4461
        %4463 = vmatprep.mubr.bf16.mxu0 0
        %4464 = vmatmul.mubr.bf16.gmra.mxu0 %v3967
        %v4465 = vpop.f32.mrf.mxu0
        %v4466 = vadd.f32 0.0, %v4465
        %v4467 = vpop.f32.mrf.mxu0
        %v4468 = vadd.f32 0.0, %v4467
        %v4469 = vpop.f32.mrf.mxu0
        %v4470 = vadd.f32 0.0, %v4469
        %v4471 = vpop.f32.mrf.mxu0
        %v4472 = vadd.f32 0.0, %v4471
        %4473 = vmatprep.mubr.bf16.mxu0 0
        %4474 = vmatmul.mubr.bf16.gmra.mxu0 %v3970
        %v4475 = vpop.f32.mrf.mxu0
        %v4476 = vadd.f32 0.0, %v4475
        %v4477 = vpop.f32.mrf.mxu0
        %v4478 = vadd.f32 0.0, %v4477
        %v4479 = vpop.f32.mrf.mxu0
        %v4480 = vadd.f32 0.0, %v4479
        %v4481 = vpop.f32.mrf.mxu0
        %v4482 = vadd.f32 0.0, %v4481
        %4483 = vmatprep.mubr.bf16.mxu0 0
        %4484 = vmatmul.mubr.bf16.gmra.mxu0 %v3973
        %v4485 = vpop.f32.mrf.mxu0
        %v4486 = vadd.f32 0.0, %v4485
        %v4487 = vpop.f32.mrf.mxu0
        %v4488 = vadd.f32 0.0, %v4487
        %v4489 = vpop.f32.mrf.mxu0
        %v4490 = vadd.f32 0.0, %v4489
        %v4491 = vpop.f32.mrf.mxu0
        %v4492 = vadd.f32 0.0, %v4491
        %4493 = vmatprep.mubr.bf16.mxu0 0
        %4494 = vmatmul.mubr.bf16.gmra.mxu0 %v3976
        %v4495 = vpop.f32.mrf.mxu0
        %v4496 = vadd.f32 0.0, %v4495
        %v4497 = vpop.f32.mrf.mxu0
        %v4498 = vadd.f32 0.0, %v4497
        %v4499 = vpop.f32.mrf.mxu0
        %v4500 = vadd.f32 0.0, %v4499
        %v4501 = vpop.f32.mrf.mxu0
        %v4502 = vadd.f32 0.0, %v4501
        %4503 = vmatprep.mubr.bf16.mxu0 0
        %4504 = vmatmul.mubr.bf16.gmra.mxu0 %v3979
        %v4505 = vpop.f32.mrf.mxu0
        %v4506 = vadd.f32 0.0, %v4505
        %v4507 = vpop.f32.mrf.mxu0
        %v4508 = vadd.f32 0.0, %v4507
        %v4509 = vpop.f32.mrf.mxu0
        %v4510 = vadd.f32 0.0, %v4509
        %v4511 = vpop.f32.mrf.mxu0
        %v4512 = vadd.f32 0.0, %v4511
        %4513 = vmatprep.mubr.bf16.mxu0 0
        %4514 = vmatmul.mubr.bf16.gmra.mxu0 %v3982
        %v4515 = vpop.f32.mrf.mxu0
        %v4516 = vadd.f32 0.0, %v4515
        %v4517 = vpop.f32.mrf.mxu0
        %v4518 = vadd.f32 0.0, %v4517
        %v4519 = vpop.f32.mrf.mxu0
        %v4520 = vadd.f32 0.0, %v4519
        %v4521 = vpop.f32.mrf.mxu0
        %v4522 = vadd.f32 0.0, %v4521
        %4523 = vmatprep.mubr.bf16.mxu0 0
        %4524 = vmatmul.mubr.bf16.gmra.mxu0 %v3985
        %v4525 = vpop.f32.mrf.mxu0
        %v4526 = vadd.f32 0.0, %v4525
        %v4527 = vpop.f32.mrf.mxu0
        %v4528 = vadd.f32 0.0, %v4527
        %v4529 = vpop.f32.mrf.mxu0
        %v4530 = vadd.f32 0.0, %v4529
        %v4531 = vpop.f32.mrf.mxu0
        %v4532 = vadd.f32 0.0, %v4531
        %4533 = vmatprep.mubr.bf16.mxu0 0
        %4534 = vmatmul.mubr.bf16.gmra.mxu0 %v3988
        %v4535 = vpop.f32.mrf.mxu0
        %v4536 = vadd.f32 0.0, %v4535
        %v4537 = vpop.f32.mrf.mxu0
        %v4538 = vadd.f32 0.0, %v4537
        %v4539 = vpop.f32.mrf.mxu0
        %v4540 = vadd.f32 0.0, %v4539
        %v4541 = vpop.f32.mrf.mxu0
        %v4542 = vadd.f32 0.0, %v4541
        %4543 = vmatprep.mubr.bf16.mxu0 0
        %4544 = vmatmul.mubr.bf16.gmra.mxu0 %v3991
        %v4545 = vpop.f32.mrf.mxu0
        %v4546 = vadd.f32 0.0, %v4545
        %v4547 = vpop.f32.mrf.mxu0
        %v4548 = vadd.f32 0.0, %v4547
        %v4549 = vpop.f32.mrf.mxu0
        %v4550 = vadd.f32 0.0, %v4549
        %v4551 = vpop.f32.mrf.mxu0
        %v4552 = vadd.f32 0.0, %v4551
        %4553 = vmatprep.mubr.bf16.mxu0 0
        %4554 = vmatmul.mubr.bf16.gmra.mxu0 %v3994
        %v4555 = vpop.f32.mrf.mxu0
        %v4556 = vadd.f32 0.0, %v4555
        %v4557 = vpop.f32.mrf.mxu0
        %v4558 = vadd.f32 0.0, %v4557
        %v4559 = vpop.f32.mrf.mxu0
        %v4560 = vadd.f32 0.0, %v4559
        %v4561 = vpop.f32.mrf.mxu0
        %v4562 = vadd.f32 0.0, %v4561
        %4563 = vmatprep.mubr.bf16.mxu0 0
        %4564 = vmatmul.mubr.bf16.gmra.mxu0 %v3997
        %v4565 = vpop.f32.mrf.mxu0
        %v4566 = vadd.f32 0.0, %v4565
        %v4567 = vpop.f32.mrf.mxu0
        %v4568 = vadd.f32 0.0, %v4567
        %v4569 = vpop.f32.mrf.mxu0
        %v4570 = vadd.f32 0.0, %v4569
        %v4571 = vpop.f32.mrf.mxu0
        %v4572 = vadd.f32 0.0, %v4571
        %4573 = vmatprep.mubr.bf16.mxu0 0
        %4574 = vmatmul.mubr.bf16.gmra.mxu0 %v4000
        %v4575 = vpop.f32.mrf.mxu0
        %v4576 = vadd.f32 0.0, %v4575
        %v4577 = vpop.f32.mrf.mxu0
        %v4578 = vadd.f32 0.0, %v4577
        %v4579 = vpop.f32.mrf.mxu0
        %v4580 = vadd.f32 0.0, %v4579
        %v4581 = vpop.f32.mrf.mxu0
        %v4582 = vadd.f32 0.0, %v4581
        %4583 = vmatprep.mubr.bf16.mxu0 0
        %4584 = vmatmul.mubr.bf16.gmra.mxu0 %v4003
        %v4585 = vpop.f32.mrf.mxu0
        %v4586 = vadd.f32 0.0, %v4585
        %v4587 = vpop.f32.mrf.mxu0
        %v4588 = vadd.f32 0.0, %v4587
        %v4589 = vpop.f32.mrf.mxu0
        %v4590 = vadd.f32 0.0, %v4589
        %v4591 = vpop.f32.mrf.mxu0
        %v4592 = vadd.f32 0.0, %v4591
        %4593 = vmatprep.mubr.bf16.mxu0 0
        %4594 = vmatmul.mubr.bf16.gmra.mxu0 %v4006
        %v4595 = vpop.f32.mrf.mxu0
        %v4596 = vadd.f32 0.0, %v4595
        %v4597 = vpop.f32.mrf.mxu0
        %v4598 = vadd.f32 0.0, %v4597
        %v4599 = vpop.f32.mrf.mxu0
        %v4600 = vadd.f32 0.0, %v4599
        %v4601 = vpop.f32.mrf.mxu0
        %v4602 = vadd.f32 0.0, %v4601
        %4603 = vmatprep.mubr.bf16.mxu0 0
        %4604 = vmatmul.mubr.bf16.gmra.mxu0 %v4009
        %v4605 = vpop.f32.mrf.mxu0
        %v4606 = vadd.f32 0.0, %v4605
        %v4607 = vpop.f32.mrf.mxu0
        %v4608 = vadd.f32 0.0, %v4607
        %v4609 = vpop.f32.mrf.mxu0
        %v4610 = vadd.f32 0.0, %v4609
        %v4611 = vpop.f32.mrf.mxu0
        %v4612 = vadd.f32 0.0, %v4611
        %4613 = vmatprep.mubr.bf16.mxu0 0
        %4614 = vmatmul.mubr.bf16.gmra.mxu0 %v4012
        %v4615 = vpop.f32.mrf.mxu0
        %v4616 = vadd.f32 0.0, %v4615
        %v4617 = vpop.f32.mrf.mxu0
        %v4618 = vadd.f32 0.0, %v4617
        %v4619 = vpop.f32.mrf.mxu0
        %v4620 = vadd.f32 0.0, %v4619
        %v4621 = vpop.f32.mrf.mxu0
        %v4622 = vadd.f32 0.0, %v4621
        %4623 = vmatprep.mubr.bf16.mxu0 0
        %4624 = vmatmul.mubr.bf16.gmra.mxu0 %v4015
        %v4625 = vpop.f32.mrf.mxu0
        %v4626 = vadd.f32 0.0, %v4625
        %v4627 = vpop.f32.mrf.mxu0
        %v4628 = vadd.f32 0.0, %v4627
        %v4629 = vpop.f32.mrf.mxu0
        %v4630 = vadd.f32 0.0, %v4629
        %v4631 = vpop.f32.mrf.mxu0
        %v4632 = vadd.f32 0.0, %v4631
        %4633 = vmatprep.mubr.bf16.mxu0 0
        %4634 = vmatmul.mubr.bf16.gmra.mxu0 %v4018
        %v4635 = vpop.f32.mrf.mxu0
        %v4636 = vadd.f32 0.0, %v4635
        %v4637 = vpop.f32.mrf.mxu0
        %v4638 = vadd.f32 0.0, %v4637
        %v4639 = vpop.f32.mrf.mxu0
        %v4640 = vadd.f32 0.0, %v4639
        %v4641 = vpop.f32.mrf.mxu0
        %v4642 = vadd.f32 0.0, %v4641
        %4643 = vmatprep.mubr.bf16.mxu0 0
        %4644 = vmatmul.mubr.bf16.gmra.mxu0 %v4021
        %v4645 = vpop.f32.mrf.mxu0
        %v4646 = vadd.f32 0.0, %v4645
        %v4647 = vpop.f32.mrf.mxu0
        %v4648 = vadd.f32 0.0, %v4647
        %v4649 = vpop.f32.mrf.mxu0
        %v4650 = vadd.f32 0.0, %v4649
        %v4651 = vpop.f32.mrf.mxu0
        %v4652 = vadd.f32 0.0, %v4651
        %4653 = vmatprep.mubr.bf16.mxu0 0
        %4654 = vmatmul.mubr.bf16.gmra.mxu0 %v4024
        %v4655 = vpop.f32.mrf.mxu0
        %v4656 = vadd.f32 0.0, %v4655
        %v4657 = vpop.f32.mrf.mxu0
        %v4658 = vadd.f32 0.0, %v4657
        %v4659 = vpop.f32.mrf.mxu0
        %v4660 = vadd.f32 0.0, %v4659
        %v4661 = vpop.f32.mrf.mxu0
        %v4662 = vadd.f32 0.0, %v4661
        %4663 = vmatprep.mubr.bf16.mxu0 0
        %4664 = vmatmul.mubr.bf16.gmra.mxu0 %v4027
        %v4665 = vpop.f32.mrf.mxu0
        %v4666 = vadd.f32 0.0, %v4665
        %v4667 = vpop.f32.mrf.mxu0
        %v4668 = vadd.f32 0.0, %v4667
        %v4669 = vpop.f32.mrf.mxu0
        %v4670 = vadd.f32 0.0, %v4669
        %v4671 = vpop.f32.mrf.mxu0
        %v4672 = vadd.f32 0.0, %v4671
        %4673 = vmatprep.mubr.bf16.mxu0 0
        %4674 = vmatmul.mubr.bf16.gmra.mxu0 %v4030
        %v4675 = vpop.f32.mrf.mxu0
        %v4676 = vadd.f32 0.0, %v4675
        %v4677 = vpop.f32.mrf.mxu0
        %v4678 = vadd.f32 0.0, %v4677
        %v4679 = vpop.f32.mrf.mxu0
        %v4680 = vadd.f32 0.0, %v4679
        %v4681 = vpop.f32.mrf.mxu0
        %v4682 = vadd.f32 0.0, %v4681
        %4683 = vmatprep.mubr.bf16.mxu0 0
        %4684 = vmatmul.mubr.bf16.gmra.mxu0 %v4033
        %v4685 = vpop.f32.mrf.mxu0
        %v4686 = vadd.f32 0.0, %v4685
        %v4687 = vpop.f32.mrf.mxu0
        %v4688 = vadd.f32 0.0, %v4687
        %v4689 = vpop.f32.mrf.mxu0
        %v4690 = vadd.f32 0.0, %v4689
        %v4691 = vpop.f32.mrf.mxu0
        %v4692 = vadd.f32 0.0, %v4691
        %4693 = vmatprep.mubr.bf16.mxu0 0
        %4694 = vmatmul.mubr.bf16.gmra.mxu0 %v4036
        %v4695 = vpop.f32.mrf.mxu0
        %v4696 = vadd.f32 0.0, %v4695
        %v4697 = vpop.f32.mrf.mxu0
        %v4698 = vadd.f32 0.0, %v4697
        %v4699 = vpop.f32.mrf.mxu0
        %v4700 = vadd.f32 0.0, %v4699
        %v4701 = vpop.f32.mrf.mxu0
        %v4702 = vadd.f32 0.0, %v4701
        %4703 = vmatprep.mubr.bf16.mxu0 0
        %4704 = vmatmul.mubr.bf16.gmra.mxu0 %v4039
        %v4705 = vpop.f32.mrf.mxu0
        %v4706 = vadd.f32 0.0, %v4705
        %v4707 = vpop.f32.mrf.mxu0
        %v4708 = vadd.f32 0.0, %v4707
        %v4709 = vpop.f32.mrf.mxu0
        %v4710 = vadd.f32 0.0, %v4709
        %v4711 = vpop.f32.mrf.mxu0
        %v4712 = vadd.f32 0.0, %v4711
        %4713 = vdwg.mxu0
        %v4714 = vmax.f32 %v4076, %v4080
        %v4715 = vmax.f32 %v4714, %v4086
        %v4716 = vmax.f32 %v4715, %v4090
        %v4717 = vmax.f32 %v4716, %v4096
        %v4718 = vmax.f32 %v4717, %v4100
        %v4719 = vmax.f32 %v4718, %v4106
        %v4720 = vmax.f32 %v4719, %v4110
        %v4721 = vmax.f32 %v4720, %v4116
        %v4722 = vmax.f32 %v4721, %v4120
        %v4723 = vmax.f32 %v4722, %v4126
        %v4724 = vmax.f32 %v4723, %v4130
        %v4725 = vmax.f32 %v4724, %v4136
        %v4726 = vmax.f32 %v4725, %v4140
        %v4727 = vmax.f32 %v4726, %v4146
        %v4728 = vmax.f32 %v4727, %v4150
        %v4729 = vrot.slane %v4728, 4
        %v4730 = vmax.f32 %v4728, %v4729
        %v4731 = vrot.slane %v4730, 2
        %v4732 = vmax.f32 %v4730, %v4731
        %v4733 = vrot.slane %v4732, 1
        %v4734 = vmax.f32 %v4732, %v4733
        %v4735 = vmax.f32 %v4078, %v4082
        %v4736 = vmax.f32 %v4735, %v4088
        %v4737 = vmax.f32 %v4736, %v4092
        %v4738 = vmax.f32 %v4737, %v4098
        %v4739 = vmax.f32 %v4738, %v4102
        %v4740 = vmax.f32 %v4739, %v4108
        %v4741 = vmax.f32 %v4740, %v4112
        %v4742 = vmax.f32 %v4741, %v4118
        %v4743 = vmax.f32 %v4742, %v4122
        %v4744 = vmax.f32 %v4743, %v4128
        %v4745 = vmax.f32 %v4744, %v4132
        %v4746 = vmax.f32 %v4745, %v4138
        %v4747 = vmax.f32 %v4746, %v4142
        %v4748 = vmax.f32 %v4747, %v4148
        %v4749 = vmax.f32 %v4748, %v4152
        %v4750 = vrot.slane %v4749, 4
        %v4751 = vmax.f32 %v4749, %v4750
        %v4752 = vrot.slane %v4751, 2
        %v4753 = vmax.f32 %v4751, %v4752
        %v4754 = vrot.slane %v4753, 1
        %v4755 = vmax.f32 %v4753, %v4754
        %v4756 = vmax.f32 %v4156, %v4160
        %v4757 = vmax.f32 %v4756, %v4166
        %v4758 = vmax.f32 %v4757, %v4170
        %v4759 = vmax.f32 %v4758, %v4176
        %v4760 = vmax.f32 %v4759, %v4180
        %v4761 = vmax.f32 %v4760, %v4186
        %v4762 = vmax.f32 %v4761, %v4190
        %v4763 = vmax.f32 %v4762, %v4196
        %v4764 = vmax.f32 %v4763, %v4200
        %v4765 = vmax.f32 %v4764, %v4206
        %v4766 = vmax.f32 %v4765, %v4210
        %v4767 = vmax.f32 %v4766, %v4216
        %v4768 = vmax.f32 %v4767, %v4220
        %v4769 = vmax.f32 %v4768, %v4226
        %v4770 = vmax.f32 %v4769, %v4230
        %v4771 = vrot.slane %v4770, 4
        %v4772 = vmax.f32 %v4770, %v4771
        %v4773 = vrot.slane %v4772, 2
        %v4774 = vmax.f32 %v4772, %v4773
        %v4775 = vrot.slane %v4774, 1
        %v4776 = vmax.f32 %v4774, %v4775
        %v4777 = vmax.f32 %v4158, %v4162
        %v4778 = vmax.f32 %v4777, %v4168
        %v4779 = vmax.f32 %v4778, %v4172
        %v4780 = vmax.f32 %v4779, %v4178
        %v4781 = vmax.f32 %v4780, %v4182
        %v4782 = vmax.f32 %v4781, %v4188
        %v4783 = vmax.f32 %v4782, %v4192
        %v4784 = vmax.f32 %v4783, %v4198
        %v4785 = vmax.f32 %v4784, %v4202
        %v4786 = vmax.f32 %v4785, %v4208
        %v4787 = vmax.f32 %v4786, %v4212
        %v4788 = vmax.f32 %v4787, %v4218
        %v4789 = vmax.f32 %v4788, %v4222
        %v4790 = vmax.f32 %v4789, %v4228
        %v4791 = vmax.f32 %v4790, %v4232
        %v4792 = vrot.slane %v4791, 4
        %v4793 = vmax.f32 %v4791, %v4792
        %v4794 = vrot.slane %v4793, 2
        %v4795 = vmax.f32 %v4793, %v4794
        %v4796 = vrot.slane %v4795, 1
        %v4797 = vmax.f32 %v4795, %v4796
        %v4798 = vmax.f32 %v4236, %v4240
        %v4799 = vmax.f32 %v4798, %v4246
        %v4800 = vmax.f32 %v4799, %v4250
        %v4801 = vmax.f32 %v4800, %v4256
        %v4802 = vmax.f32 %v4801, %v4260
        %v4803 = vmax.f32 %v4802, %v4266
        %v4804 = vmax.f32 %v4803, %v4270
        %v4805 = vmax.f32 %v4804, %v4276
        %v4806 = vmax.f32 %v4805, %v4280
        %v4807 = vmax.f32 %v4806, %v4286
        %v4808 = vmax.f32 %v4807, %v4290
        %v4809 = vmax.f32 %v4808, %v4296
        %v4810 = vmax.f32 %v4809, %v4300
        %v4811 = vmax.f32 %v4810, %v4306
        %v4812 = vmax.f32 %v4811, %v4310
        %v4813 = vrot.slane %v4812, 4
        %v4814 = vmax.f32 %v4812, %v4813
        %v4815 = vrot.slane %v4814, 2
        %v4816 = vmax.f32 %v4814, %v4815
        %v4817 = vrot.slane %v4816, 1
        %v4818 = vmax.f32 %v4816, %v4817
        %v4819 = vmax.f32 %v4238, %v4242
        %v4820 = vmax.f32 %v4819, %v4248
        %v4821 = vmax.f32 %v4820, %v4252
        %v4822 = vmax.f32 %v4821, %v4258
        %v4823 = vmax.f32 %v4822, %v4262
        %v4824 = vmax.f32 %v4823, %v4268
        %v4825 = vmax.f32 %v4824, %v4272
        %v4826 = vmax.f32 %v4825, %v4278
        %v4827 = vmax.f32 %v4826, %v4282
        %v4828 = vmax.f32 %v4827, %v4288
        %v4829 = vmax.f32 %v4828, %v4292
        %v4830 = vmax.f32 %v4829, %v4298
        %v4831 = vmax.f32 %v4830, %v4302
        %v4832 = vmax.f32 %v4831, %v4308
        %v4833 = vmax.f32 %v4832, %v4312
        %v4834 = vrot.slane %v4833, 4
        %v4835 = vmax.f32 %v4833, %v4834
        %v4836 = vrot.slane %v4835, 2
        %v4837 = vmax.f32 %v4835, %v4836
        %v4838 = vrot.slane %v4837, 1
        %v4839 = vmax.f32 %v4837, %v4838
        %v4840 = vmax.f32 %v4316, %v4320
        %v4841 = vmax.f32 %v4840, %v4326
        %v4842 = vmax.f32 %v4841, %v4330
        %v4843 = vmax.f32 %v4842, %v4336
        %v4844 = vmax.f32 %v4843, %v4340
        %v4845 = vmax.f32 %v4844, %v4346
        %v4846 = vmax.f32 %v4845, %v4350
        %v4847 = vmax.f32 %v4846, %v4356
        %v4848 = vmax.f32 %v4847, %v4360
        %v4849 = vmax.f32 %v4848, %v4366
        %v4850 = vmax.f32 %v4849, %v4370
        %v4851 = vmax.f32 %v4850, %v4376
        %v4852 = vmax.f32 %v4851, %v4380
        %v4853 = vmax.f32 %v4852, %v4386
        %v4854 = vmax.f32 %v4853, %v4390
        %v4855 = vrot.slane %v4854, 4
        %v4856 = vmax.f32 %v4854, %v4855
        %v4857 = vrot.slane %v4856, 2
        %v4858 = vmax.f32 %v4856, %v4857
        %v4859 = vrot.slane %v4858, 1
        %v4860 = vmax.f32 %v4858, %v4859
        %v4861 = vmax.f32 %v4318, %v4322
        %v4862 = vmax.f32 %v4861, %v4328
        %v4863 = vmax.f32 %v4862, %v4332
        %v4864 = vmax.f32 %v4863, %v4338
        %v4865 = vmax.f32 %v4864, %v4342
        %v4866 = vmax.f32 %v4865, %v4348
        %v4867 = vmax.f32 %v4866, %v4352
        %v4868 = vmax.f32 %v4867, %v4358
        %v4869 = vmax.f32 %v4868, %v4362
        %v4870 = vmax.f32 %v4869, %v4368
        %v4871 = vmax.f32 %v4870, %v4372
        %v4872 = vmax.f32 %v4871, %v4378
        %v4873 = vmax.f32 %v4872, %v4382
        %v4874 = vmax.f32 %v4873, %v4388
        %v4875 = vmax.f32 %v4874, %v4392
        %v4876 = vrot.slane %v4875, 4
        %v4877 = vmax.f32 %v4875, %v4876
        %v4878 = vrot.slane %v4877, 2
        %v4879 = vmax.f32 %v4877, %v4878
        %v4880 = vrot.slane %v4879, 1
        %v4881 = vmax.f32 %v4879, %v4880
        %v4882 = vmax.f32 %v4396, %v4400
        %v4883 = vmax.f32 %v4882, %v4406
        %v4884 = vmax.f32 %v4883, %v4410
        %v4885 = vmax.f32 %v4884, %v4416
        %v4886 = vmax.f32 %v4885, %v4420
        %v4887 = vmax.f32 %v4886, %v4426
        %v4888 = vmax.f32 %v4887, %v4430
        %v4889 = vmax.f32 %v4888, %v4436
        %v4890 = vmax.f32 %v4889, %v4440
        %v4891 = vmax.f32 %v4890, %v4446
        %v4892 = vmax.f32 %v4891, %v4450
        %v4893 = vmax.f32 %v4892, %v4456
        %v4894 = vmax.f32 %v4893, %v4460
        %v4895 = vmax.f32 %v4894, %v4466
        %v4896 = vmax.f32 %v4895, %v4470
        %v4897 = vrot.slane %v4896, 4
        %v4898 = vmax.f32 %v4896, %v4897
        %v4899 = vrot.slane %v4898, 2
        %v4900 = vmax.f32 %v4898, %v4899
        %v4901 = vrot.slane %v4900, 1
        %v4902 = vmax.f32 %v4900, %v4901
        %v4903 = vmax.f32 %v4398, %v4402
        %v4904 = vmax.f32 %v4903, %v4408
        %v4905 = vmax.f32 %v4904, %v4412
        %v4906 = vmax.f32 %v4905, %v4418
        %v4907 = vmax.f32 %v4906, %v4422
        %v4908 = vmax.f32 %v4907, %v4428
        %v4909 = vmax.f32 %v4908, %v4432
        %v4910 = vmax.f32 %v4909, %v4438
        %v4911 = vmax.f32 %v4910, %v4442
        %v4912 = vmax.f32 %v4911, %v4448
        %v4913 = vmax.f32 %v4912, %v4452
        %v4914 = vmax.f32 %v4913, %v4458
        %v4915 = vmax.f32 %v4914, %v4462
        %v4916 = vmax.f32 %v4915, %v4468
        %v4917 = vmax.f32 %v4916, %v4472
        %v4918 = vrot.slane %v4917, 4
        %v4919 = vmax.f32 %v4917, %v4918
        %v4920 = vrot.slane %v4919, 2
        %v4921 = vmax.f32 %v4919, %v4920
        %v4922 = vrot.slane %v4921, 1
        %v4923 = vmax.f32 %v4921, %v4922
        %v4924 = vmax.f32 %v4476, %v4480
        %v4925 = vmax.f32 %v4924, %v4486
        %v4926 = vmax.f32 %v4925, %v4490
        %v4927 = vmax.f32 %v4926, %v4496
        %v4928 = vmax.f32 %v4927, %v4500
        %v4929 = vmax.f32 %v4928, %v4506
        %v4930 = vmax.f32 %v4929, %v4510
        %v4931 = vmax.f32 %v4930, %v4516
        %v4932 = vmax.f32 %v4931, %v4520
        %v4933 = vmax.f32 %v4932, %v4526
        %v4934 = vmax.f32 %v4933, %v4530
        %v4935 = vmax.f32 %v4934, %v4536
        %v4936 = vmax.f32 %v4935, %v4540
        %v4937 = vmax.f32 %v4936, %v4546
        %v4938 = vmax.f32 %v4937, %v4550
        %v4939 = vrot.slane %v4938, 4
        %v4940 = vmax.f32 %v4938, %v4939
        %v4941 = vrot.slane %v4940, 2
        %v4942 = vmax.f32 %v4940, %v4941
        %v4943 = vrot.slane %v4942, 1
        %v4944 = vmax.f32 %v4942, %v4943
        %v4945 = vmax.f32 %v4478, %v4482
        %v4946 = vmax.f32 %v4945, %v4488
        %v4947 = vmax.f32 %v4946, %v4492
        %v4948 = vmax.f32 %v4947, %v4498
        %v4949 = vmax.f32 %v4948, %v4502
        %v4950 = vmax.f32 %v4949, %v4508
        %v4951 = vmax.f32 %v4950, %v4512
        %v4952 = vmax.f32 %v4951, %v4518
        %v4953 = vmax.f32 %v4952, %v4522
        %v4954 = vmax.f32 %v4953, %v4528
        %v4955 = vmax.f32 %v4954, %v4532
        %v4956 = vmax.f32 %v4955, %v4538
        %v4957 = vmax.f32 %v4956, %v4542
        %v4958 = vmax.f32 %v4957, %v4548
        %v4959 = vmax.f32 %v4958, %v4552
        %v4960 = vrot.slane %v4959, 4
        %v4961 = vmax.f32 %v4959, %v4960
        %v4962 = vrot.slane %v4961, 2
        %v4963 = vmax.f32 %v4961, %v4962
        %v4964 = vrot.slane %v4963, 1
        %v4965 = vmax.f32 %v4963, %v4964
        %v4966 = vmax.f32 %v4556, %v4560
        %v4967 = vmax.f32 %v4966, %v4566
        %v4968 = vmax.f32 %v4967, %v4570
        %v4969 = vmax.f32 %v4968, %v4576
        %v4970 = vmax.f32 %v4969, %v4580
        %v4971 = vmax.f32 %v4970, %v4586
        %v4972 = vmax.f32 %v4971, %v4590
        %v4973 = vmax.f32 %v4972, %v4596
        %v4974 = vmax.f32 %v4973, %v4600
        %v4975 = vmax.f32 %v4974, %v4606
        %v4976 = vmax.f32 %v4975, %v4610
        %v4977 = vmax.f32 %v4976, %v4616
        %v4978 = vmax.f32 %v4977, %v4620
        %v4979 = vmax.f32 %v4978, %v4626
        %v4980 = vmax.f32 %v4979, %v4630
        %v4981 = vrot.slane %v4980, 4
        %v4982 = vmax.f32 %v4980, %v4981
        %v4983 = vrot.slane %v4982, 2
        %v4984 = vmax.f32 %v4982, %v4983
        %v4985 = vrot.slane %v4984, 1
        %v4986 = vmax.f32 %v4984, %v4985
        %v4987 = vmax.f32 %v4558, %v4562
        %v4988 = vmax.f32 %v4987, %v4568
        %v4989 = vmax.f32 %v4988, %v4572
        %v4990 = vmax.f32 %v4989, %v4578
        %v4991 = vmax.f32 %v4990, %v4582
        %v4992 = vmax.f32 %v4991, %v4588
        %v4993 = vmax.f32 %v4992, %v4592
        %v4994 = vmax.f32 %v4993, %v4598
        %v4995 = vmax.f32 %v4994, %v4602
        %v4996 = vmax.f32 %v4995, %v4608
        %v4997 = vmax.f32 %v4996, %v4612
        %v4998 = vmax.f32 %v4997, %v4618
        %v4999 = vmax.f32 %v4998, %v4622
        %v5000 = vmax.f32 %v4999, %v4628
        %v5001 = vmax.f32 %v5000, %v4632
        %v5002 = vrot.slane %v5001, 4
        %v5003 = vmax.f32 %v5001, %v5002
        %v5004 = vrot.slane %v5003, 2
        %v5005 = vmax.f32 %v5003, %v5004
        %v5006 = vrot.slane %v5005, 1
        %v5007 = vmax.f32 %v5005, %v5006
        %v5008 = vmax.f32 %v4636, %v4640
        %v5009 = vmax.f32 %v5008, %v4646
        %v5010 = vmax.f32 %v5009, %v4650
        %v5011 = vmax.f32 %v5010, %v4656
        %v5012 = vmax.f32 %v5011, %v4660
        %v5013 = vmax.f32 %v5012, %v4666
        %v5014 = vmax.f32 %v5013, %v4670
        %v5015 = vmax.f32 %v5014, %v4676
        %v5016 = vmax.f32 %v5015, %v4680
        %v5017 = vmax.f32 %v5016, %v4686
        %v5018 = vmax.f32 %v5017, %v4690
        %v5019 = vmax.f32 %v5018, %v4696
        %v5020 = vmax.f32 %v5019, %v4700
        %v5021 = vmax.f32 %v5020, %v4706
        %v5022 = vmax.f32 %v5021, %v4710
        %v5023 = vrot.slane %v5022, 4
        %v5024 = vmax.f32 %v5022, %v5023
        %v5025 = vrot.slane %v5024, 2
        %v5026 = vmax.f32 %v5024, %v5025
        %v5027 = vrot.slane %v5026, 1
        %v5028 = vmax.f32 %v5026, %v5027
        %v5029 = vmax.f32 %v4638, %v4642
        %v5030 = vmax.f32 %v5029, %v4648
        %v5031 = vmax.f32 %v5030, %v4652
        %v5032 = vmax.f32 %v5031, %v4658
        %v5033 = vmax.f32 %v5032, %v4662
        %v5034 = vmax.f32 %v5033, %v4668
        %v5035 = vmax.f32 %v5034, %v4672
        %v5036 = vmax.f32 %v5035, %v4678
        %v5037 = vmax.f32 %v5036, %v4682
        %v5038 = vmax.f32 %v5037, %v4688
        %v5039 = vmax.f32 %v5038, %v4692
        %v5040 = vmax.f32 %v5039, %v4698
        %v5041 = vmax.f32 %v5040, %v4702
        %v5042 = vmax.f32 %v5041, %v4708
        %v5043 = vmax.f32 %v5042, %v4712
        %v5044 = vrot.slane %v5043, 4
        %v5045 = vmax.f32 %v5043, %v5044
        %v5046 = vrot.slane %v5045, 2
        %v5047 = vmax.f32 %v5045, %v5046
        %v5048 = vrot.slane %v5047, 1
        %v5049 = vmax.f32 %v5047, %v5048
        %v5050 = vld [vmem:[%s4] sm:$0x3]
        %v5052 = vlaneseq
        %v5053 = vshrl.u32 %v5052, 7
        %v5054 = vsub.s32 0, %v5053
        %v5055 = vrot.slane %v5050, %v5054
        %v5056 = vlaneseq
        %v5057 = vshrl.u32 %v5056, 7
        %v5058 = vsub.s32 1, %v5057
        %v5059 = vrot.slane %v5050, %v5058
        %v5062 = vadd.f32 %v4734, %v5055
        %v5063 = vadd.f32 %v4755, %v5059
        %v5064 = vadd.f32 %v4776, %v5055
        %v5065 = vadd.f32 %v4797, %v5059
        %v5066 = vadd.f32 %v4818, %v5055
        %v5067 = vadd.f32 %v4839, %v5059
        %v5068 = vadd.f32 %v4860, %v5055
        %v5069 = vadd.f32 %v4881, %v5059
        %v5070 = vadd.f32 %v4902, %v5055
        %v5071 = vadd.f32 %v4923, %v5059
        %v5072 = vadd.f32 %v4944, %v5055
        %v5073 = vadd.f32 %v4965, %v5059
        %v5074 = vadd.f32 %v4986, %v5055
        %v5075 = vadd.f32 %v5007, %v5059
        %v5076 = vadd.f32 %v5028, %v5055
        %v5077 = vadd.f32 %v5049, %v5059
        %v5078 = vmax.f32 %v5062, 0.0
        %v5079 = vmax.f32 %v5063, 0.0
        %v5080 = vmax.f32 %v5064, 0.0
        %v5081 = vmax.f32 %v5065, 0.0
        %v5082 = vmax.f32 %v5066, 0.0
        %v5083 = vmax.f32 %v5067, 0.0
        %v5084 = vmax.f32 %v5068, 0.0
        %v5085 = vmax.f32 %v5069, 0.0
        %v5086 = vmax.f32 %v5070, 0.0
        %v5087 = vmax.f32 %v5071, 0.0
        %v5088 = vmax.f32 %v5072, 0.0
        %v5089 = vmax.f32 %v5073, 0.0
        %v5090 = vmax.f32 %v5074, 0.0
        %v5091 = vmax.f32 %v5075, 0.0
        %v5092 = vmax.f32 %v5076, 0.0
        %v5093 = vmax.f32 %v5077, 0.0
        %v5094 = vpack.c.bf16 %v5078, %v5078
        %v5095 = vpack.c.bf16 %v5079, %v5079
        %v5096 = vpack.c.bf16 %v5080, %v5080
        %v5097 = vpack.c.bf16 %v5081, %v5081
        %v5098 = vpack.c.bf16 %v5082, %v5082
        %v5099 = vpack.c.bf16 %v5083, %v5083
        %v5100 = vpack.c.bf16 %v5084, %v5084
        %v5101 = vpack.c.bf16 %v5085, %v5085
        %v5102 = vpack.c.bf16 %v5086, %v5086
        %v5103 = vpack.c.bf16 %v5087, %v5087
        %v5104 = vpack.c.bf16 %v5088, %v5088
        %v5105 = vpack.c.bf16 %v5089, %v5089
        %v5106 = vpack.c.bf16 %v5090, %v5090
        %v5107 = vpack.c.bf16 %v5091, %v5091
        %v5108 = vpack.c.bf16 %v5092, %v5092
        %v5109 = vpack.c.bf16 %v5093, %v5093
        %v5110 = vld [vmem:[%s5] sm:$0xff]
        %v5111 = vld [vmem:[%s5 + $0x8] sm:$0xff]
        %v5112 = vld [vmem:[%s5 + $0x10] sm:$0xff]
        %v5113 = vld [vmem:[%s5 + $0x18] sm:$0xff]
        %v5114 = vld [vmem:[%s5 + $0x20] sm:$0xff]
        %v5115 = vld [vmem:[%s5 + $0x28] sm:$0xff]
        %v5116 = vld [vmem:[%s5 + $0x30] sm:$0xff]
        %v5117 = vld [vmem:[%s5 + $0x38] sm:$0xff]
        %v5118 = vld [vmem:[%s5 + $0x40] sm:$0xff]
        %v5119 = vld [vmem:[%s5 + $0x48] sm:$0xff]
        %v5120 = vld [vmem:[%s5 + $0x50] sm:$0xff]
        %v5121 = vld [vmem:[%s5 + $0x58] sm:$0xff]
        %v5122 = vld [vmem:[%s5 + $0x60] sm:$0xff]
        %v5123 = vld [vmem:[%s5 + $0x68] sm:$0xff]
        %v5124 = vld [vmem:[%s5 + $0x70] sm:$0xff]
        %v5125 = vld [vmem:[%s5 + $0x78] sm:$0xff]
        %v5126 = vld [vmem:[%s5 + $0x80] sm:$0xff]
        %v5127 = vld [vmem:[%s5 + $0x88] sm:$0xff]
        %v5128 = vld [vmem:[%s5 + $0x90] sm:$0xff]
        %v5129 = vld [vmem:[%s5 + $0x98] sm:$0xff]
        %v5130 = vld [vmem:[%s5 + $0xa0] sm:$0xff]
        %v5131 = vld [vmem:[%s5 + $0xa8] sm:$0xff]
        %v5132 = vld [vmem:[%s5 + $0xb0] sm:$0xff]
        %v5133 = vld [vmem:[%s5 + $0xb8] sm:$0xff]
        %v5134 = vld [vmem:[%s5 + $0xc0] sm:$0xff]
        %v5135 = vld [vmem:[%s5 + $0xc8] sm:$0xff]
        %v5136 = vld [vmem:[%s5 + $0xd0] sm:$0xff]
        %v5137 = vld [vmem:[%s5 + $0xd8] sm:$0xff]
        %v5138 = vld [vmem:[%s5 + $0xe0] sm:$0xff]
        %v5139 = vld [vmem:[%s5 + $0xe8] sm:$0xff]
        %v5140 = vld [vmem:[%s5 + $0xf0] sm:$0xff]
        %v5141 = vld [vmem:[%s5 + $0xf8] sm:$0xff]
        %v5142 = vld [vmem:[%s5 + $0x100] sm:$0xff]
        %v5143 = vld [vmem:[%s5 + $0x108] sm:$0xff]
        %v5144 = vld [vmem:[%s5 + $0x110] sm:$0xff]
        %v5145 = vld [vmem:[%s5 + $0x118] sm:$0xff]
        %v5146 = vld [vmem:[%s5 + $0x120] sm:$0xff]
        %v5147 = vld [vmem:[%s5 + $0x128] sm:$0xff]
        %v5148 = vld [vmem:[%s5 + $0x130] sm:$0xff]
        %v5149 = vld [vmem:[%s5 + $0x138] sm:$0xff]
        %v5150 = vld [vmem:[%s5 + $0x140] sm:$0xff]
        %v5151 = vld [vmem:[%s5 + $0x148] sm:$0xff]
        %v5152 = vld [vmem:[%s5 + $0x150] sm:$0xff]
        %v5153 = vld [vmem:[%s5 + $0x158] sm:$0xff]
        %v5154 = vld [vmem:[%s5 + $0x160] sm:$0xff]
        %v5155 = vld [vmem:[%s5 + $0x168] sm:$0xff]
        %v5156 = vld [vmem:[%s5 + $0x170] sm:$0xff]
        %v5157 = vld [vmem:[%s5 + $0x178] sm:$0xff]
        %v5158 = vld [vmem:[%s5 + $0x180] sm:$0xff]
        %v5159 = vld [vmem:[%s5 + $0x188] sm:$0xff]
        %v5160 = vld [vmem:[%s5 + $0x190] sm:$0xff]
        %v5161 = vld [vmem:[%s5 + $0x198] sm:$0xff]
        %v5162 = vld [vmem:[%s5 + $0x1a0] sm:$0xff]
        %v5163 = vld [vmem:[%s5 + $0x1a8] sm:$0xff]
        %v5164 = vld [vmem:[%s5 + $0x1b0] sm:$0xff]
        %v5165 = vld [vmem:[%s5 + $0x1b8] sm:$0xff]
        %v5166 = vld [vmem:[%s5 + $0x1c0] sm:$0xff]
        %v5167 = vld [vmem:[%s5 + $0x1c8] sm:$0xff]
        %v5168 = vld [vmem:[%s5 + $0x1d0] sm:$0xff]
        %v5169 = vld [vmem:[%s5 + $0x1d8] sm:$0xff]
        %v5170 = vld [vmem:[%s5 + $0x1e0] sm:$0xff]
        %v5171 = vld [vmem:[%s5 + $0x1e8] sm:$0xff]
        %v5172 = vld [vmem:[%s5 + $0x1f0] sm:$0xff]
        %v5173 = vld [vmem:[%s5 + $0x1f8] sm:$0xff]
        %v5190 = vunpack.c.l.b16 %v5094
        %v5191 = vunpack.c.l.b16 %v5095
        %v5192 = vunpack.c.l.b16 %v5096
        %v5193 = vunpack.c.l.b16 %v5097
        %v5194 = vunpack.c.l.b16 %v5098
        %v5195 = vunpack.c.l.b16 %v5099
        %v5196 = vunpack.c.l.b16 %v5100
        %v5197 = vunpack.c.l.b16 %v5101
        %v5198 = vunpack.c.l.b16 %v5102
        %v5199 = vunpack.c.l.b16 %v5103
        %v5200 = vunpack.c.l.b16 %v5104
        %v5201 = vunpack.c.l.b16 %v5105
        %v5202 = vunpack.c.l.b16 %v5106
        %v5203 = vunpack.c.l.b16 %v5107
        %v5204 = vunpack.c.l.b16 %v5108
        %v5205 = vunpack.c.l.b16 %v5109
        %v5206 = vrot.slane %v5192, 7
        %vm5207 = vcmask 1041409
        %v5208 = vsel %vm5207, %v5206, %v5190
        %v5209 = vrot.slane %v5194, 6
        %vm5210 = vcmask 1042434
        %v5211 = vsel %vm5210, %v5209, %v5208
        %v5212 = vrot.slane %v5196, 5
        %vm5213 = vcmask 1043459
        %v5214 = vsel %vm5213, %v5212, %v5211
        %v5215 = vrot.slane %v5198, 4
        %vm5216 = vcmask 1044484
        %v5217 = vsel %vm5216, %v5215, %v5214
        %v5218 = vrot.slane %v5200, 3
        %vm5219 = vcmask 1045509
        %v5220 = vsel %vm5219, %v5218, %v5217
        %v5221 = vrot.slane %v5202, 2
        %vm5222 = vcmask 1046534
        %v5223 = vsel %vm5222, %v5221, %v5220
        %v5224 = vrot.slane %v5204, 1
        %vm5225 = vcmask 1047559
        %v5226 = vsel %vm5225, %v5224, %v5223
        %v5227 = vrot.slane %v5193, 7
        %v5228 = vsel %vm5207, %v5227, %v5191
        %v5229 = vrot.slane %v5195, 6
        %v5230 = vsel %vm5210, %v5229, %v5228
        %v5231 = vrot.slane %v5197, 5
        %v5232 = vsel %vm5213, %v5231, %v5230
        %v5233 = vrot.slane %v5199, 4
        %v5234 = vsel %vm5216, %v5233, %v5232
        %v5235 = vrot.slane %v5201, 3
        %v5236 = vsel %vm5219, %v5235, %v5234
        %v5237 = vrot.slane %v5203, 2
        %v5238 = vsel %vm5222, %v5237, %v5236
        %v5239 = vrot.slane %v5205, 1
        %v5240 = vsel %vm5225, %v5239, %v5238
        %v5241 = vpack.c.b16 %v5226, %v5226
        %v5242 = vpack.c.b16 %v5240, %v5240
        %v5309 = vunpack.c.l.b16 %v5110
        %v5310 = vunpack.c.h.b16 %v5110
        %v5311 = vunpack.c.l.b16 %v5111
        %v5312 = vunpack.c.h.b16 %v5111
        %v5313 = vunpack.c.l.b16 %v5112
        %v5314 = vunpack.c.h.b16 %v5112
        %v5315 = vunpack.c.l.b16 %v5113
        %v5316 = vunpack.c.h.b16 %v5113
        %v5317 = vunpack.c.l.b16 %v5114
        %v5318 = vunpack.c.h.b16 %v5114
        %v5319 = vunpack.c.l.b16 %v5115
        %v5320 = vunpack.c.h.b16 %v5115
        %v5321 = vunpack.c.l.b16 %v5116
        %v5322 = vunpack.c.h.b16 %v5116
        %v5323 = vunpack.c.l.b16 %v5117
        %v5324 = vunpack.c.h.b16 %v5117
        %v5325 = vunpack.c.l.b16 %v5118
        %v5326 = vunpack.c.h.b16 %v5118
        %v5327 = vunpack.c.l.b16 %v5119
        %v5328 = vunpack.c.h.b16 %v5119
        %v5329 = vunpack.c.l.b16 %v5120
        %v5330 = vunpack.c.h.b16 %v5120
        %v5331 = vunpack.c.l.b16 %v5121
        %v5332 = vunpack.c.h.b16 %v5121
        %v5333 = vunpack.c.l.b16 %v5122
        %v5334 = vunpack.c.h.b16 %v5122
        %v5335 = vunpack.c.l.b16 %v5123
        %v5336 = vunpack.c.h.b16 %v5123
        %v5337 = vunpack.c.l.b16 %v5124
        %v5338 = vunpack.c.h.b16 %v5124
        %v5339 = vunpack.c.l.b16 %v5125
        %v5340 = vunpack.c.h.b16 %v5125
        %v5341 = vunpack.c.l.b16 %v5126
        %v5342 = vunpack.c.h.b16 %v5126
        %v5343 = vunpack.c.l.b16 %v5127
        %v5344 = vunpack.c.h.b16 %v5127
        %v5345 = vunpack.c.l.b16 %v5128
        %v5346 = vunpack.c.h.b16 %v5128
        %v5347 = vunpack.c.l.b16 %v5129
        %v5348 = vunpack.c.h.b16 %v5129
        %v5349 = vunpack.c.l.b16 %v5130
        %v5350 = vunpack.c.h.b16 %v5130
        %v5351 = vunpack.c.l.b16 %v5131
        %v5352 = vunpack.c.h.b16 %v5131
        %v5353 = vunpack.c.l.b16 %v5132
        %v5354 = vunpack.c.h.b16 %v5132
        %v5355 = vunpack.c.l.b16 %v5133
        %v5356 = vunpack.c.h.b16 %v5133
        %v5357 = vunpack.c.l.b16 %v5134
        %v5358 = vunpack.c.h.b16 %v5134
        %v5359 = vunpack.c.l.b16 %v5135
        %v5360 = vunpack.c.h.b16 %v5135
        %v5361 = vunpack.c.l.b16 %v5136
        %v5362 = vunpack.c.h.b16 %v5136
        %v5363 = vunpack.c.l.b16 %v5137
        %v5364 = vunpack.c.h.b16 %v5137
        %v5365 = vunpack.c.l.b16 %v5138
        %v5366 = vunpack.c.h.b16 %v5138
        %v5367 = vunpack.c.l.b16 %v5139
        %v5368 = vunpack.c.h.b16 %v5139
        %v5369 = vunpack.c.l.b16 %v5140
        %v5370 = vunpack.c.h.b16 %v5140
        %v5371 = vunpack.c.l.b16 %v5141
        %v5372 = vunpack.c.h.b16 %v5141
        %v5373 = vunpack.c.l.b16 %v5142
        %v5374 = vunpack.c.h.b16 %v5142
        %v5375 = vunpack.c.l.b16 %v5143
        %v5376 = vunpack.c.h.b16 %v5143
        %v5377 = vunpack.c.l.b16 %v5144
        %v5378 = vunpack.c.h.b16 %v5144
        %v5379 = vunpack.c.l.b16 %v5145
        %v5380 = vunpack.c.h.b16 %v5145
        %v5381 = vunpack.c.l.b16 %v5146
        %v5382 = vunpack.c.h.b16 %v5146
        %v5383 = vunpack.c.l.b16 %v5147
        %v5384 = vunpack.c.h.b16 %v5147
        %v5385 = vunpack.c.l.b16 %v5148
        %v5386 = vunpack.c.h.b16 %v5148
        %v5387 = vunpack.c.l.b16 %v5149
        %v5388 = vunpack.c.h.b16 %v5149
        %v5389 = vunpack.c.l.b16 %v5150
        %v5390 = vunpack.c.h.b16 %v5150
        %v5391 = vunpack.c.l.b16 %v5151
        %v5392 = vunpack.c.h.b16 %v5151
        %v5393 = vunpack.c.l.b16 %v5152
        %v5394 = vunpack.c.h.b16 %v5152
        %v5395 = vunpack.c.l.b16 %v5153
        %v5396 = vunpack.c.h.b16 %v5153
        %v5397 = vunpack.c.l.b16 %v5154
        %v5398 = vunpack.c.h.b16 %v5154
        %v5399 = vunpack.c.l.b16 %v5155
        %v5400 = vunpack.c.h.b16 %v5155
        %v5401 = vunpack.c.l.b16 %v5156
        %v5402 = vunpack.c.h.b16 %v5156
        %v5403 = vunpack.c.l.b16 %v5157
        %v5404 = vunpack.c.h.b16 %v5157
        %v5405 = vunpack.c.l.b16 %v5158
        %v5406 = vunpack.c.h.b16 %v5158
        %v5407 = vunpack.c.l.b16 %v5159
        %v5408 = vunpack.c.h.b16 %v5159
        %v5409 = vunpack.c.l.b16 %v5160
        %v5410 = vunpack.c.h.b16 %v5160
        %v5411 = vunpack.c.l.b16 %v5161
        %v5412 = vunpack.c.h.b16 %v5161
        %v5413 = vunpack.c.l.b16 %v5162
        %v5414 = vunpack.c.h.b16 %v5162
        %v5415 = vunpack.c.l.b16 %v5163
        %v5416 = vunpack.c.h.b16 %v5163
        %v5417 = vunpack.c.l.b16 %v5164
        %v5418 = vunpack.c.h.b16 %v5164
        %v5419 = vunpack.c.l.b16 %v5165
        %v5420 = vunpack.c.h.b16 %v5165
        %v5421 = vunpack.c.l.b16 %v5166
        %v5422 = vunpack.c.h.b16 %v5166
        %v5423 = vunpack.c.l.b16 %v5167
        %v5424 = vunpack.c.h.b16 %v5167
        %v5425 = vunpack.c.l.b16 %v5168
        %v5426 = vunpack.c.h.b16 %v5168
        %v5427 = vunpack.c.l.b16 %v5169
        %v5428 = vunpack.c.h.b16 %v5169
        %v5429 = vunpack.c.l.b16 %v5170
        %v5430 = vunpack.c.h.b16 %v5170
        %v5431 = vunpack.c.l.b16 %v5171
        %v5432 = vunpack.c.h.b16 %v5171
        %v5433 = vunpack.c.l.b16 %v5172
        %v5434 = vunpack.c.h.b16 %v5172
        %v5435 = vunpack.c.l.b16 %v5173
        %v5436 = vunpack.c.h.b16 %v5173
        %v5437 = vpack.c.b16 %v5313, %v5309
        %v5438 = vpack.c.b16 %v5314, %v5310
        %v5439 = vpack.c.b16 %v5315, %v5311
        %v5440 = vpack.c.b16 %v5316, %v5312
        %v5441 = vpack.c.b16 %v5321, %v5317
        %v5442 = vpack.c.b16 %v5322, %v5318
        %v5443 = vpack.c.b16 %v5323, %v5319
        %v5444 = vpack.c.b16 %v5324, %v5320
        %v5445 = vpack.c.b16 %v5329, %v5325
        %v5446 = vpack.c.b16 %v5330, %v5326
        %v5447 = vpack.c.b16 %v5331, %v5327
        %v5448 = vpack.c.b16 %v5332, %v5328
        %v5449 = vpack.c.b16 %v5337, %v5333
        %v5450 = vpack.c.b16 %v5338, %v5334
        %v5451 = vpack.c.b16 %v5339, %v5335
        %v5452 = vpack.c.b16 %v5340, %v5336
        %v5453 = vpack.c.b16 %v5345, %v5341
        %v5454 = vpack.c.b16 %v5346, %v5342
        %v5455 = vpack.c.b16 %v5347, %v5343
        %v5456 = vpack.c.b16 %v5348, %v5344
        %v5457 = vpack.c.b16 %v5353, %v5349
        %v5458 = vpack.c.b16 %v5354, %v5350
        %v5459 = vpack.c.b16 %v5355, %v5351
        %v5460 = vpack.c.b16 %v5356, %v5352
        %v5461 = vpack.c.b16 %v5361, %v5357
        %v5462 = vpack.c.b16 %v5362, %v5358
        %v5463 = vpack.c.b16 %v5363, %v5359
        %v5464 = vpack.c.b16 %v5364, %v5360
        %v5465 = vpack.c.b16 %v5369, %v5365
        %v5466 = vpack.c.b16 %v5370, %v5366
        %v5467 = vpack.c.b16 %v5371, %v5367
        %v5468 = vpack.c.b16 %v5372, %v5368
        %v5469 = vpack.c.b16 %v5377, %v5373
        %v5470 = vpack.c.b16 %v5378, %v5374
        %v5471 = vpack.c.b16 %v5379, %v5375
        %v5472 = vpack.c.b16 %v5380, %v5376
        %v5473 = vpack.c.b16 %v5385, %v5381
        %v5474 = vpack.c.b16 %v5386, %v5382
        %v5475 = vpack.c.b16 %v5387, %v5383
        %v5476 = vpack.c.b16 %v5388, %v5384
        %v5477 = vpack.c.b16 %v5393, %v5389
        %v5478 = vpack.c.b16 %v5394, %v5390
        %v5479 = vpack.c.b16 %v5395, %v5391
        %v5480 = vpack.c.b16 %v5396, %v5392
        %v5481 = vpack.c.b16 %v5401, %v5397
        %v5482 = vpack.c.b16 %v5402, %v5398
        %v5483 = vpack.c.b16 %v5403, %v5399
        %v5484 = vpack.c.b16 %v5404, %v5400
        %v5485 = vpack.c.b16 %v5409, %v5405
        %v5486 = vpack.c.b16 %v5410, %v5406
        %v5487 = vpack.c.b16 %v5411, %v5407
        %v5488 = vpack.c.b16 %v5412, %v5408
        %v5489 = vpack.c.b16 %v5417, %v5413
        %v5490 = vpack.c.b16 %v5418, %v5414
        %v5491 = vpack.c.b16 %v5419, %v5415
        %v5492 = vpack.c.b16 %v5420, %v5416
        %v5493 = vpack.c.b16 %v5425, %v5421
        %v5494 = vpack.c.b16 %v5426, %v5422
        %v5495 = vpack.c.b16 %v5427, %v5423
        %v5496 = vpack.c.b16 %v5428, %v5424
        %v5497 = vpack.c.b16 %v5433, %v5429
        %v5498 = vpack.c.b16 %v5434, %v5430
        %v5499 = vpack.c.b16 %v5435, %v5431
        %v5500 = vpack.c.b16 %v5436, %v5432
        %5565 = vmatprep.subr.bf16.mxu0 %v5466
        %5566 = vmatpush1.bf16.msra.mxu0 %v5465
        %5567 = vmatprep.subr.bf16.mxu0 %v5462
        %5568 = vmatpush1.bf16.msra.mxu0 %v5461
        %5569 = vmatprep.subr.bf16.mxu0 %v5458
        %5570 = vmatpush1.bf16.msra.mxu0 %v5457
        %5571 = vmatprep.subr.bf16.mxu0 %v5454
        %5572 = vmatpush1.bf16.msra.mxu0 %v5453
        %5573 = vmatprep.subr.bf16.mxu0 %v5450
        %5574 = vmatpush1.bf16.msra.mxu0 %v5449
        %5575 = vmatprep.subr.bf16.mxu0 %v5446
        %5576 = vmatpush1.bf16.msra.mxu0 %v5445
        %5577 = vmatprep.subr.bf16.mxu0 %v5442
        %5578 = vmatpush1.bf16.msra.mxu0 %v5441
        %5579 = vmatprep.subr.bf16.mxu0 %v5438
        %5580 = vmatpush1.bf16.msra.mxu0 %v5437
        %5581 = vmatprep.subr.bf16.mxu0 %v5498
        %5582 = vmatpush2.bf16.msra.mxu0 %v5497
        %5583 = vmatprep.subr.bf16.mxu0 %v5494
        %5584 = vmatpush2.bf16.msra.mxu0 %v5493
        %5585 = vmatprep.subr.bf16.mxu0 %v5490
        %5586 = vmatpush2.bf16.msra.mxu0 %v5489
        %5587 = vmatprep.subr.bf16.mxu0 %v5486
        %5588 = vmatpush2.bf16.msra.mxu0 %v5485
        %5589 = vmatprep.subr.bf16.mxu0 %v5482
        %5590 = vmatpush2.bf16.msra.mxu0 %v5481
        %5591 = vmatprep.subr.bf16.mxu0 %v5478
        %5592 = vmatpush2.bf16.msra.mxu0 %v5477
        %5593 = vmatprep.subr.bf16.mxu0 %v5474
        %5594 = vmatpush2.bf16.msra.mxu0 %v5473
        %5595 = vmatprep.subr.bf16.mxu0 %v5470
        %5596 = vmatpush2.bf16.msra.mxu0 %v5469
        %5597 = vmatprep.mubr.bf16.mxu0 %v5242
        %5598 = vmatmul.mubr.bf16.gmra.mxu0 %v5241
        %v5599 = vpop.f32.mrf.mxu0
        %v5600 = vadd.f32 0.0, %v5599
        %v5601 = vpop.f32.mrf.mxu0
        %v5602 = vadd.f32 0.0, %v5601
        %v5603 = vpop.f32.mrf.mxu0
        %v5604 = vpop.f32.mrf.mxu0
        %5605 = vdwg.mxu0
        %5606 = vmatprep.subr.bf16.mxu0 %v5468
        %5607 = vmatpush1.bf16.msra.mxu0 %v5467
        %5608 = vmatprep.subr.bf16.mxu0 %v5464
        %5609 = vmatpush1.bf16.msra.mxu0 %v5463
        %5610 = vmatprep.subr.bf16.mxu0 %v5460
        %5611 = vmatpush1.bf16.msra.mxu0 %v5459
        %5612 = vmatprep.subr.bf16.mxu0 %v5456
        %5613 = vmatpush1.bf16.msra.mxu0 %v5455
        %5614 = vmatprep.subr.bf16.mxu0 %v5452
        %5615 = vmatpush1.bf16.msra.mxu0 %v5451
        %5616 = vmatprep.subr.bf16.mxu0 %v5448
        %5617 = vmatpush1.bf16.msra.mxu0 %v5447
        %5618 = vmatprep.subr.bf16.mxu0 %v5444
        %5619 = vmatpush1.bf16.msra.mxu0 %v5443
        %5620 = vmatprep.subr.bf16.mxu0 %v5440
        %5621 = vmatpush1.bf16.msra.mxu0 %v5439
        %5622 = vmatprep.subr.bf16.mxu0 %v5500
        %5623 = vmatpush2.bf16.msra.mxu0 %v5499
        %5624 = vmatprep.subr.bf16.mxu0 %v5496
        %5625 = vmatpush2.bf16.msra.mxu0 %v5495
        %5626 = vmatprep.subr.bf16.mxu0 %v5492
        %5627 = vmatpush2.bf16.msra.mxu0 %v5491
        %5628 = vmatprep.subr.bf16.mxu0 %v5488
        %5629 = vmatpush2.bf16.msra.mxu0 %v5487
        %5630 = vmatprep.subr.bf16.mxu0 %v5484
        %5631 = vmatpush2.bf16.msra.mxu0 %v5483
        %5632 = vmatprep.subr.bf16.mxu0 %v5480
        %5633 = vmatpush2.bf16.msra.mxu0 %v5479
        %5634 = vmatprep.subr.bf16.mxu0 %v5476
        %5635 = vmatpush2.bf16.msra.mxu0 %v5475
        %5636 = vmatprep.subr.bf16.mxu0 %v5472
        %5637 = vmatpush2.bf16.msra.mxu0 %v5471
        %5638 = vmatprep.mubr.bf16.mxu0 %v5242
        %5639 = vmatmul.mubr.bf16.gmra.mxu0 %v5241
        %v5640 = vpop.f32.mrf.mxu0
        %v5641 = vadd.f32 0.0, %v5640
        %v5642 = vpop.f32.mrf.mxu0
        %v5643 = vadd.f32 0.0, %v5642
        %v5644 = vpop.f32.mrf.mxu0
        %v5645 = vpop.f32.mrf.mxu0
        %5646 = vdwg.mxu0
        %5647 = vst [vmem:[%s247] sm:$0xff] %v5600
        %5648 = vst [vmem:[%s247 + $0x8] sm:$0xff] %v5602
        %5649 = vst [vmem:[%s247 + $0x10] sm:$0xff] %v5641
        %5650 = vst [vmem:[%s247 + $0x18] sm:$0xff] %v5643
        %s5651 = sand.u32 %s159, 1
        %s5652 = scalar_lea.sflag [#allocation3], %s5651
        %s5653 = sand.u32 %s159, 1
        %s5654 = smul.addr %s5653, 32
        %s5655 = scalar_lea.vmem [#allocation2], %s5654
        // Predicated region
        $region45: #{tpu_custom_call.1} parent=43 // pred_check
          %p5656 = pneg %p169
        $region46: #{tpu_custom_call.1} parent=43 // pred_check_branch
          %5658 = sbr.rel (%p5656) target = $region48
        $region47: #{tpu_custom_call.1} parent=43 // pred_region
          %s5660 = ssub.s32 512, 512
          %5661 = vsyncadd %s5652, %s5660
          %s5662 = smul.addr %s20, 4
          %s5663 = smul.addr %s5662, 128
          %s5664 = scalar_lea.hbm %s6, %s5663
          %s5666 = sshll.u32 %s5655, 4
          %s5667 = int_to_ptr.vmem [resolvable:$true] %s5666
          %5669 = dma.vmem_to_hbm [thread:$0]  %s5667, 512, %s5664, %s5652
        $region48: #{tpu_custom_call.1} parent=43 // pred_fallthru
          _
      $region44: #{tpu_custom_call.1} parent=5 // pred_fallthru
        _
      %p5670 = scmp.le.s32.totalorder 2, %s15
      // Predicated region
      $region49: #{tpu_custom_call.1} parent=5 // pred_check
        %p5671 = pneg %p5670
      $region50: #{tpu_custom_call.1} parent=5 // pred_check_branch
        %5673 = sbr.rel (%p5671) target = $region52
      $region51: #{tpu_custom_call.1} parent=5 // pred_region
        %s5674 = ssub.s32 %s15, 2
        // Predicated region
        $region53: #{tpu_custom_call.1} parent=51 // pred_check
          %p5675 = pneg %p175
        $region54: #{tpu_custom_call.1} parent=51 // pred_check_branch
          %5677 = sbr.rel (%p5675) target = $region56
        $region55: #{tpu_custom_call.1} parent=51 // pred_region
          %s5678 = sand.u32 %s160, 1
          %s5679 = scalar_lea.sflag [#allocation3], %s5678
          %s5680 = sand.u32 %s160, 1
          %s5681 = smul.addr %s5680, 32
          %s5682 = scalar_lea.vmem [#allocation2], %s5681
          %5683 = dma.done %s5679, 512
        $region56: #{tpu_custom_call.1} parent=51 // pred_fallthru
          _
      $region52: #{tpu_custom_call.1} parent=5 // pred_fallthru
        _
    $region6: #{tpu_custom_call.1} parent=1 // loop_footer
      %s19 = sadd.s32 1, %s15
    $region7: #{tpu_custom_call.1} parent=1 // loop_footer_branch
      %14 = sbr.rel target = $region3
    $region8: #{tpu_custom_call.1} parent=1 // loop_exit
      _
    %5684 = vsyncpa [#allocation3], 1
    %s5685 = scalar_lea.sflag [#allocation3], 1
    %5686 = vsyncpa %s5685, 1

</llo_original>
